<compile_context>
chip_gen: v7x
topology: tpu7x:2x2x1
jax: 0.10.0
libtpu: 0.0.40
codegen_flags: <defaults>
</compile_context>

<pallas_src>
import functools
import math

import jax
import jax.numpy as jnp
from jax import lax
from jax.experimental import pallas as pl
from jax.experimental.pallas import tpu as pltpu

_PAD = 8  # aligned sublane offset of the conv1 slab inside hp_ref (slack rows both sides)


# ---------------------------------------------------------------------------
# Chip-adaptive knobs (guarded: fall back to conservative values on any failure)
# ---------------------------------------------------------------------------
@functools.lru_cache(maxsize=None)
def _vmem_limit_bytes():
    """~75% of physical VMEM, capped at 100 MiB (v5e/v6e ~96 MiB, v7x ~48 MiB)."""
    try:
        phys = int(pltpu.get_tpu_info().vmem_capacity_bytes)
    except Exception:
        phys = 64 * 1024 * 1024
    return min(100 * 1024 * 1024, (phys * 3) // 4)


def _compiler_params(dims):
    return pltpu.CompilerParams(dimension_semantics=dims,
                                vmem_limit_bytes=_vmem_limit_bytes())


def _probe_copy_kernel(x_ref, o_ref):
    o_ref[...] = x_ref[...]


@functools.lru_cache(maxsize=None)
def _single_buffer_ok():
    """True if this JAX build accepts pipeline_mode=pl.Buffered(1) on a BlockSpec
    (single-buffer grid-invariant weights -> halves their VMEM footprint, esp. v7x)."""
    try:
        spec = pl.BlockSpec((8, 128), lambda i: (0, 0), pipeline_mode=pl.Buffered(1))
        fn = pl.pallas_call(
            _probe_copy_kernel,
            out_shape=jax.ShapeDtypeStruct((8, 128), jnp.float32),
            grid=(1,),
            in_specs=[spec],
            out_specs=pl.BlockSpec((8, 128), lambda i: (0, 0)),
        )
        jax.jit(fn).lower(jax.ShapeDtypeStruct((8, 128), jnp.float32)).compile()
        return True
    except Exception:
        return False


def _wspec(block_shape, index_map):
    """BlockSpec for a grid-invariant operand (weights / BN shifts)."""
    if _single_buffer_ok():
        return pl.BlockSpec(block_shape, index_map, pipeline_mode=pl.Buffered(1))
    return pl.BlockSpec(block_shape, index_map)


def _pick_tile(total, desired):
    """Largest tile <= desired that evenly divides `total`, preferring multiples of 16
    (bf16 sublane packing), then 8, then any divisor; falls back to the full extent."""
    if total <= desired:
        return total
    for q in (16, 8, 1):
        t = (desired // q) * q
        while t >= q:
            if total % t == 0:
                return t
            t -= q
    return total


def _pick_row_tile(total, desired):
    """Largest row tile <= desired that evenly divides `total` (the H axis)."""
    t = min(desired, total)
    while t > 1 and total % t:
        t -= 1
    return t


# ---------------------------------------------------------------------------
# Kernels
# ---------------------------------------------------------------------------
def _fused_conv12_kernel(x_hbm, w1_ref, s1_ref, w2_ref, s2_ref, o_ref,
                         xbuf, hp_ref, sem):
    # x_hbm : full [N, H, W, Cin] bf16 in HBM (manual halo DMA, memory_space=ANY)
    # w1_ref: [Cin, DC] bf16 (bn1 scale folded),        s1_ref: [1, DC] f32
    # w2_ref: [9, DC, DC] bf16 block-diag taps (bn2 scale folded), s2_ref: [1, DC] f32
    # o_ref : [1, th, W, DC] bf16 output row tile
    # xbuf  : VMEM [th+2, W, Cin] bf16 (input row tile + 1-row halo)
    # hp_ref: VMEM [(th+2)*W + 2*_PAD, DC] bf16 -- flat conv1 slab + slack rows (slack is
    #         only ever read at positions that are masked to zero afterwards)
    n = pl.program_id(0)
    t = pl.program_id(1)
    T = pl.num_programs(1)
    th, W, DC = o_ref.shape[1], o_ref.shape[2], o_ref.shape[3]
    Cin = xbuf.shape[2]
    H = x_hbm.shape[1]
    npad = (th + 2) * W
    r0 = t * th

    # ---- fetch the x row tile plus its 1-row halo (3 static-size DMAs) ----------------
    # Border halo rows are clamped in-bounds; their conv1 result is overwritten with the
    # true zero padding below, so the clamped content is irrelevant.
    top_src = jnp.maximum(r0 - 1, 0)
    bot_src = jnp.minimum(r0 + th, H - 1)
    main_cp = pltpu.make_async_copy(x_hbm.at[n, pl.ds(r0, th)],
                                    xbuf.at[pl.ds(1, th)], sem.at[0])
    top_cp = pltpu.make_async_copy(x_hbm.at[n, pl.ds(top_src, 1)],
                                   xbuf.at[pl.ds(0, 1)], sem.at[1])
    bot_cp = pltpu.make_async_copy(x_hbm.at[n, pl.ds(bot_src, 1)],
                                   xbuf.at[pl.ds(th + 1, 1)], sem.at[2])
    main_cp.start()
    top_cp.start()
    bot_cp.start()
    main_cp.wait()
    top_cp.wait()
    bot_cp.wait()

    # ---- conv1 (1x1) + bn1 + relu on the haloed row tile, stored flat & aligned --------
    h1 = jnp.dot(xbuf[...].reshape(npad, Cin), w1_ref[...],
                 preferred_element_type=jnp.float32)
    h1 = jnp.maximum(h1 + s1_ref[...], 0.0)
    hp_ref[pl.ds(_PAD, npad), :] = h1.astype(hp_ref.dtype)

    # conv2's zero padding applies to h1 (NOT conv1(0)): zero the halo rows that fall
    # outside the image.  Only 2*W*DC elements, only on border tiles.
    @pl.when(t == 0)
    def _():
        hp_ref[pl.ds(_PAD, W), :] = jnp.zeros((W, DC), hp_ref.dtype)

    @pl.when(t == T - 1)
    def _():
        hp_ref[pl.ds(_PAD + (th + 1) * W, W), :] = jnp.zeros((W, DC), hp_ref.dtype)

    # ---- conv2 (3x3 grouped as block-diagonal dense taps) + bn2 + relu -----------------
    # Per-tap operand = contiguous flat-row slice of the conv1 slab (no patch copies).
    # kw=0 / kw=2 wrap one column across rows; mask those output columns to zero.
    col = lax.broadcasted_iota(jnp.int32, (th * W, 1), 0) % W
    not_first = col != 0
    not_last = col != (W - 1)

    acc = jnp.zeros((th * W, DC), jnp.float32)
    for kh in range(3):
        for kw in range(3):
            start = _PAD + kh * W + kw - 1                       # static offset
            tap = jnp.dot(hp_ref[pl.ds(start, th * W), :], w2_ref[kh * 3 + kw],
                          preferred_element_type=jnp.float32)
            if kw == 0:
                tap = jnp.where(not_first, tap, 0.0)
            elif kw == 2:
                tap = jnp.where(not_last, tap, 0.0)
            acc = acc + tap

    y = jnp.maximum(acc + s2_ref[...], 0.0)
    o_ref[0] = y.reshape(th, W, DC).astype(o_ref.dtype)


def _pw_conv_sum_kernel(x_ref, w_ref, shift_ref, o_ref, psum_ref):
    # conv3 (1x1) + bn3 fused with SE global-average-pool partial sums.
    # x_ref: [1, TS, Cin] bf16, w_ref: [Cin, Cout] bf16 (bn3 folded), shift_ref: [1, Cout]
    # o_ref: [1, TS, Cout] bf16, psum_ref: [1, 1, Cout] f32 accumulator across spatial tiles.
    s = pl.program_id(1)

    @pl.when(s == 0)
    def _():
        psum_ref[...] = jnp.zeros_like(psum_ref)

    y = jnp.dot(x_ref[0], w_ref[...], preferred_element_type=jnp.float32)
    y = y + shift_ref[...]
    o_ref[0] = y.astype(o_ref.dtype)
    psum_ref[0] = psum_ref[0] + jnp.sum(y, axis=0, keepdims=True)


def _se_apply_kernel(h_ref, r_ref, se_ref, o_ref):
    # h_ref: [1, TS, C] bf16 (post conv3/bn3), r_ref: [1, TS, C] bf16 residual,
    # se_ref: [1, 1, C] f32 sigmoid gate, o_ref: [1, TS, C] bf16 (all-bf16 HBM traffic).
    y = h_ref[0].astype(jnp.float32) * se_ref[0] + r_ref[0].astype(jnp.float32)
    o_ref[0] = jnp.maximum(y, 0.0).astype(o_ref.dtype)


# ---------------------------------------------------------------------------
# pallas_call wrappers
# ---------------------------------------------------------------------------
def _fused_conv12(x_nhwc, w1, shift1, w2_taps, shift2, *, tile_h):
    N, H, W, Cin = x_nhwc.shape
    DC = w1.shape[1]
    th = _pick_row_tile(H, tile_h)
    return pl.pallas_call(
        _fused_conv12_kernel,
        out_shape=jax.ShapeDtypeStruct((N, H, W, DC), jnp.bfloat16),
        grid=(N, H // th),
        in_specs=[
            pl.BlockSpec(memory_space=pl.ANY),            # x stays in HBM; halo DMA'd manually
            _wspec((Cin, DC), lambda n, t: (0, 0)),       # w1 (bn1 folded)
            _wspec((1, DC), lambda n, t: (0, 0)),         # bn1 shift
            _wspec((9, DC, DC), lambda n, t: (0, 0, 0)),  # block-diag taps (bn2 folded)
            _wspec((1, DC), lambda n, t: (0, 0)),         # bn2 shift
        ],
        out_specs=pl.BlockSpec((1, th, W, DC), lambda n, t: (n, t, 0, 0)),
        scratch_shapes=[
            pltpu.VMEM((th + 2, W, Cin), jnp.bfloat16),
            pltpu.VMEM(((th + 2) * W + 2 * _PAD, DC), jnp.bfloat16),
            pltpu.SemaphoreType.DMA((3,)),
        ],
        compiler_params=_compiler_params(("parallel", "parallel")),
    )(x_nhwc, w1, shift1, w2_taps, shift2)


def _pointwise_conv_with_channel_sum(x3d, w, shift, *, out_dtype, tile_sp):
    N, SP, Cin = x3d.shape
    Cout = w.shape[1]
    ts = _pick_tile(SP, tile_sp)
    # NOTE: the spatial axis must stay the LAST grid axis and remain "arbitrary";
    # psum is a resident accumulator across spatial tiles.
    return pl.pallas_call(
        _pw_conv_sum_kernel,
        out_shape=(jax.ShapeDtypeStruct((N, SP, Cout), out_dtype),
                   jax.ShapeDtypeStruct((N, 1, Cout), jnp.float32)),
        grid=(N, SP // ts),
        in_specs=[
            pl.BlockSpec((1, ts, Cin), lambda n, s: (n, s, 0)),
            _wspec((Cin, Cout), lambda n, s: (0, 0)),
            _wspec((1, Cout), lambda n, s: (0, 0)),
        ],
        out_specs=(pl.BlockSpec((1, ts, Cout), lambda n, s: (n, s, 0)),
                   pl.BlockSpec((1, 1, Cout), lambda n, s: (n, 0, 0))),
        compiler_params=_compiler_params(("parallel", "arbitrary")),
    )(x3d, w, shift)


def _se_apply(h3, res, se, *, tile_sp):
    N, SP, C = h3.shape
    ts = _pick_tile(SP, tile_sp)
    return pl.pallas_call(
        _se_apply_kernel,
        out_shape=jax.ShapeDtypeStruct((N, SP, C), jnp.bfloat16),
        grid=(N, SP // ts),
        in_specs=[
            pl.BlockSpec((1, ts, C), lambda n, s: (n, s, 0)),
            pl.BlockSpec((1, ts, C), lambda n, s: (n, s, 0)),
            pl.BlockSpec((1, 1, C), lambda n, s: (n, 0, 0)),
        ],
        out_specs=pl.BlockSpec((1, ts, C), lambda n, s: (n, s, 0)),
        compiler_params=_compiler_params(("parallel", "parallel")),
    )(h3, res, se)


# ---------------------------------------------------------------------------
# Parameter initialization (deterministic, PyTorch layouts, BN folded into weights)
# ---------------------------------------------------------------------------
def init_params(key, inplanes, planes, baseWidth, cardinality):
    D = int(math.floor(planes * (baseWidth / 64.0)))
    C = cardinality
    DC = D * C
    outC = planes * 4
    mid = planes // 4
    eps = 1e-5

    ks = jax.random.split(key, 10)

    def nrm(k, shape, fan_in):
        return (1.0 / math.sqrt(fan_in)) * jax.random.normal(k, shape, jnp.float32)

    # PyTorch-layout weights (OIHW for convs, [out, in] for Linear)
    w1 = nrm(ks[0], (DC, inplanes, 1, 1), inplanes)
    w2 = nrm(ks[1], (DC, D, 3, 3), 9 * D)
    w3 = nrm(ks[2], (outC, DC, 1, 1), DC)
    fc1_w = nrm(ks[3], (mid, outC), outC)
    fc1_b = 0.1 * jax.random.normal(ks[4], (mid,), jnp.float32)
    fc2_w = nrm(ks[5], (outC, mid), mid)
    fc2_b = 0.1 * jax.random.normal(ks[6], (outC,), jnp.float32)

    def bn_fold(k, c):
        k1, k2, k3, k4 = jax.random.split(k, 4)
        gamma = 1.0 + 0.1 * jax.random.normal(k1, (c,), jnp.float32)
        beta = 0.1 * jax.random.normal(k2, (c,), jnp.float32)
        mean = 0.1 * jax.random.normal(k3, (c,), jnp.float32)
        var = 0.5 + jax.random.uniform(k4, (c,), jnp.float32)
        scale = gamma / jnp.sqrt(var + eps)
        shift = beta - mean * scale
        return scale, shift

    bn1_scale, bn1_shift = bn_fold(ks[7], DC)
    bn2_scale, bn2_shift = bn_fold(ks[8], DC)
    bn3_scale, bn3_shift = bn_fold(ks[9], outC)

    # ---- kernel-friendly layouts: BN scale folded into weights, bf16 weights ----
    w1_mat = jnp.transpose(w1[:, :, 0, 0], (1, 0)) * bn1_scale[None, :]   # [Cin, DC]
    w3_mat = jnp.transpose(w3[:, :, 0, 0], (1, 0)) * bn3_scale[None, :]   # [DC, outC]

    # Block-diagonal dense per-tap weights for the grouped conv: [9, DC, DC]
    # TODO(synk): for cardinality >= ~16 this wastes C-times the FLOPs; use a batched-group
    # layout instead.
    w2_g = w2.reshape(C, D, D, 3, 3)                                       # [g, o, i, kh, kw]
    dense = jnp.zeros((3, 3, DC, DC), jnp.float32)
    for g in range(C):
        blk = jnp.transpose(w2_g[g], (2, 3, 1, 0))                         # [kh, kw, i, o]
        dense = dense.at[:, :, g * D:(g + 1) * D, g * D:(g + 1) * D].set(blk)
    dense = dense * bn2_scale[None, None, None, :]
    w2_taps = dense.reshape(9, DC, DC)

    return dict(
        C=C, D=D, DC=DC, outC=outC, mid=mid,
        w1_mat=w1_mat.astype(jnp.bfloat16),
        w2_taps=w2_taps.astype(jnp.bfloat16),
        w3_mat=w3_mat.astype(jnp.bfloat16),
        shift1=bn1_shift.reshape(1, DC),
        shift2=bn2_shift.reshape(1, DC),
        shift3=bn3_shift.reshape(1, outC),
        fc1_wt=jnp.transpose(fc1_w), fc1_b=fc1_b,                          # [outC, mid]
        fc2_wt=jnp.transpose(fc2_w), fc2_b=fc2_b,                          # [mid, outC]
        # reference layouts (f32, unfolded, HWIO)
        w1_hwio=jnp.transpose(w1, (2, 3, 1, 0)),
        w2_hwio=jnp.transpose(w2, (2, 3, 1, 0)),
        w3_hwio=jnp.transpose(w3, (2, 3, 1, 0)),
        fc1_w=fc1_w, fc2_w=fc2_w,
        bn1_scale=bn1_scale, bn1_shift=bn1_shift,
        bn2_scale=bn2_scale, bn2_shift=bn2_shift,
        bn3_scale=bn3_scale, bn3_shift=bn3_shift,
    )


# ---------------------------------------------------------------------------
# Forward pass (Pallas kernel path).  Input/output are NCHW like PyTorch.
# ---------------------------------------------------------------------------
def se_bottleneck_forward(x_nchw, p, stride=1, tile_h=8, tile_sp=1024):
    N, Cin, H, W = x_nchw.shape
    DC, outC = p["DC"], p["outC"]
    if stride != 1 or Cin != outC:
        raise ValueError("downsample=None path requires stride == 1 and inplanes == planes*4")

    # NCHW -> NHWC permute done in bf16 (half the HBM traffic of an f32 permute);
    # this single bf16 NHWC copy of x also serves as the residual.
    x = jnp.transpose(x_nchw.astype(jnp.bfloat16), (0, 2, 3, 1))           # [N, H, W, Cin]

    # conv1(1x1)+bn1+relu fused with conv2(3x3 grouped)+bn2+relu: no h1 HBM round trip.
    h2 = _fused_conv12(x, p["w1_mat"], p["shift1"], p["w2_taps"], p["shift2"],
                       tile_h=tile_h)

    # conv3 (1x1) + bn3, fused with SE global-average-pool partial sums.
    h3, psum = _pointwise_conv_with_channel_sum(
        h2.reshape(N, H * W, DC), p["w3_mat"], p["shift3"],
        out_dtype=jnp.bfloat16, tile_sp=tile_sp)

    # SE gate: fc1 -> relu -> fc2 -> sigmoid on [N, outC] (tiny, plain XLA).
    se = psum[:, 0, :] / float(H * W)
    se = jnp.maximum(jnp.dot(se, p["fc1_wt"]) + p["fc1_b"], 0.0)
    se = jax.nn.sigmoid(jnp.dot(se, p["fc2_wt"]) + p["fc2_b"])             # [N, outC] f32

    # channel scale + residual add + relu (all-bf16 HBM traffic).
    out = _se_apply(h3, x.reshape(N, H * W, outC), se[:, None, :], tile_sp=tile_sp)
    out = jnp.transpose(out.reshape(N, H, W, outC), (0, 3, 1, 2))          # NHWC->NCHW (bf16)
    return out.astype(jnp.float32)


# ---------------------------------------------------------------------------
# Pure-JAX f32 reference (for correctness check only)
# ---------------------------------------------------------------------------
def ref_forward(x_nchw, p, stride=1):
    dn = ("NHWC", "HWIO", "NHWC")
    x = jnp.transpose(x_nchw, (0, 2, 3, 1)).astype(jnp.float32)

    h = lax.conv_general_dilated(x, p["w1_hwio"], (1, 1), "VALID", dimension_numbers=dn)
    h = jnp.maximum(h * p["bn1_scale"] + p["bn1_shift"], 0.0)
    h = lax.conv_general_dilated(h, p["w2_hwio"], (stride, stride),
                                 ((1, 1), (1, 1)), dimension_numbers=dn,
                                 feature_group_count=p["C"])
    h = jnp.maximum(h * p["bn2_scale"] + p["bn2_shift"], 0.0)
    h = lax.conv_general_dilated(h, p["w3_hwio"], (1, 1), "VALID", dimension_numbers=dn)
    h = h * p["bn3_scale"] + p["bn3_shift"]

    se = jnp.mean(h, axis=(1, 2))
    se = jnp.maximum(se @ p["fc1_w"].T + p["fc1_b"], 0.0)
    se = jax.nn.sigmoid(se @ p["fc2_w"].T + p["fc2_b"])
    out = jnp.maximum(h * se[:, None, None, :] + x, 0.0)
    return jnp.transpose(out, (0, 3, 1, 2))


# ---------------------------------------------------------------------------
if __name__ == "__main__":
    key = jax.random.PRNGKey(0)
    kx, kp = jax.random.split(key)

    # Small but structurally faithful + TPU-lane-friendly config:
    #   inplanes = planes*4 = 128 (so the downsample=None residual is valid),
    #   D*C = 128, stride = 1.
    inplanes, planes, baseWidth, cardinality, stride = 128, 32, 64, 4, 1
    params = init_params(kp, inplanes, planes, baseWidth, cardinality)

    x = jax.random.normal(kx, (2, inplanes, 16, 16), jnp.float32)          # NCHW like PyTorch

    # Pre-populate the single-buffering capability probe outside any trace.
    _ = _single_buffer_ok()

    # Small tiles here so the toy shapes exercise multi-tile grids: 4-row conv2 tiles
    # (first / middle / last halo paths) and 2 spatial tiles for the SE-pool accumulator.
    # Defaults (tile_h=8, tile_sp=1024) are for real ImageNet shapes.
    fwd = jax.jit(lambda xx: se_bottleneck_forward(xx, params, stride=stride,
                                                   tile_h=4, tile_sp=128))
    out = jax.block_until_ready(fwd(x))
    ref = jax.block_until_ready(ref_forward(x, params, stride=stride))

    assert out.shape == ref.shape == (2, planes * 4, 16, 16)
    # bf16 activations/weights/residual/output in the kernel path vs f32 reference.
    err = float(jnp.max(jnp.abs(out - ref)))
    if not bool(jnp.allclose(out, ref, atol=6e-2, rtol=6e-2)):
        raise SystemExit(f"kernel output does not match reference (max abs err {err:.4f})")
    print("KERNEL_OK")
</pallas_src>

<mosaic_0001>
module attributes {stable_mosaic.version = 11 : i64} {
  func.func @_pw_conv_sum_kernel(%arg0: i32, %arg1: i32, %arg2: memref<1x128x128xbf16, #tpu.memory_space<vmem>>, %arg3: memref<128x128xbf16, #tpu.memory_space<vmem>>, %arg4: memref<1x128xf32, #tpu.memory_space<vmem>>, %arg5: memref<1x128x128xbf16, #tpu.memory_space<vmem>>, %arg6: memref<1x1x128xf32, #tpu.memory_space<vmem>>) attributes {dimension_semantics = [#tpu.dimension_semantics<parallel>, #tpu.dimension_semantics<arbitrary>], iteration_bounds = array<i64: 2, 2>, scalar_prefetch = 0 : i64, scratch_operands = 0 : i64, tpu.core_type = #tpu.core_type<tc>, window_params = [{transform_indices = @transform_0, window_bounds = array<i64: 1, 128, 128>}, {pipeline_mode = #tpu.pipeline_mode<synchronous>, transform_indices = @transform_1, window_bounds = array<i64: 128, 128>}, {pipeline_mode = #tpu.pipeline_mode<synchronous>, transform_indices = @transform_2, window_bounds = array<i64: 1, 128>}, {transform_indices = @transform_3, window_bounds = array<i64: 1, 128, 128>}, {transform_indices = @transform_4, window_bounds = array<i64: 1, 1, 128>}]} {
    %c0_i32 = arith.constant 0 : i32
    %0 = arith.cmpi eq, %arg1, %c0_i32 : i32
    %1 = arith.extui %0 : i1 to i32
    %c0_i32_0 = arith.constant 0 : i32
    %2 = arith.cmpi ne, %1, %c0_i32_0 : i32
    scf.if %2 {
      %cst_17 = arith.constant 0.000000e+00 : f32
      %22 = vector.broadcast %cst_17 : f32 to vector<1x1x128xf32>
      %c0_18 = arith.constant 0 : index
      %c0_19 = arith.constant 0 : index
      %c0_20 = arith.constant 0 : index
      %23 = vector.load %arg6[%c0_18, %c0_19, %c0_20] : memref<1x1x128xf32, #tpu.memory_space<vmem>>, vector<1x1x128xf32>
      tpu.vector_store %arg6[%c0_18, %c0_19, %c0_20], %22 {strides = array<i32>} : memref<1x1x128xf32, #tpu.memory_space<vmem>>, vector<1x1x128xf32>,
    } else {
    }
    %c0 = arith.constant 0 : index
    %c0_1 = arith.constant 0 : index
    %c0_2 = arith.constant 0 : index
    %3 = vector.load %arg2[%c0, %c0_1, %c0_2] : memref<1x128x128xbf16, #tpu.memory_space<vmem>>, vector<1x128x128xbf16>
    %4 = vector.shape_cast %3 : vector<1x128x128xbf16> to vector<128x128xbf16>
    %c0_3 = arith.constant 0 : index
    %c0_4 = arith.constant 0 : index
    %5 = vector.load %arg3[%c0_3, %c0_4] : memref<128x128xbf16, #tpu.memory_space<vmem>>, vector<128x128xbf16>
    %cst = arith.constant dense<0.000000e+00> : vector<128x128xf32>
    %6 = tpu.matmul %4, %5, %cst {dimension_numbers = #tpu.dot_dimension_numbers<[1], [0], [0], [1], [0, 0, 1, 1], [], []>} : vector<128x128xbf16>, vector<128x128xbf16>, vector<128x128xf32> -> vector<128x128xf32>
    %c0_5 = arith.constant 0 : index
    %c0_6 = arith.constant 0 : index
    %7 = vector.load %arg4[%c0_5, %c0_6] : memref<1x128xf32, #tpu.memory_space<vmem>>, vector<1x128xf32>
    %8 = vector.broadcast %7 : vector<1x128xf32> to vector<128x128xf32>
    %9 = arith.addf %6, %8 : vector<128x128xf32>
    %10 = arith.truncf %9 : vector<128x128xf32> to vector<128x128xbf16>
    %c0_7 = arith.constant 0 : index
    %c0_8 = arith.constant 0 : index
    %c0_9 = arith.constant 0 : index
    %11 = vector.load %arg5[%c0_7, %c0_8, %c0_9] : memref<1x128x128xbf16, #tpu.memory_space<vmem>>, vector<1x128x128xbf16>
    %12 = vector.shape_cast %11 : vector<1x128x128xbf16> to vector<128x128xbf16>
    %13 = vector.shape_cast %10 : vector<128x128xbf16> to vector<1x128x128xbf16>
    tpu.vector_store %arg5[%c0_7, %c0_8, %c0_9], %13 {strides = array<i32>} : memref<1x128x128xbf16, #tpu.memory_space<vmem>>, vector<1x128x128xbf16>,
    %c0_10 = arith.constant 0 : index
    %c0_11 = arith.constant 0 : index
    %c0_12 = arith.constant 0 : index
    %14 = vector.load %arg6[%c0_10, %c0_11, %c0_12] : memref<1x1x128xf32, #tpu.memory_space<vmem>>, vector<1x1x128xf32>
    %15 = vector.shape_cast %14 : vector<1x1x128xf32> to vector<1x128xf32>
    %cst_13 = arith.constant dense<0.000000e+00> : vector<128xf32>
    %16 = vector.multi_reduction <add>, %9, %cst_13 [0] : vector<128x128xf32> to vector<128xf32>
    %17 = vector.shape_cast %16 : vector<128xf32> to vector<1x128xf32>
    %18 = arith.addf %15, %17 : vector<1x128xf32>
    %c0_14 = arith.constant 0 : index
    %c0_15 = arith.constant 0 : index
    %c0_16 = arith.constant 0 : index
    %19 = vector.load %arg6[%c0_14, %c0_15, %c0_16] : memref<1x1x128xf32, #tpu.memory_space<vmem>>, vector<1x1x128xf32>
    %20 = vector.shape_cast %19 : vector<1x1x128xf32> to vector<1x128xf32>
    %21 = vector.shape_cast %18 : vector<1x128xf32> to vector<1x1x128xf32>
    tpu.vector_store %arg6[%c0_14, %c0_15, %c0_16], %21 {strides = array<i32>} : memref<1x1x128xf32, #tpu.memory_space<vmem>>, vector<1x1x128xf32>,
    return
  }
  func.func @transform_0(%arg0: i32, %arg1: i32) -> (i32, i32, i32) {
    %c0_i32 = arith.constant 0 : i32
    %c0_i32_0 = arith.constant 0 : i32
    return %arg0, %arg1, %c0_i32 : i32, i32, i32
  }
  func.func @transform_1(%arg0: i32, %arg1: i32) -> (i32, i32) {
    %c0_i32 = arith.constant 0 : i32
    %c0_i32_0 = arith.constant 0 : i32
    %c0_i32_1 = arith.constant 0 : i32
    return %c0_i32, %c0_i32_0 : i32, i32
  }
  func.func @transform_2(%arg0: i32, %arg1: i32) -> (i32, i32) {
    %c0_i32 = arith.constant 0 : i32
    %c0_i32_0 = arith.constant 0 : i32
    %c0_i32_1 = arith.constant 0 : i32
    return %c0_i32, %c0_i32_0 : i32, i32
  }
  func.func @transform_3(%arg0: i32, %arg1: i32) -> (i32, i32, i32) {
    %c0_i32 = arith.constant 0 : i32
    %c0_i32_0 = arith.constant 0 : i32
    return %arg0, %arg1, %c0_i32 : i32, i32, i32
  }
  func.func @transform_4(%arg0: i32, %arg1: i32) -> (i32, i32, i32) {
    %c0_i32 = arith.constant 0 : i32
    %c0_i32_0 = arith.constant 0 : i32
    %c0_i32_1 = arith.constant 0 : i32
    return %arg0, %c0_i32, %c0_i32_0 : i32, i32, i32
  }
}

module attributes {stable_mosaic.version = 11 : i64} {
  func.func @_fused_conv12_kernel(%arg0: i32, %arg1: i32, %arg2: memref<2x16x16x128xbf16, #tpu.memory_space<any>>, %arg3: memref<128x128xbf16, #tpu.memory_space<vmem>>, %arg4: memref<1x128xf32, #tpu.memory_space<vmem>>, %arg5: memref<9x128x128xbf16, #tpu.memory_space<vmem>>, %arg6: memref<1x128xf32, #tpu.memory_space<vmem>>, %arg7: memref<1x4x16x128xbf16, #tpu.memory_space<vmem>>, %arg8: memref<6x16x128xbf16, #tpu.memory_space<vmem>>, %arg9: memref<112x128xbf16, #tpu.memory_space<vmem>>, %arg10: memref<3x!tpu.dma_semaphore, #tpu.memory_space<semaphore_mem>>) attributes {dimension_semantics = [#tpu.dimension_semantics<parallel>, #tpu.dimension_semantics<parallel>], iteration_bounds = array<i64: 2, 4>, scalar_prefetch = 0 : i64, scratch_operands = 3 : i64, tpu.core_type = #tpu.core_type<tc>, window_params = [{}, {pipeline_mode = #tpu.pipeline_mode<synchronous>, transform_indices = @transform_1, window_bounds = array<i64: 128, 128>}, {pipeline_mode = #tpu.pipeline_mode<synchronous>, transform_indices = @transform_2, window_bounds = array<i64: 1, 128>}, {pipeline_mode = #tpu.pipeline_mode<synchronous>, transform_indices = @transform_3, window_bounds = array<i64: 9, 128, 128>}, {pipeline_mode = #tpu.pipeline_mode<synchronous>, transform_indices = @transform_4, window_bounds = array<i64: 1, 128>}, {transform_indices = @transform_5, window_bounds = array<i64: 1, 4, 16, 128>}]} {
    %c4_i32 = arith.constant 4 : i32
    %0 = arith.muli %arg1, %c4_i32 : i32
    %c1_i32 = arith.constant 1 : i32
    %1 = arith.subi %0, %c1_i32 : i32
    %c0_i32 = arith.constant 0 : i32
    %2 = arith.maxsi %1, %c0_i32 : i32
    %c4_i32_0 = arith.constant 4 : i32
    %3 = arith.addi %0, %c4_i32_0 : i32
    %c15_i32 = arith.constant 15 : i32
    %4 = arith.minsi %3, %c15_i32 : i32
    %c0_i32_1 = arith.constant 0 : i32
    %c0_i32_2 = arith.constant 0 : i32
    %c0_i32_3 = arith.constant 0 : i32
    %5 = tpu.memref_slice %arg2[%arg0, %0, %c0_i32_2, %c0_i32_3] : memref<2x16x16x128xbf16, #tpu.memory_space<any>> -> memref<1x4x16x128xbf16, #tpu.memory_space<any>>
    %6 = tpu.memref_squeeze %5 : memref<1x4x16x128xbf16, #tpu.memory_space<any>> -> memref<4x16x128xbf16, #tpu.memory_space<any>>
    %c1_i32_4 = arith.constant 1 : i32
    %c0_i32_5 = arith.constant 0 : i32
    %c0_i32_6 = arith.constant 0 : i32
    %7 = tpu.memref_slice %arg8[%c1_i32_4, %c0_i32_5, %c0_i32_6] : memref<6x16x128xbf16, #tpu.memory_space<vmem>> -> memref<4x16x128xbf16, #tpu.memory_space<vmem>>
    %8 = tpu.memref_slice %arg10[%c0_i32_1] : memref<3x!tpu.dma_semaphore, #tpu.memory_space<semaphore_mem>> -> memref<1x!tpu.dma_semaphore, #tpu.memory_space<semaphore_mem>>
    %9 = tpu.memref_squeeze %8 : memref<1x!tpu.dma_semaphore, #tpu.memory_space<semaphore_mem>> -> memref<!tpu.dma_semaphore, #tpu.memory_space<semaphore_mem>>
    tpu.enqueue_dma source(%6 : memref<4x16x128xbf16, #tpu.memory_space<any>>) target(%7 : memref<4x16x128xbf16, #tpu.memory_space<vmem>>) target_semaphore(%9 : memref<!tpu.dma_semaphore, #tpu.memory_space<semaphore_mem>>)
    %c1_i32_7 = arith.constant 1 : i32
    %c0_i32_8 = arith.constant 0 : i32
    %c0_i32_9 = arith.constant 0 : i32
    %10 = tpu.memref_slice %arg2[%arg0, %2, %c0_i32_8, %c0_i32_9] : memref<2x16x16x128xbf16, #tpu.memory_space<any>> -> memref<1x1x16x128xbf16, #tpu.memory_space<any>>
    %11 = tpu.memref_squeeze %10 : memref<1x1x16x128xbf16, #tpu.memory_space<any>> -> memref<1x16x128xbf16, #tpu.memory_space<any>>
    %c0_i32_10 = arith.constant 0 : i32
    %c0_i32_11 = arith.constant 0 : i32
    %c0_i32_12 = arith.constant 0 : i32
    %12 = tpu.memref_slice %arg8[%c0_i32_10, %c0_i32_11, %c0_i32_12] : memref<6x16x128xbf16, #tpu.memory_space<vmem>> -> memref<1x16x128xbf16, #tpu.memory_space<vmem>>
    %13 = tpu.memref_slice %arg10[%c1_i32_7] : memref<3x!tpu.dma_semaphore, #tpu.memory_space<semaphore_mem>> -> memref<1x!tpu.dma_semaphore, #tpu.memory_space<semaphore_mem>>
    %14 = tpu.memref_squeeze %13 : memref<1x!tpu.dma_semaphore, #tpu.memory_space<semaphore_mem>> -> memref<!tpu.dma_semaphore, #tpu.memory_space<semaphore_mem>>
    tpu.enqueue_dma source(%11 : memref<1x16x128xbf16, #tpu.memory_space<any>>) target(%12 : memref<1x16x128xbf16, #tpu.memory_space<vmem>>) target_semaphore(%14 : memref<!tpu.dma_semaphore, #tpu.memory_space<semaphore_mem>>)
    %c2_i32 = arith.constant 2 : i32
    %c0_i32_13 = arith.constant 0 : i32
    %c0_i32_14 = arith.constant 0 : i32
    %15 = tpu.memref_slice %arg2[%arg0, %4, %c0_i32_13, %c0_i32_14] : memref<2x16x16x128xbf16, #tpu.memory_space<any>> -> memref<1x1x16x128xbf16, #tpu.memory_space<any>>
    %16 = tpu.memref_squeeze %15 : memref<1x1x16x128xbf16, #tpu.memory_space<any>> -> memref<1x16x128xbf16, #tpu.memory_space<any>>
    %c5_i32 = arith.constant 5 : i32
    %c0_i32_15 = arith.constant 0 : i32
    %c0_i32_16 = arith.constant 0 : i32
    %17 = tpu.memref_slice %arg8[%c5_i32, %c0_i32_15, %c0_i32_16] : memref<6x16x128xbf16, #tpu.memory_space<vmem>> -> memref<1x16x128xbf16, #tpu.memory_space<vmem>>
    %18 = tpu.memref_slice %arg10[%c2_i32] : memref<3x!tpu.dma_semaphore, #tpu.memory_space<semaphore_mem>> -> memref<1x!tpu.dma_semaphore, #tpu.memory_space<semaphore_mem>>
    %19 = tpu.memref_squeeze %18 : memref<1x!tpu.dma_semaphore, #tpu.memory_space<semaphore_mem>> -> memref<!tpu.dma_semaphore, #tpu.memory_space<semaphore_mem>>
    tpu.enqueue_dma source(%16 : memref<1x16x128xbf16, #tpu.memory_space<any>>) target(%17 : memref<1x16x128xbf16, #tpu.memory_space<vmem>>) target_semaphore(%19 : memref<!tpu.dma_semaphore, #tpu.memory_space<semaphore_mem>>)
    %c0_i32_17 = arith.constant 0 : i32
    %c0_i32_18 = arith.constant 0 : i32
    %c0_i32_19 = arith.constant 0 : i32
    %20 = tpu.memref_slice %arg2[%arg0, %0, %c0_i32_18, %c0_i32_19] : memref<2x16x16x128xbf16, #tpu.memory_space<any>> -> memref<1x4x16x128xbf16, #tpu.memory_space<any>>
    %21 = tpu.memref_squeeze %20 : memref<1x4x16x128xbf16, #tpu.memory_space<any>> -> memref<4x16x128xbf16, #tpu.memory_space<any>>
    %c1_i32_20 = arith.constant 1 : i32
    %c0_i32_21 = arith.constant 0 : i32
    %c0_i32_22 = arith.constant 0 : i32
    %22 = tpu.memref_slice %arg8[%c1_i32_20, %c0_i32_21, %c0_i32_22] : memref<6x16x128xbf16, #tpu.memory_space<vmem>> -> memref<4x16x128xbf16, #tpu.memory_space<vmem>>
    %23 = tpu.memref_slice %arg10[%c0_i32_17] : memref<3x!tpu.dma_semaphore, #tpu.memory_space<semaphore_mem>> -> memref<1x!tpu.dma_semaphore, #tpu.memory_space<semaphore_mem>>
    %24 = tpu.memref_squeeze %23 : memref<1x!tpu.dma_semaphore, #tpu.memory_space<semaphore_mem>> -> memref<!tpu.dma_semaphore, #tpu.memory_space<semaphore_mem>>
    tpu.wait_dma2 semaphore(%24 : memref<!tpu.dma_semaphore, #tpu.memory_space<semaphore_mem>>) src(%21 : memref<4x16x128xbf16, #tpu.memory_space<any>>) dst(%22 : memref<4x16x128xbf16, #tpu.memory_space<vmem>>)
    %c1_i32_23 = arith.constant 1 : i32
    %c0_i32_24 = arith.constant 0 : i32
    %c0_i32_25 = arith.constant 0 : i32
    %25 = tpu.memref_slice %arg2[%arg0, %2, %c0_i32_24, %c0_i32_25] : memref<2x16x16x128xbf16, #tpu.memory_space<any>> -> memref<1x1x16x128xbf16, #tpu.memory_space<any>>
    %26 = tpu.memref_squeeze %25 : memref<1x1x16x128xbf16, #tpu.memory_space<any>> -> memref<1x16x128xbf16, #tpu.memory_space<any>>
    %c0_i32_26 = arith.constant 0 : i32
    %c0_i32_27 = arith.constant 0 : i32
    %c0_i32_28 = arith.constant 0 : i32
    %27 = tpu.memref_slice %arg8[%c0_i32_26, %c0_i32_27, %c0_i32_28] : memref<6x16x128xbf16, #tpu.memory_space<vmem>> -> memref<1x16x128xbf16, #tpu.memory_space<vmem>>
    %28 = tpu.memref_slice %arg10[%c1_i32_23] : memref<3x!tpu.dma_semaphore, #tpu.memory_space<semaphore_mem>> -> memref<1x!tpu.dma_semaphore, #tpu.memory_space<semaphore_mem>>
    %29 = tpu.memref_squeeze %28 : memref<1x!tpu.dma_semaphore, #tpu.memory_space<semaphore_mem>> -> memref<!tpu.dma_semaphore, #tpu.memory_space<semaphore_mem>>
    tpu.wait_dma2 semaphore(%29 : memref<!tpu.dma_semaphore, #tpu.memory_space<semaphore_mem>>) src(%26 : memref<1x16x128xbf16, #tpu.memory_space<any>>) dst(%27 : memref<1x16x128xbf16, #tpu.memory_space<vmem>>)
    %c2_i32_29 = arith.constant 2 : i32
    %c0_i32_30 = arith.constant 0 : i32
    %c0_i32_31 = arith.constant 0 : i32
    %30 = tpu.memref_slice %arg2[%arg0, %4, %c0_i32_30, %c0_i32_31] : memref<2x16x16x128xbf16, #tpu.memory_space<any>> -> memref<1x1x16x128xbf16, #tpu.memory_space<any>>
    %31 = tpu.memref_squeeze %30 : memref<1x1x16x128xbf16, #tpu.memory_space<any>> -> memref<1x16x128xbf16, #tpu.memory_space<any>>
    %c5_i32_32 = arith.constant 5 : i32
    %c0_i32_33 = arith.constant 0 : i32
    %c0_i32_34 = arith.constant 0 : i32
    %32 = tpu.memref_slice %arg8[%c5_i32_32, %c0_i32_33, %c0_i32_34] : memref<6x16x128xbf16, #tpu.memory_space<vmem>> -> memref<1x16x128xbf16, #tpu.memory_space<vmem>>
    %33 = tpu.memref_slice %arg10[%c2_i32_29] : memref<3x!tpu.dma_semaphore, #tpu.memory_space<semaphore_mem>> -> memref<1x!tpu.dma_semaphore, #tpu.memory_space<semaphore_mem>>
    %34 = tpu.memref_squeeze %33 : memref<1x!tpu.dma_semaphore, #tpu.memory_space<semaphore_mem>> -> memref<!tpu.dma_semaphore, #tpu.memory_space<semaphore_mem>>
    tpu.wait_dma2 semaphore(%34 : memref<!tpu.dma_semaphore, #tpu.memory_space<semaphore_mem>>) src(%31 : memref<1x16x128xbf16, #tpu.memory_space<any>>) dst(%32 : memref<1x16x128xbf16, #tpu.memory_space<vmem>>)
    %c0 = arith.constant 0 : index
    %c0_35 = arith.constant 0 : index
    %c0_36 = arith.constant 0 : index
    %35 = vector.load %arg8[%c0, %c0_35, %c0_36] : memref<6x16x128xbf16, #tpu.memory_space<vmem>>, vector<6x16x128xbf16>
    %36 = vector.shape_cast %35 : vector<6x16x128xbf16> to vector<96x128xbf16>
    %c0_37 = arith.constant 0 : index
    %c0_38 = arith.constant 0 : index
    %37 = vector.load %arg3[%c0_37, %c0_38] : memref<128x128xbf16, #tpu.memory_space<vmem>>, vector<128x128xbf16>
    %cst = arith.constant dense<0.000000e+00> : vector<96x128xf32>
    %38 = tpu.matmul %36, %37, %cst {dimension_numbers = #tpu.dot_dimension_numbers<[1], [0], [0], [1], [0, 0, 1, 1], [], []>} : vector<96x128xbf16>, vector<128x128xbf16>, vector<96x128xf32> -> vector<96x128xf32>
    %c0_39 = arith.constant 0 : index
    %c0_40 = arith.constant 0 : index
    %39 = vector.load %arg4[%c0_39, %c0_40] : memref<1x128xf32, #tpu.memory_space<vmem>>, vector<1x128xf32>
    %40 = vector.broadcast %39 : vector<1x128xf32> to vector<96x128xf32>
    %41 = arith.addf %38, %40 : vector<96x128xf32>
    %cst_41 = arith.constant 0.000000e+00 : f32
    %42 = vector.broadcast %cst_41 : f32 to vector<96x128xf32>
    %43 = arith.maximumf %41, %42 : vector<96x128xf32>
    %44 = arith.truncf %43 : vector<96x128xf32> to vector<96x128xbf16>
    %c8 = arith.constant 8 : index
    %c0_42 = arith.constant 0 : index
    %45 = vector.load %arg9[%c8, %c0_42] : memref<112x128xbf16, #tpu.memory_space<vmem>>, vector<96x128xbf16>
    tpu.vector_store %arg9[%c8, %c0_42], %44 {strides = array<i32>} : memref<112x128xbf16, #tpu.memory_space<vmem>>, vector<96x128xbf16>,
    %c0_i32_43 = arith.constant 0 : i32
    %46 = arith.cmpi eq, %arg1, %c0_i32_43 : i32
    %47 = arith.extui %46 : i1 to i32
    %c0_i32_44 = arith.constant 0 : i32
    %48 = arith.cmpi ne, %47, %c0_i32_44 : i32
    scf.if %48 {
      %cst_107 = arith.constant 0.000000e+00 : bf16
      %153 = vector.broadcast %cst_107 : bf16 to vector<16x128xbf16>
      %c8_108 = arith.constant 8 : index
      %c0_109 = arith.constant 0 : index
      %154 = vector.load %arg9[%c8_108, %c0_109] : memref<112x128xbf16, #tpu.memory_space<vmem>>, vector<16x128xbf16>
      tpu.vector_store %arg9[%c8_108, %c0_109], %153 {strides = array<i32>} : memref<112x128xbf16, #tpu.memory_space<vmem>>, vector<16x128xbf16>,
    } else {
    }
    %c3_i32 = arith.constant 3 : i32
    %49 = arith.cmpi eq, %arg1, %c3_i32 : i32
    %50 = arith.extui %49 : i1 to i32
    %c0_i32_45 = arith.constant 0 : i32
    %51 = arith.cmpi ne, %50, %c0_i32_45 : i32
    scf.if %51 {
      %cst_107 = arith.constant 0.000000e+00 : bf16
      %153 = vector.broadcast %cst_107 : bf16 to vector<16x128xbf16>
      %c88 = arith.constant 88 : index
      %c0_108 = arith.constant 0 : index
      %154 = vector.load %arg9[%c88, %c0_108] : memref<112x128xbf16, #tpu.memory_space<vmem>>, vector<16x128xbf16>
      tpu.vector_store %arg9[%c88, %c0_108], %153 {strides = array<i32>} : memref<112x128xbf16, #tpu.memory_space<vmem>>, vector<16x128xbf16>,
    } else {
    }
    %52 = tpu.iota {dimensions = array<i32: 0>} : vector<64x1xi32>
    %c16_i32 = arith.constant 16 : i32
    %c0_i32_46 = arith.constant 0 : i32
    %53 = arith.cmpi eq, %c16_i32, %c0_i32_46 : i32
    %c1_i32_47 = arith.constant 1 : i32
    %54 = arith.select %53, %c1_i32_47, %c16_i32 : i32
    %55 = vector.broadcast %54 : i32 to vector<64x1xi32>
    %56 = arith.remsi %52, %55 : vector<64x1xi32>
    %c0_i32_48 = arith.constant 0 : i32
    %57 = vector.broadcast %c0_i32_48 : i32 to vector<64x1xi32>
    %58 = arith.cmpi ne, %56, %57 : vector<64x1xi32>
    %c0_i32_49 = arith.constant 0 : i32
    %59 = vector.broadcast %c0_i32_49 : i32 to vector<64x1xi32>
    %60 = arith.cmpi slt, %56, %59 : vector<64x1xi32>
    %c0_i32_50 = arith.constant 0 : i32
    %61 = arith.cmpi slt, %54, %c0_i32_50 : i32
    %62 = vector.broadcast %61 : i1 to vector<64x1xi1>
    %63 = vector.broadcast %62 : vector<64x1xi1> to vector<64x1xi1>
    %64 = arith.xori %60, %63 : vector<64x1xi1>
    %65 = arith.andi %64, %58 : vector<64x1xi1>
    %66 = vector.broadcast %54 : i32 to vector<64x1xi32>
    %67 = arith.addi %56, %66 : vector<64x1xi32>
    %68 = arith.select %65, %67, %56 : vector<64x1xi1>, vector<64x1xi32>
    %c0_i32_51 = arith.constant 0 : i32
    %69 = vector.broadcast %c0_i32_51 : i32 to vector<64x1xi32>
    %70 = arith.cmpi ne, %68, %69 : vector<64x1xi32>
    %c15_i32_52 = arith.constant 15 : i32
    %71 = vector.broadcast %c15_i32_52 : i32 to vector<64x1xi32>
    %72 = arith.cmpi ne, %68, %71 : vector<64x1xi32>
    %cst_53 = arith.constant 0.000000e+00 : f32
    %73 = vector.broadcast %cst_53 : f32 to vector<64x128xf32>
    %c7 = arith.constant 7 : index
    %c0_54 = arith.constant 0 : index
    %74 = vector.load %arg9[%c7, %c0_54] : memref<112x128xbf16, #tpu.memory_space<vmem>>, vector<64x128xbf16>
    %c0_55 = arith.constant 0 : index
    %c0_56 = arith.constant 0 : index
    %c0_57 = arith.constant 0 : index
    %75 = vector.load %arg5[%c0_55, %c0_56, %c0_57] : memref<9x128x128xbf16, #tpu.memory_space<vmem>>, vector<1x128x128xbf16>
    %76 = vector.shape_cast %75 : vector<1x128x128xbf16> to vector<128x128xbf16>
    %cst_58 = arith.constant dense<0.000000e+00> : vector<64x128xf32>
    %77 = tpu.matmul %74, %76, %cst_58 {dimension_numbers = #tpu.dot_dimension_numbers<[1], [0], [0], [1], [0, 0, 1, 1], [], []>} : vector<64x128xbf16>, vector<128x128xbf16>, vector<64x128xf32> -> vector<64x128xf32>
    %cst_59 = arith.constant 0.000000e+00 : f32
    %78 = vector.shape_cast %70 : vector<64x1xi1> to vector<64x1xi1>
    %79 = vector.broadcast %78 : vector<64x1xi1> to vector<64x128xi1>
    %80 = vector.broadcast %cst_59 : f32 to vector<64x128xf32>
    %81 = arith.select %79, %77, %80 : vector<64x128xi1>, vector<64x128xf32>
    %82 = arith.addf %73, %81 : vector<64x128xf32>
    %c8_60 = arith.constant 8 : index
    %c0_61 = arith.constant 0 : index
    %83 = vector.load %arg9[%c8_60, %c0_61] : memref<112x128xbf16, #tpu.memory_space<vmem>>, vector<64x128xbf16>
    %c1 = arith.constant 1 : index
    %c0_62 = arith.constant 0 : index
    %c0_63 = arith.constant 0 : index
    %84 = vector.load %arg5[%c1, %c0_62, %c0_63] : memref<9x128x128xbf16, #tpu.memory_space<vmem>>, vector<1x128x128xbf16>
    %85 = vector.shape_cast %84 : vector<1x128x128xbf16> to vector<128x128xbf16>
    %cst_64 = arith.constant dense<0.000000e+00> : vector<64x128xf32>
    %86 = tpu.matmul %83, %85, %cst_64 {dimension_numbers = #tpu.dot_dimension_numbers<[1], [0], [0], [1], [0, 0, 1, 1], [], []>} : vector<64x128xbf16>, vector<128x128xbf16>, vector<64x128xf32> -> vector<64x128xf32>
    %87 = arith.addf %82, %86 : vector<64x128xf32>
    %c9 = arith.constant 9 : index
    %c0_65 = arith.constant 0 : index
    %88 = vector.load %arg9[%c9, %c0_65] : memref<112x128xbf16, #tpu.memory_space<vmem>>, vector<64x128xbf16>
    %c2 = arith.constant 2 : index
    %c0_66 = arith.constant 0 : index
    %c0_67 = arith.constant 0 : index
    %89 = vector.load %arg5[%c2, %c0_66, %c0_67] : memref<9x128x128xbf16, #tpu.memory_space<vmem>>, vector<1x128x128xbf16>
    %90 = vector.shape_cast %89 : vector<1x128x128xbf16> to vector<128x128xbf16>
    %cst_68 = arith.constant dense<0.000000e+00> : vector<64x128xf32>
    %91 = tpu.matmul %88, %90, %cst_68 {dimension_numbers = #tpu.dot_dimension_numbers<[1], [0], [0], [1], [0, 0, 1, 1], [], []>} : vector<64x128xbf16>, vector<128x128xbf16>, vector<64x128xf32> -> vector<64x128xf32>
    %cst_69 = arith.constant 0.000000e+00 : f32
    %92 = vector.shape_cast %72 : vector<64x1xi1> to vector<64x1xi1>
    %93 = vector.broadcast %92 : vector<64x1xi1> to vector<64x128xi1>
    %94 = vector.broadcast %cst_69 : f32 to vector<64x128xf32>
    %95 = arith.select %93, %91, %94 : vector<64x128xi1>, vector<64x128xf32>
    %96 = arith.addf %87, %95 : vector<64x128xf32>
    %c23 = arith.constant 23 : index
    %c0_70 = arith.constant 0 : index
    %97 = vector.load %arg9[%c23, %c0_70] : memref<112x128xbf16, #tpu.memory_space<vmem>>, vector<64x128xbf16>
    %c3 = arith.constant 3 : index
    %c0_71 = arith.constant 0 : index
    %c0_72 = arith.constant 0 : index
    %98 = vector.load %arg5[%c3, %c0_71, %c0_72] : memref<9x128x128xbf16, #tpu.memory_space<vmem>>, vector<1x128x128xbf16>
    %99 = vector.shape_cast %98 : vector<1x128x128xbf16> to vector<128x128xbf16>
    %cst_73 = arith.constant dense<0.000000e+00> : vector<64x128xf32>
    %100 = tpu.matmul %97, %99, %cst_73 {dimension_numbers = #tpu.dot_dimension_numbers<[1], [0], [0], [1], [0, 0, 1, 1], [], []>} : vector<64x128xbf16>, vector<128x128xbf16>, vector<64x128xf32> -> vector<64x128xf32>
    %cst_74 = arith.constant 0.000000e+00 : f32
    %101 = vector.shape_cast %70 : vector<64x1xi1> to vector<64x1xi1>
    %102 = vector.broadcast %101 : vector<64x1xi1> to vector<64x128xi1>
    %103 = vector.broadcast %cst_74 : f32 to vector<64x128xf32>
    %104 = arith.select %102, %100, %103 : vector<64x128xi1>, vector<64x128xf32>
    %105 = arith.addf %96, %104 : vector<64x128xf32>
    %c24 = arith.constant 24 : index
    %c0_75 = arith.constant 0 : index
    %106 = vector.load %arg9[%c24, %c0_75] : memref<112x128xbf16, #tpu.memory_space<vmem>>, vector<64x128xbf16>
    %c4 = arith.constant 4 : index
    %c0_76 = arith.constant 0 : index
    %c0_77 = arith.constant 0 : index
    %107 = vector.load %arg5[%c4, %c0_76, %c0_77] : memref<9x128x128xbf16, #tpu.memory_space<vmem>>, vector<1x128x128xbf16>
    %108 = vector.shape_cast %107 : vector<1x128x128xbf16> to vector<128x128xbf16>
    %cst_78 = arith.constant dense<0.000000e+00> : vector<64x128xf32>
    %109 = tpu.matmul %106, %108, %cst_78 {dimension_numbers = #tpu.dot_dimension_numbers<[1], [0], [0], [1], [0, 0, 1, 1], [], []>} : vector<64x128xbf16>, vector<128x128xbf16>, vector<64x128xf32> -> vector<64x128xf32>
    %110 = arith.addf %105, %109 : vector<64x128xf32>
    %c25 = arith.constant 25 : index
    %c0_79 = arith.constant 0 : index
    %111 = vector.load %arg9[%c25, %c0_79] : memref<112x128xbf16, #tpu.memory_space<vmem>>, vector<64x128xbf16>
    %c5 = arith.constant 5 : index
    %c0_80 = arith.constant 0 : index
    %c0_81 = arith.constant 0 : index
    %112 = vector.load %arg5[%c5, %c0_80, %c0_81] : memref<9x128x128xbf16, #tpu.memory_space<vmem>>, vector<1x128x128xbf16>
    %113 = vector.shape_cast %112 : vector<1x128x128xbf16> to vector<128x128xbf16>
    %cst_82 = arith.constant dense<0.000000e+00> : vector<64x128xf32>
    %114 = tpu.matmul %111, %113, %cst_82 {dimension_numbers = #tpu.dot_dimension_numbers<[1], [0], [0], [1], [0, 0, 1, 1], [], []>} : vector<64x128xbf16>, vector<128x128xbf16>, vector<64x128xf32> -> vector<64x128xf32>
    %cst_83 = arith.constant 0.000000e+00 : f32
    %115 = vector.shape_cast %72 : vector<64x1xi1> to vector<64x1xi1>
    %116 = vector.broadcast %115 : vector<64x1xi1> to vector<64x128xi1>
    %117 = vector.broadcast %cst_83 : f32 to vector<64x128xf32>
    %118 = arith.select %116, %114, %117 : vector<64x128xi1>, vector<64x128xf32>
    %119 = arith.addf %110, %118 : vector<64x128xf32>
    %c39 = arith.constant 39 : index
    %c0_84 = arith.constant 0 : index
    %120 = vector.load %arg9[%c39, %c0_84] : memref<112x128xbf16, #tpu.memory_space<vmem>>, vector<64x128xbf16>
    %c6 = arith.constant 6 : index
    %c0_85 = arith.constant 0 : index
    %c0_86 = arith.constant 0 : index
    %121 = vector.load %arg5[%c6, %c0_85, %c0_86] : memref<9x128x128xbf16, #tpu.memory_space<vmem>>, vector<1x128x128xbf16>
    %122 = vector.shape_cast %121 : vector<1x128x128xbf16> to vector<128x128xbf16>
    %cst_87 = arith.constant dense<0.000000e+00> : vector<64x128xf32>
    %123 = tpu.matmul %120, %122, %cst_87 {dimension_numbers = #tpu.dot_dimension_numbers<[1], [0], [0], [1], [0, 0, 1, 1], [], []>} : vector<64x128xbf16>, vector<128x128xbf16>, vector<64x128xf32> -> vector<64x128xf32>
    %cst_88 = arith.constant 0.000000e+00 : f32
    %124 = vector.shape_cast %70 : vector<64x1xi1> to vector<64x1xi1>
    %125 = vector.broadcast %124 : vector<64x1xi1> to vector<64x128xi1>
    %126 = vector.broadcast %cst_88 : f32 to vector<64x128xf32>
    %127 = arith.select %125, %123, %126 : vector<64x128xi1>, vector<64x128xf32>
    %128 = arith.addf %119, %127 : vector<64x128xf32>
    %c40 = arith.constant 40 : index
    %c0_89 = arith.constant 0 : index
    %129 = vector.load %arg9[%c40, %c0_89] : memref<112x128xbf16, #tpu.memory_space<vmem>>, vector<64x128xbf16>
    %c7_90 = arith.constant 7 : index
    %c0_91 = arith.constant 0 : index
    %c0_92 = arith.constant 0 : index
    %130 = vector.load %arg5[%c7_90, %c0_91, %c0_92] : memref<9x128x128xbf16, #tpu.memory_space<vmem>>, vector<1x128x128xbf16>
    %131 = vector.shape_cast %130 : vector<1x128x128xbf16> to vector<128x128xbf16>
    %cst_93 = arith.constant dense<0.000000e+00> : vector<64x128xf32>
    %132 = tpu.matmul %129, %131, %cst_93 {dimension_numbers = #tpu.dot_dimension_numbers<[1], [0], [0], [1], [0, 0, 1, 1], [], []>} : vector<64x128xbf16>, vector<128x128xbf16>, vector<64x128xf32> -> vector<64x128xf32>
    %133 = arith.addf %128, %132 : vector<64x128xf32>
    %c41 = arith.constant 41 : index
    %c0_94 = arith.constant 0 : index
    %134 = vector.load %arg9[%c41, %c0_94] : memref<112x128xbf16, #tpu.memory_space<vmem>>, vector<64x128xbf16>
    %c8_95 = arith.constant 8 : index
    %c0_96 = arith.constant 0 : index
    %c0_97 = arith.constant 0 : index
    %135 = vector.load %arg5[%c8_95, %c0_96, %c0_97] : memref<9x128x128xbf16, #tpu.memory_space<vmem>>, vector<1x128x128xbf16>
    %136 = vector.shape_cast %135 : vector<1x128x128xbf16> to vector<128x128xbf16>
    %cst_98 = arith.constant dense<0.000000e+00> : vector<64x128xf32>
    %137 = tpu.matmul %134, %136, %cst_98 {dimension_numbers = #tpu.dot_dimension_numbers<[1], [0], [0], [1], [0, 0, 1, 1], [], []>} : vector<64x128xbf16>, vector<128x128xbf16>, vector<64x128xf32> -> vector<64x128xf32>
    %cst_99 = arith.constant 0.000000e+00 : f32
    %138 = vector.shape_cast %72 : vector<64x1xi1> to vector<64x1xi1>
    %139 = vector.broadcast %138 : vector<64x1xi1> to vector<64x128xi1>
    %140 = vector.broadcast %cst_99 : f32 to vector<64x128xf32>
    %141 = arith.select %139, %137, %140 : vector<64x128xi1>, vector<64x128xf32>
    %142 = arith.addf %133, %141 : vector<64x128xf32>
    %c0_100 = arith.constant 0 : index
    %c0_101 = arith.constant 0 : index
    %143 = vector.load %arg6[%c0_100, %c0_101] : memref<1x128xf32, #tpu.memory_space<vmem>>, vector<1x128xf32>
    %144 = vector.broadcast %143 : vector<1x128xf32> to vector<64x128xf32>
    %145 = arith.addf %142, %144 : vector<64x128xf32>
    %cst_102 = arith.constant 0.000000e+00 : f32
    %146 = vector.broadcast %cst_102 : f32 to vector<64x128xf32>
    %147 = arith.maximumf %145, %146 : vector<64x128xf32>
    %148 = vector.shape_cast %147 : vector<64x128xf32> to vector<4x16x128xf32>
    %149 = arith.truncf %148 : vector<4x16x128xf32> to vector<4x16x128xbf16>
    %c0_103 = arith.constant 0 : index
    %c0_104 = arith.constant 0 : index
    %c0_105 = arith.constant 0 : index
    %c0_106 = arith.constant 0 : index
    %150 = vector.load %arg7[%c0_103, %c0_104, %c0_105, %c0_106] : memref<1x4x16x128xbf16, #tpu.memory_space<vmem>>, vector<1x4x16x128xbf16>
    %151 = vector.shape_cast %150 : vector<1x4x16x128xbf16> to vector<4x16x128xbf16>
    %152 = vector.shape_cast %149 : vector<4x16x128xbf16> to vector<1x4x16x128xbf16>
    tpu.vector_store %arg7[%c0_103, %c0_104, %c0_105, %c0_106], %152 {strides = array<i32>} : memref<1x4x16x128xbf16, #tpu.memory_space<vmem>>, vector<1x4x16x128xbf16>,
    return
  }
  func.func @transform_1(%arg0: i32, %arg1: i32) -> (i32, i32) {
    %c0_i32 = arith.constant 0 : i32
    %c0_i32_0 = arith.constant 0 : i32
    %c0_i32_1 = arith.constant 0 : i32
    return %c0_i32, %c0_i32_0 : i32, i32
  }
  func.func @transform_2(%arg0: i32, %arg1: i32) -> (i32, i32) {
    %c0_i32 = arith.constant 0 : i32
    %c0_i32_0 = arith.constant 0 : i32
    %c0_i32_1 = arith.constant 0 : i32
    return %c0_i32, %c0_i32_0 : i32, i32
  }
  func.func @transform_3(%arg0: i32, %arg1: i32) -> (i32, i32, i32) {
    %c0_i32 = arith.constant 0 : i32
    %c0_i32_0 = arith.constant 0 : i32
    %c0_i32_1 = arith.constant 0 : i32
    %c0_i32_2 = arith.constant 0 : i32
    return %c0_i32, %c0_i32_0, %c0_i32_1 : i32, i32, i32
  }
  func.func @transform_4(%arg0: i32, %arg1: i32) -> (i32, i32) {
    %c0_i32 = arith.constant 0 : i32
    %c0_i32_0 = arith.constant 0 : i32
    %c0_i32_1 = arith.constant 0 : i32
    return %c0_i32, %c0_i32_0 : i32, i32
  }
  func.func @transform_5(%arg0: i32, %arg1: i32) -> (i32, i32, i32, i32) {
    %c0_i32 = arith.constant 0 : i32
    %c0_i32_0 = arith.constant 0 : i32
    %c0_i32_1 = arith.constant 0 : i32
    return %arg0, %arg1, %c0_i32, %c0_i32_0 : i32, i32, i32, i32
  }
}

module attributes {stable_mosaic.version = 11 : i64} {
  func.func @_se_apply_kernel(%arg0: i32, %arg1: i32, %arg2: memref<1x128x128xbf16, #tpu.memory_space<vmem>>, %arg3: memref<1x128x128xbf16, #tpu.memory_space<vmem>>, %arg4: memref<1x1x128xf32, #tpu.memory_space<vmem>>, %arg5: memref<1x128x128xbf16, #tpu.memory_space<vmem>>) attributes {dimension_semantics = [#tpu.dimension_semantics<parallel>, #tpu.dimension_semantics<parallel>], iteration_bounds = array<i64: 2, 2>, scalar_prefetch = 0 : i64, scratch_operands = 0 : i64, tpu.core_type = #tpu.core_type<tc>, window_params = [{transform_indices = @transform_0, window_bounds = array<i64: 1, 128, 128>}, {transform_indices = @transform_1, window_bounds = array<i64: 1, 128, 128>}, {transform_indices = @transform_2, window_bounds = array<i64: 1, 1, 128>}, {transform_indices = @transform_3, window_bounds = array<i64: 1, 128, 128>}]} {
    %c0 = arith.constant 0 : index
    %c0_0 = arith.constant 0 : index
    %c0_1 = arith.constant 0 : index
    %0 = vector.load %arg2[%c0, %c0_0, %c0_1] : memref<1x128x128xbf16, #tpu.memory_space<vmem>>, vector<1x128x128xbf16>
    %1 = vector.shape_cast %0 : vector<1x128x128xbf16> to vector<128x128xbf16>
    %2 = arith.extf %1 : vector<128x128xbf16> to vector<128x128xf32>
    %c0_2 = arith.constant 0 : index
    %c0_3 = arith.constant 0 : index
    %c0_4 = arith.constant 0 : index
    %3 = vector.load %arg4[%c0_2, %c0_3, %c0_4] : memref<1x1x128xf32, #tpu.memory_space<vmem>>, vector<1x1x128xf32>
    %4 = vector.shape_cast %3 : vector<1x1x128xf32> to vector<1x128xf32>
    %5 = vector.broadcast %4 : vector<1x128xf32> to vector<128x128xf32>
    %6 = arith.mulf %2, %5 : vector<128x128xf32>
    %c0_5 = arith.constant 0 : index
    %c0_6 = arith.constant 0 : index
    %c0_7 = arith.constant 0 : index
    %7 = vector.load %arg3[%c0_5, %c0_6, %c0_7] : memref<1x128x128xbf16, #tpu.memory_space<vmem>>, vector<1x128x128xbf16>
    %8 = vector.shape_cast %7 : vector<1x128x128xbf16> to vector<128x128xbf16>
    %9 = arith.extf %8 : vector<128x128xbf16> to vector<128x128xf32>
    %10 = arith.addf %6, %9 : vector<128x128xf32>
    %cst = arith.constant 0.000000e+00 : f32
    %11 = vector.broadcast %cst : f32 to vector<128x128xf32>
    %12 = arith.maximumf %10, %11 : vector<128x128xf32>
    %13 = arith.truncf %12 : vector<128x128xf32> to vector<128x128xbf16>
    %c0_8 = arith.constant 0 : index
    %c0_9 = arith.constant 0 : index
    %c0_10 = arith.constant 0 : index
    %14 = vector.load %arg5[%c0_8, %c0_9, %c0_10] : memref<1x128x128xbf16, #tpu.memory_space<vmem>>, vector<1x128x128xbf16>
    %15 = vector.shape_cast %14 : vector<1x128x128xbf16> to vector<128x128xbf16>
    %16 = vector.shape_cast %13 : vector<128x128xbf16> to vector<1x128x128xbf16>
    tpu.vector_store %arg5[%c0_8, %c0_9, %c0_10], %16 {strides = array<i32>} : memref<1x128x128xbf16, #tpu.memory_space<vmem>>, vector<1x128x128xbf16>,
    return
  }
  func.func @transform_0(%arg0: i32, %arg1: i32) -> (i32, i32, i32) {
    %c0_i32 = arith.constant 0 : i32
    %c0_i32_0 = arith.constant 0 : i32
    return %arg0, %arg1, %c0_i32 : i32, i32, i32
  }
  func.func @transform_1(%arg0: i32, %arg1: i32) -> (i32, i32, i32) {
    %c0_i32 = arith.constant 0 : i32
    %c0_i32_0 = arith.constant 0 : i32
    return %arg0, %arg1, %c0_i32 : i32, i32, i32
  }
  func.func @transform_2(%arg0: i32, %arg1: i32) -> (i32, i32, i32) {
    %c0_i32 = arith.constant 0 : i32
    %c0_i32_0 = arith.constant 0 : i32
    %c0_i32_1 = arith.constant 0 : i32
    return %arg0, %c0_i32, %c0_i32_0 : i32, i32, i32
  }
  func.func @transform_3(%arg0: i32, %arg1: i32) -> (i32, i32, i32) {
    %c0_i32 = arith.constant 0 : i32
    %c0_i32_0 = arith.constant 0 : i32
    return %arg0, %arg1, %c0_i32 : i32, i32, i32
  }
}

</mosaic_0001>

<llo_original>
// kernel: _lambda_.4
$region0: #{_lambda_.4}
  #allocation0 [shape = 'u32[]', space=smem, size = 0x4, offset = 0x4, fixed_abs, tag = 'smem constant byte address 0x4 - core index']
  #allocation1 [shape = 'u32[144,128]{1,0:T(1,128)}', space=vmem, size = 0x12000, scoped, tag = 'internal scratch']
  %s0 = inlined_call_operand.vmem [shape: bf16[2,256,128], index: 0, kind: input, shape index: {}]
  %s1 = inlined_call_operand.vmem [shape: bf16[128,128], index: 1, kind: input, shape index: {}]
  %s2 = inlined_call_operand.vmem [shape: f32[1,128], index: 2, kind: input, shape index: {}]
  %s3 = inlined_call_operand.vmem [shape: bf16[2,256,128], index: 3, kind: output, shape index: {0}]
  %s4 = inlined_call_operand.vmem [shape: f32[2,1,128], index: 4, kind: output, shape index: {1}]
  %5 = xla_tuple %s3, %s4
  %s6 = sld [smem:[#allocation0]]
  $region57: #{_lambda_.4} parent=0
    _
  %s8 = ssub.s32 1, %s6
  %s9 = scalar_select 0, %s8, %s6
  loop: start=0, step=1, limit=6
  $region2: #{_lambda_.4} parent=0 // loop_pre_header
    _
  $region3: #{_lambda_.4} parent=0 // loop_header
    %s11 = sphi 0, %s15
    %p12 = scmp.ge.s32.totalorder %s11, 6
    %s18 = sphi 0, %s30
    %s19 = sphi 0, %s26
    %s20 = sphi 0, %s18
    %s21 = sphi 0, %s19
    %s22 = sphi 0, %s20
    %s23 = sphi 0, %s21
    %s35 = sphi 0, %s37
    %s38 = sphi 0, %s35
    %s39 = sphi 0, %s38
    %s55 = sphi 0, %s39
    %s59 = sphi 0, %s59
    %s61 = sphi 0, %s59
    %s62 = sphi 0, %s61
    %s76 = sphi 0, %s62
    %s80 = sphi 0, %s80
    %s82 = sphi 0, %s80
    %s83 = sphi 0, %s82
    %s97 = sphi 0, %s83
    %s105 = sphi 0, %s107
    %s108 = sphi 0, %s105
    %s109 = sphi 0, %s108
    %s125 = sphi 0, %s109
    %s131 = sphi 0, %s133
    %s134 = sphi 0, %s131
    %s135 = sphi 0, %s134
    %s151 = sphi 0, %s135
  $region4: #{_lambda_.4} parent=0 // loop_header_branch
    %14 = sbr.rel (%p12) target = $region8
  $region5: #{_lambda_.4} parent=0 // loop_body
    %s16 = ssub.s32 %s11, 1
    %s17 = ssub.s32 %s11, 2
    %s24 = sadd.s32 1, %s19
    %p25 = scmp.ge.s32.totalorder %s24, 2
    %s26 = scalar_select %p25, 0, %s24
    %s27 = sadd.s32 1, %s18
    %s28 = scalar_select %p25, %s27, %s18
    %p29 = scmp.ge.s32.totalorder %s28, 2
    %s30 = scalar_select %p29, 0, %s28
    %s31 = ssub.s32 %s18, %s30
    %s32 = ssub.s32 %s19, %s26
    %s33 = sor.u32 %s31, %s32
    %p34 = scmp.eq.s32.totalorder %s33, 0
    %s36 = sadd.s32 %s35, 1
    %s37 = scalar_select %p34, %s35, %s36
    %p40 = pneg %p34
    %p41 = scmp.eq.s32.totalorder %s11, 3
    %p42 = por %p40, %p41
    %p43 = scmp.ne.s32.totalorder %s35, %s38
    %p44 = scmp.eq.s32.totalorder %s11, 0
    %p45 = por %p43, %p44
    %p46 = scmp.ne.s32.totalorder %s35, %s38
    %p47 = scmp.eq.s32.totalorder %s16, 3
    %p48 = por %p46, %p47
    %p49 = scmp.ne.s32.totalorder %s38, %s39
    %p50 = scmp.eq.s32.totalorder %s16, 0
    %p51 = por %p49, %p50
    %p52 = scmp.ne.s32.totalorder %s38, %s39
    %p53 = scmp.eq.s32.totalorder %s17, 3
    %p54 = por %p52, %p53
    %p56 = scmp.ne.s32.totalorder %s39, %s55
    %p57 = scmp.eq.s32.totalorder %s17, 0
    %p58 = por %p56, %p57
    %s60 = sadd.s32 %s59, 1
    %p63 = scmp.eq.s32.totalorder %s11, 3
    %p64 = scmp.ne.s32.totalorder %s59, %s61
    %p65 = scmp.eq.s32.totalorder %s11, 0
    %p66 = por %p64, %p65
    %p67 = scmp.ne.s32.totalorder %s59, %s61
    %p68 = scmp.eq.s32.totalorder %s16, 3
    %p69 = por %p67, %p68
    %p70 = scmp.ne.s32.totalorder %s61, %s62
    %p71 = scmp.eq.s32.totalorder %s16, 0
    %p72 = por %p70, %p71
    %p73 = scmp.ne.s32.totalorder %s61, %s62
    %p74 = scmp.eq.s32.totalorder %s17, 3
    %p75 = por %p73, %p74
    %p77 = scmp.ne.s32.totalorder %s62, %s76
    %p78 = scmp.eq.s32.totalorder %s17, 0
    %p79 = por %p77, %p78
    %s81 = sadd.s32 %s80, 1
    %p84 = scmp.eq.s32.totalorder %s11, 3
    %p85 = scmp.ne.s32.totalorder %s80, %s82
    %p86 = scmp.eq.s32.totalorder %s11, 0
    %p87 = por %p85, %p86
    %p88 = scmp.ne.s32.totalorder %s80, %s82
    %p89 = scmp.eq.s32.totalorder %s16, 3
    %p90 = por %p88, %p89
    %p91 = scmp.ne.s32.totalorder %s82, %s83
    %p92 = scmp.eq.s32.totalorder %s16, 0
    %p93 = por %p91, %p92
    %p94 = scmp.ne.s32.totalorder %s82, %s83
    %p95 = scmp.eq.s32.totalorder %s17, 3
    %p96 = por %p94, %p95
    %p98 = scmp.ne.s32.totalorder %s83, %s97
    %p99 = scmp.eq.s32.totalorder %s17, 0
    %p100 = por %p98, %p99
    %s101 = ssub.s32 %s18, %s30
    %s102 = ssub.s32 %s19, %s26
    %s103 = sor.u32 %s101, %s102
    %p104 = scmp.eq.s32.totalorder %s103, 0
    %s106 = sadd.s32 %s105, 1
    %s107 = scalar_select %p104, %s105, %s106
    %p110 = pneg %p104
    %p111 = scmp.eq.s32.totalorder %s11, 3
    %p112 = por %p110, %p111
    %p113 = scmp.ne.s32.totalorder %s105, %s108
    %p114 = scmp.eq.s32.totalorder %s11, 0
    %p115 = por %p113, %p114
    %p116 = scmp.ne.s32.totalorder %s105, %s108
    %p117 = scmp.eq.s32.totalorder %s16, 3
    %p118 = por %p116, %p117
    %p119 = scmp.ne.s32.totalorder %s108, %s109
    %p120 = scmp.eq.s32.totalorder %s16, 0
    %p121 = por %p119, %p120
    %p122 = scmp.ne.s32.totalorder %s108, %s109
    %p123 = scmp.eq.s32.totalorder %s17, 3
    %p124 = por %p122, %p123
    %p126 = scmp.ne.s32.totalorder %s109, %s125
    %p127 = scmp.eq.s32.totalorder %s17, 0
    %p128 = por %p126, %p127
    %s129 = ssub.s32 %s18, %s30
    %p130 = scmp.eq.s32.totalorder %s129, 0
    %s132 = sadd.s32 %s131, 1
    %s133 = scalar_select %p130, %s131, %s132
    %p136 = pneg %p130
    %p137 = scmp.eq.s32.totalorder %s11, 3
    %p138 = por %p136, %p137
    %p139 = scmp.ne.s32.totalorder %s131, %s134
    %p140 = scmp.eq.s32.totalorder %s11, 0
    %p141 = por %p139, %p140
    %p142 = scmp.ne.s32.totalorder %s131, %s134
    %p143 = scmp.eq.s32.totalorder %s16, 3
    %p144 = por %p142, %p143
    %p145 = scmp.ne.s32.totalorder %s134, %s135
    %p146 = scmp.eq.s32.totalorder %s16, 0
    %p147 = por %p145, %p146
    %p148 = scmp.ne.s32.totalorder %s134, %s135
    %p149 = scmp.eq.s32.totalorder %s17, 3
    %p150 = por %p148, %p149
    %p152 = scmp.ne.s32.totalorder %s135, %s151
    %p153 = scmp.eq.s32.totalorder %s17, 0
    %p154 = por %p152, %p153
    %p155 = scmp.le.s32.totalorder 1, %s11
    %p156 = scmp.lt.s32.totalorder %s11, 5
    %p157 = pnand %p155, %p156
    %p158 = pneg %p157
    // Predicated region
    $region9: #{_lambda_.4} parent=5 // pred_check
      _
    $region10: #{_lambda_.4} parent=5 // pred_check_branch
      %160 = sbr.rel (%p157) target = $region12
    $region11: #{_lambda_.4} parent=5 // pred_region
      %s161 = ssub.s32 %s11, 1
      // Predicated region
      $region13: #{_lambda_.4} parent=11 // pred_check
        %p162 = pneg %p72
      $region14: #{_lambda_.4} parent=11 // pred_check_branch
        %164 = sbr.rel (%p162) target = $region16
      $region15: #{_lambda_.4} parent=11 // pred_region
        _
      $region16: #{_lambda_.4} parent=11 // pred_fallthru
        _
      // Predicated region
      $region17: #{_lambda_.4} parent=11 // pred_check
        %p165 = pneg %p93
      $region18: #{_lambda_.4} parent=11 // pred_check_branch
        %167 = sbr.rel (%p165) target = $region20
      $region19: #{_lambda_.4} parent=11 // pred_region
        _
      $region20: #{_lambda_.4} parent=11 // pred_fallthru
        _
    $region12: #{_lambda_.4} parent=5 // pred_fallthru
      _
    %p168 = scmp.lt.s32.totalorder %s11, 4
    // Predicated region
    $region21: #{_lambda_.4} parent=5 // pred_check
      %p169 = pneg %p168
    $region22: #{_lambda_.4} parent=5 // pred_check_branch
      %171 = sbr.rel (%p169) target = $region24
    $region23: #{_lambda_.4} parent=5 // pred_region
      // Predicated region
      $region25: #{_lambda_.4} parent=23 // pred_check
        %p172 = pneg %p45
      $region26: #{_lambda_.4} parent=23 // pred_check_branch
        %174 = sbr.rel (%p172) target = $region28
      $region27: #{_lambda_.4} parent=23 // pred_region
        %s175 = smul.u32 16, %s19
        %p176 = scmp.lt.s32.totalorder %s18, 1
        %s177 = scalar_select %p176, %s18, 1
        %p178 = scmp.lt.s32.totalorder %s175, 31
        %s179 = scalar_select %p178, %s175, 31
        %s180 = smul.addr %s177, 32
        %s181 = sadd.s32 %s179, %s180
        %s182 = smul.addr %s181, 4
        %s183 = scalar_lea.vmem %s0, %s182
        %s184 = smul.u32 16, %s19
      $region28: #{_lambda_.4} parent=23 // pred_fallthru
        _
    $region24: #{_lambda_.4} parent=5 // pred_fallthru
      _
    %p185 = scmp.le.s32.totalorder 1, %s11
    %p186 = scmp.lt.s32.totalorder %s11, 5
    %p187 = pnand %p185, %p186
    %p188 = pneg %p187
    // Predicated region
    $region29: #{_lambda_.4} parent=5 // pred_check
      _
    $region30: #{_lambda_.4} parent=5 // pred_check_branch
      %190 = sbr.rel (%p187) target = $region32
    $region31: #{_lambda_.4} parent=5 // pred_region
      %s191 = ssub.s32 %s11, 1
      %s192 = smul.u32 16, %s21
      %p193 = scmp.lt.s32.totalorder %s20, 1
      %s194 = scalar_select %p193, %s20, 1
      %p195 = scmp.lt.s32.totalorder %s192, 31
      %s196 = scalar_select %p195, %s192, 31
      %s197 = smul.addr %s194, 32
      %s198 = sadd.s32 %s196, %s197
      %s199 = smul.addr %s198, 4
      %s200 = scalar_lea.vmem %s0, %s199
      %p201 = pneg %p51
      %p202 = pneg %p48
      %p203 = pneg %p72
      %p204 = pneg %p69
      %p205 = pneg %p93
      %p206 = pneg %p90
      %p207 = pneg %p121
      %p208 = pneg %p118
      %s209 = smul.u32 16, %s21
      %p210 = scmp.lt.s32.totalorder %s20, 1
      %s211 = scalar_select %p210, %s20, 1
      %p212 = scmp.lt.s32.totalorder %s209, 31
      %s213 = scalar_select %p212, %s209, 31
      %s214 = smul.addr %s211, 32
      %s215 = sadd.s32 %s213, %s214
      %s216 = smul.addr %s215, 4
      %s217 = scalar_lea.vmem %s3, %s216
      %p218 = pneg %p147
      %p219 = pneg %p144
      %p220 = scmp.lt.s32.totalorder %s20, 1
      %s221 = scalar_select %p220, %s20, 1
      %s222 = scalar_lea.vmem %s4, %s221
      %s223 = smul.u32 16, %s21
      %p224 = scmp.lt.s32.totalorder %s20, 1
      %s225 = scalar_select %p224, %s20, 1
      %p226 = scmp.lt.s32.totalorder %s223, 31
      %s227 = scalar_select %p226, %s223, 31
      %s228 = smul.addr %s225, 32
      %s229 = sadd.s32 %s227, %s228
      %s230 = smul.addr %s229, 4
      %s231 = scalar_lea.vmem %s0, %s230
      %s232 = smul.u32 16, %s21
      %s233 = smul.u32 16, %s21
      %p234 = scmp.lt.s32.totalorder %s20, 1
      %s235 = scalar_select %p234, %s20, 1
      %p236 = scmp.lt.s32.totalorder %s233, 31
      %s237 = scalar_select %p236, %s233, 31
      %s238 = smul.addr %s235, 32
      %s239 = sadd.s32 %s237, %s238
      %s240 = smul.addr %s239, 4
      %s241 = scalar_lea.vmem %s3, %s240
      %s242 = smul.u32 16, %s21
      %p243 = scmp.lt.s32.totalorder %s20, 1
      %s244 = scalar_select %p243, %s20, 1
      %s245 = scalar_lea.vmem %s4, %s244
      %p247 = scmp.eq.s32.totalorder %s21, 0
      // Predicated region
      $region33: #{_lambda_.4} parent=31 // pred_check
        %p248 = pneg %p247
      $region34: #{_lambda_.4} parent=31 // pred_check_branch
        %250 = sbr.rel (%p248) target = $region36
      $region35: #{_lambda_.4} parent=31 // pred_region
        %251 = vst [vmem:[%s245] sm:$0x1] 0.0
      $region36: #{_lambda_.4} parent=31 // pred_fallthru
        _
      %v252 = vld [vmem:[%s231] sm:$0xf]
      %v253 = vld [vmem:[%s231 + $0x4] sm:$0xf]
      %v254 = vld [vmem:[%s231 + $0x8] sm:$0xf]
      %v255 = vld [vmem:[%s231 + $0xc] sm:$0xf]
      %v256 = vld [vmem:[%s231 + $0x10] sm:$0xf]
      %v257 = vld [vmem:[%s231 + $0x14] sm:$0xf]
      %v258 = vld [vmem:[%s231 + $0x18] sm:$0xf]
      %v259 = vld [vmem:[%s231 + $0x1c] sm:$0xf]
      %v260 = vld [vmem:[%s231 + $0x20] sm:$0xf]
      %v261 = vld [vmem:[%s231 + $0x24] sm:$0xf]
      %v262 = vld [vmem:[%s231 + $0x28] sm:$0xf]
      %v263 = vld [vmem:[%s231 + $0x2c] sm:$0xf]
      %v264 = vld [vmem:[%s231 + $0x30] sm:$0xf]
      %v265 = vld [vmem:[%s231 + $0x34] sm:$0xf]
      %v266 = vld [vmem:[%s231 + $0x38] sm:$0xf]
      %v267 = vld [vmem:[%s231 + $0x3c] sm:$0xf]
      %v268 = vld [vmem:[%s1] sm:$0xf]
      %v269 = vld [vmem:[%s1 + $0x4] sm:$0xf]
      %v270 = vld [vmem:[%s1 + $0x8] sm:$0xf]
      %v271 = vld [vmem:[%s1 + $0xc] sm:$0xf]
      %v272 = vld [vmem:[%s1 + $0x10] sm:$0xf]
      %v273 = vld [vmem:[%s1 + $0x14] sm:$0xf]
      %v274 = vld [vmem:[%s1 + $0x18] sm:$0xf]
      %v275 = vld [vmem:[%s1 + $0x1c] sm:$0xf]
      %v276 = vld [vmem:[%s1 + $0x20] sm:$0xf]
      %v277 = vld [vmem:[%s1 + $0x24] sm:$0xf]
      %v278 = vld [vmem:[%s1 + $0x28] sm:$0xf]
      %v279 = vld [vmem:[%s1 + $0x2c] sm:$0xf]
      %v280 = vld [vmem:[%s1 + $0x30] sm:$0xf]
      %v281 = vld [vmem:[%s1 + $0x34] sm:$0xf]
      %v282 = vld [vmem:[%s1 + $0x38] sm:$0xf]
      %v283 = vld [vmem:[%s1 + $0x3c] sm:$0xf]
      %v284 = vld [vmem:[%s2] sm:$0x1]
      %v286 = vlaneseq
      %v287 = vshrl.u32 %v286, 7
      %v288 = vsub.s32 0, %v287
      %v289 = vrot.slane %v284, %v288
      %v307 = vunpack.c.l.b16 %v252
      %v308 = vunpack.c.l.b16 %v253
      %v309 = vunpack.c.l.b16 %v254
      %v310 = vunpack.c.l.b16 %v255
      %v311 = vunpack.c.l.b16 %v256
      %v312 = vunpack.c.l.b16 %v257
      %v313 = vunpack.c.l.b16 %v258
      %v314 = vunpack.c.l.b16 %v259
      %v315 = vunpack.c.l.b16 %v260
      %v316 = vunpack.c.l.b16 %v261
      %v317 = vunpack.c.l.b16 %v262
      %v318 = vunpack.c.l.b16 %v263
      %v319 = vunpack.c.l.b16 %v264
      %v320 = vunpack.c.l.b16 %v265
      %v321 = vunpack.c.l.b16 %v266
      %v322 = vunpack.c.l.b16 %v267
      %v323 = vpack.c.b16 %v308, %v307
      %v324 = vpack.c.b16 %v310, %v309
      %v325 = vpack.c.b16 %v312, %v311
      %v326 = vpack.c.b16 %v314, %v313
      %v327 = vpack.c.b16 %v316, %v315
      %v328 = vpack.c.b16 %v318, %v317
      %v329 = vpack.c.b16 %v320, %v319
      %v330 = vpack.c.b16 %v322, %v321
      %v355 = vunpack.c.l.b16 %v268
      %v356 = vunpack.c.l.b16 %v269
      %v357 = vunpack.c.l.b16 %v270
      %v358 = vunpack.c.l.b16 %v271
      %v359 = vunpack.c.l.b16 %v272
      %v360 = vunpack.c.l.b16 %v273
      %v361 = vunpack.c.l.b16 %v274
      %v362 = vunpack.c.l.b16 %v275
      %v363 = vunpack.c.l.b16 %v276
      %v364 = vunpack.c.l.b16 %v277
      %v365 = vunpack.c.l.b16 %v278
      %v366 = vunpack.c.l.b16 %v279
      %v367 = vunpack.c.l.b16 %v280
      %v368 = vunpack.c.l.b16 %v281
      %v369 = vunpack.c.l.b16 %v282
      %v370 = vunpack.c.l.b16 %v283
      %v371 = vpack.c.b16 %v356, %v355
      %v372 = vpack.c.b16 %v358, %v357
      %v373 = vpack.c.b16 %v360, %v359
      %v374 = vpack.c.b16 %v362, %v361
      %v375 = vpack.c.b16 %v364, %v363
      %v376 = vpack.c.b16 %v366, %v365
      %v377 = vpack.c.b16 %v368, %v367
      %v378 = vpack.c.b16 %v370, %v369
      %387 = vmatprep.subr.bf16.mxu0 0
      %388 = vmatpush1.bf16.msra.mxu0 %v371
      %389 = vmatprep.subr.bf16.mxu0 0
      %390 = vmatpush1.bf16.msra.mxu0 %v372
      %391 = vmatprep.subr.bf16.mxu0 0
      %392 = vmatpush1.bf16.msra.mxu0 %v373
      %393 = vmatprep.subr.bf16.mxu0 0
      %394 = vmatpush1.bf16.msra.mxu0 %v374
      %395 = vmatprep.subr.bf16.mxu0 0
      %396 = vmatpush1.bf16.msra.mxu0 %v375
      %397 = vmatprep.subr.bf16.mxu0 0
      %398 = vmatpush1.bf16.msra.mxu0 %v376
      %399 = vmatprep.subr.bf16.mxu0 0
      %400 = vmatpush1.bf16.msra.mxu0 %v377
      %401 = vmatprep.subr.bf16.mxu0 0
      %402 = vmatpush1.bf16.msra.mxu0 %v378
      %403 = vmatprep.subr.bf16.mxu0 0
      %404 = vmatpush1.bf16.msra.mxu0 0
      %405 = vmatprep.subr.bf16.mxu0 0
      %406 = vmatpush1.bf16.msra.mxu0 0
      %407 = vmatprep.subr.bf16.mxu0 0
      %408 = vmatpush1.bf16.msra.mxu0 0
      %409 = vmatprep.subr.bf16.mxu0 0
      %410 = vmatpush1.bf16.msra.mxu0 0
      %411 = vmatprep.subr.bf16.mxu0 0
      %412 = vmatpush1.bf16.msra.mxu0 0
      %413 = vmatprep.subr.bf16.mxu0 0
      %414 = vmatpush1.bf16.msra.mxu0 0
      %415 = vmatprep.subr.bf16.mxu0 0
      %416 = vmatpush1.bf16.msra.mxu0 0
      %417 = vmatprep.subr.bf16.mxu0 0
      %418 = vmatpush1.bf16.msra.mxu0 0
      %419 = vmatprep.mubr.bf16.mxu0 0
      %420 = vmatmul.mubr.bf16.gmra.mrb[0].mxu0 %v323
      %v421 = vpop.f32.mrb[0].mxu0
      %v422 = vadd.f32 %v289, %v421
      %v423 = vpop.f32.mrb[0].mxu0
      %v424 = vpop.f32.mrb[0].mxu0
      %v425 = vadd.f32 %v289, %v424
      %v426 = vpop.f32.mrb[0].mxu0
      %427 = vmatprep.mubr.bf16.mxu0 0
      %428 = vmatmul.mubr.bf16.gmra.mrb[0].mxu0 %v324
      %v429 = vpop.f32.mrb[0].mxu0
      %v430 = vadd.f32 %v289, %v429
      %v431 = vpop.f32.mrb[0].mxu0
      %v432 = vpop.f32.mrb[0].mxu0
      %v433 = vadd.f32 %v289, %v432
      %v434 = vpop.f32.mrb[0].mxu0
      %435 = vmatprep.mubr.bf16.mxu0 0
      %436 = vmatmul.mubr.bf16.gmra.mrb[0].mxu0 %v325
      %v437 = vpop.f32.mrb[0].mxu0
      %v438 = vadd.f32 %v289, %v437
      %v439 = vpop.f32.mrb[0].mxu0
      %v440 = vpop.f32.mrb[0].mxu0
      %v441 = vadd.f32 %v289, %v440
      %v442 = vpop.f32.mrb[0].mxu0
      %443 = vmatprep.mubr.bf16.mxu0 0
      %444 = vmatmul.mubr.bf16.gmra.mrb[0].mxu0 %v326
      %v445 = vpop.f32.mrb[0].mxu0
      %v446 = vadd.f32 %v289, %v445
      %v447 = vpop.f32.mrb[0].mxu0
      %v448 = vpop.f32.mrb[0].mxu0
      %v449 = vadd.f32 %v289, %v448
      %v450 = vpop.f32.mrb[0].mxu0
      %451 = vmatprep.mubr.bf16.mxu0 0
      %452 = vmatmul.mubr.bf16.gmra.mrb[0].mxu0 %v327
      %v453 = vpop.f32.mrb[0].mxu0
      %v454 = vadd.f32 %v289, %v453
      %v455 = vpop.f32.mrb[0].mxu0
      %v456 = vpop.f32.mrb[0].mxu0
      %v457 = vadd.f32 %v289, %v456
      %v458 = vpop.f32.mrb[0].mxu0
      %459 = vmatprep.mubr.bf16.mxu0 0
      %460 = vmatmul.mubr.bf16.gmra.mrb[0].mxu0 %v328
      %v461 = vpop.f32.mrb[0].mxu0
      %v462 = vadd.f32 %v289, %v461
      %v463 = vpop.f32.mrb[0].mxu0
      %v464 = vpop.f32.mrb[0].mxu0
      %v465 = vadd.f32 %v289, %v464
      %v466 = vpop.f32.mrb[0].mxu0
      %467 = vmatprep.mubr.bf16.mxu0 0
      %468 = vmatmul.mubr.bf16.gmra.mrb[0].mxu0 %v329
      %v469 = vpop.f32.mrb[0].mxu0
      %v470 = vadd.f32 %v289, %v469
      %v471 = vpop.f32.mrb[0].mxu0
      %v472 = vpop.f32.mrb[0].mxu0
      %v473 = vadd.f32 %v289, %v472
      %v474 = vpop.f32.mrb[0].mxu0
      %475 = vmatprep.mubr.bf16.mxu0 0
      %476 = vmatmul.mubr.bf16.gmra.mrb[0].mxu0 %v330
      %v477 = vpop.f32.mrb[0].mxu0
      %v478 = vadd.f32 %v289, %v477
      %v479 = vpop.f32.mrb[0].mxu0
      %v480 = vpop.f32.mrb[0].mxu0
      %v481 = vadd.f32 %v289, %v480
      %v482 = vpop.f32.mrb[0].mxu0
      %483 = vdwg.mxu0
      %v484 = vpack.c.bf16 %v425, %v422
      %v485 = vpack.c.bf16 %v433, %v430
      %v486 = vpack.c.bf16 %v441, %v438
      %v487 = vpack.c.bf16 %v449, %v446
      %v488 = vpack.c.bf16 %v457, %v454
      %v489 = vpack.c.bf16 %v465, %v462
      %v490 = vpack.c.bf16 %v473, %v470
      %v491 = vpack.c.bf16 %v481, %v478
      %v500 = vunpack.c.l.b16 %v484
      %v501 = vunpack.c.h.b16 %v484
      %v502 = vunpack.c.l.b16 %v485
      %v503 = vunpack.c.h.b16 %v485
      %v504 = vunpack.c.l.b16 %v486
      %v505 = vunpack.c.h.b16 %v486
      %v506 = vunpack.c.l.b16 %v487
      %v507 = vunpack.c.h.b16 %v487
      %v508 = vunpack.c.l.b16 %v488
      %v509 = vunpack.c.h.b16 %v488
      %v510 = vunpack.c.l.b16 %v489
      %v511 = vunpack.c.h.b16 %v489
      %v512 = vunpack.c.l.b16 %v490
      %v513 = vunpack.c.h.b16 %v490
      %v514 = vunpack.c.l.b16 %v491
      %v515 = vunpack.c.h.b16 %v491
      %v516 = vpack.c.b16 %v500, %v500
      %v517 = vpack.c.b16 %v501, %v501
      %v518 = vpack.c.b16 %v502, %v502
      %v519 = vpack.c.b16 %v503, %v503
      %v520 = vpack.c.b16 %v504, %v504
      %v521 = vpack.c.b16 %v505, %v505
      %v522 = vpack.c.b16 %v506, %v506
      %v523 = vpack.c.b16 %v507, %v507
      %v524 = vpack.c.b16 %v508, %v508
      %v525 = vpack.c.b16 %v509, %v509
      %v526 = vpack.c.b16 %v510, %v510
      %v527 = vpack.c.b16 %v511, %v511
      %v528 = vpack.c.b16 %v512, %v512
      %v529 = vpack.c.b16 %v513, %v513
      %v530 = vpack.c.b16 %v514, %v514
      %v531 = vpack.c.b16 %v515, %v515
      %548 = vst [vmem:[%s241] sm:$0xf] %v516
      %549 = vst [vmem:[%s241 + $0x4] sm:$0xf] %v517
      %550 = vst [vmem:[%s241 + $0x8] sm:$0xf] %v518
      %551 = vst [vmem:[%s241 + $0xc] sm:$0xf] %v519
      %552 = vst [vmem:[%s241 + $0x10] sm:$0xf] %v520
      %553 = vst [vmem:[%s241 + $0x14] sm:$0xf] %v521
      %554 = vst [vmem:[%s241 + $0x18] sm:$0xf] %v522
      %555 = vst [vmem:[%s241 + $0x1c] sm:$0xf] %v523
      %556 = vst [vmem:[%s241 + $0x20] sm:$0xf] %v524
      %557 = vst [vmem:[%s241 + $0x24] sm:$0xf] %v525
      %558 = vst [vmem:[%s241 + $0x28] sm:$0xf] %v526
      %559 = vst [vmem:[%s241 + $0x2c] sm:$0xf] %v527
      %560 = vst [vmem:[%s241 + $0x30] sm:$0xf] %v528
      %561 = vst [vmem:[%s241 + $0x34] sm:$0xf] %v529
      %562 = vst [vmem:[%s241 + $0x38] sm:$0xf] %v530
      %563 = vst [vmem:[%s241 + $0x3c] sm:$0xf] %v531
      %v564 = vld [vmem:[%s245] sm:$0x1]
      %v565 = vadd.f32 %v422, %v425
      %v566 = vadd.f32 %v565, %v430
      %v567 = vadd.f32 %v566, %v433
      %v568 = vadd.f32 %v567, %v438
      %v569 = vadd.f32 %v568, %v441
      %v570 = vadd.f32 %v569, %v446
      %v571 = vadd.f32 %v570, %v449
      %v572 = vadd.f32 %v571, %v454
      %v573 = vadd.f32 %v572, %v457
      %v574 = vadd.f32 %v573, %v462
      %v575 = vadd.f32 %v574, %v465
      %v576 = vadd.f32 %v575, %v470
      %v577 = vadd.f32 %v576, %v473
      %v578 = vadd.f32 %v577, %v478
      %v579 = vadd.f32 %v578, %v481
      %v580 = vrot.slane %v579, 4
      %v581 = vadd.f32 %v579, %v580
      %v582 = vrot.slane %v581, 2
      %v583 = vadd.f32 %v581, %v582
      %v584 = vrot.slane %v583, 1
      %v585 = vadd.f32 %v583, %v584
      %v586 = vadd.f32 %v564, %v585
      %587 = vst [vmem:[%s245] sm:$0x1] %v586
      %s588 = smul.u32 16, %s21
      %p589 = scmp.lt.s32.totalorder %s20, 1
      %s590 = scalar_select %p589, %s20, 1
      %p591 = scmp.lt.s32.totalorder %s588, 31
      %s592 = scalar_select %p591, %s588, 31
      %s593 = smul.addr %s590, 32
      %s594 = sadd.s32 %s592, %s593
      %s595 = smul.addr %s594, 4
      %s596 = scalar_lea.vmem %s3, %s595
      %p597 = scmp.lt.s32.totalorder %s20, 1
      %s598 = scalar_select %p597, %s20, 1
      %s599 = scalar_lea.vmem %s4, %s598
      // Predicated region
      $region37: #{_lambda_.4} parent=31 // pred_check
        %p600 = pneg %p118
      $region38: #{_lambda_.4} parent=31 // pred_check_branch
        %602 = sbr.rel (%p600) target = $region40
      $region39: #{_lambda_.4} parent=31 // pred_region
        %s603 = smul.u32 16, %s21
      $region40: #{_lambda_.4} parent=31 // pred_fallthru
        _
      // Predicated region
      $region41: #{_lambda_.4} parent=31 // pred_check
        %p604 = pneg %p144
      $region42: #{_lambda_.4} parent=31 // pred_check_branch
        %606 = sbr.rel (%p604) target = $region44
      $region43: #{_lambda_.4} parent=31 // pred_region
        _
      $region44: #{_lambda_.4} parent=31 // pred_fallthru
        _
    $region32: #{_lambda_.4} parent=5 // pred_fallthru
      _
    %p607 = scmp.le.s32.totalorder 2, %s11
    // Predicated region
    $region45: #{_lambda_.4} parent=5 // pred_check
      %p608 = pneg %p607
    $region46: #{_lambda_.4} parent=5 // pred_check_branch
      %610 = sbr.rel (%p608) target = $region48
    $region47: #{_lambda_.4} parent=5 // pred_region
      %s611 = ssub.s32 %s11, 2
      // Predicated region
      $region49: #{_lambda_.4} parent=47 // pred_check
        %p612 = pneg %p124
      $region50: #{_lambda_.4} parent=47 // pred_check_branch
        %614 = sbr.rel (%p612) target = $region52
      $region51: #{_lambda_.4} parent=47 // pred_region
        %s615 = smul.u32 16, %s23
        %p616 = scmp.lt.s32.totalorder %s22, 1
        %s617 = scalar_select %p616, %s22, 1
        %p618 = scmp.lt.s32.totalorder %s615, 31
        %s619 = scalar_select %p618, %s615, 31
        %s620 = smul.addr %s617, 32
        %s621 = sadd.s32 %s619, %s620
        %s622 = smul.addr %s621, 4
        %s623 = scalar_lea.vmem %s3, %s622
      $region52: #{_lambda_.4} parent=47 // pred_fallthru
        _
      // Predicated region
      $region53: #{_lambda_.4} parent=47 // pred_check
        %p624 = pneg %p150
      $region54: #{_lambda_.4} parent=47 // pred_check_branch
        %626 = sbr.rel (%p624) target = $region56
      $region55: #{_lambda_.4} parent=47 // pred_region
        %p627 = scmp.lt.s32.totalorder %s22, 1
        %s628 = scalar_select %p627, %s22, 1
        %s629 = scalar_lea.vmem %s4, %s628
      $region56: #{_lambda_.4} parent=47 // pred_fallthru
        _
    $region48: #{_lambda_.4} parent=5 // pred_fallthru
      _
  $region6: #{_lambda_.4} parent=0 // loop_footer
    %s15 = sadd.s32 1, %s11
  $region7: #{_lambda_.4} parent=0 // loop_footer_branch
    %10 = sbr.rel target = $region3
  $region8: #{_lambda_.4} parent=0 // loop_exit
    _

// kernel: _lambda_.5
$region0: #{_lambda_.5}
  #allocation0 [shape = 'u32[]', space=smem, size = 0x4, offset = 0x4, fixed_abs, tag = 'smem constant byte address 0x4 - core index']
  #allocation1 [shape = 'u32[144,128]{1,0:T(1,128)}', space=vmem, size = 0x12000, scoped, tag = 'internal scratch']
  %s0 = inlined_call_operand.vmem [shape: bf16[2,256,128], index: 0, kind: input, shape index: {}]
  %s1 = inlined_call_operand.vmem [shape: bf16[2,256,128], index: 1, kind: input, shape index: {}]
  %s2 = inlined_call_operand.vmem [shape: f32[2,1,128], index: 2, kind: input, shape index: {}]
  %s3 = inlined_call_operand.vmem [shape: bf16[2,256,128], index: 3, kind: output, shape index: {}]
  %s4 = sld [smem:[#allocation0]]
  $region45: #{_lambda_.5} parent=0
    _
  %s6 = ssub.s32 1, %s4
  %s7 = scalar_select 0, %s6, %s4
  loop: start=0, step=1, limit=6
  $region2: #{_lambda_.5} parent=0 // loop_pre_header
    _
  $region3: #{_lambda_.5} parent=0 // loop_header
    %s9 = sphi 0, %s13
    %p10 = scmp.ge.s32.totalorder %s9, 6
    %s16 = sphi 0, %s28
    %s17 = sphi 0, %s24
    %s18 = sphi 0, %s16
    %s19 = sphi 0, %s17
    %s20 = sphi 0, %s18
    %s21 = sphi 0, %s19
    %s33 = sphi 0, %s35
    %s36 = sphi 0, %s33
    %s37 = sphi 0, %s36
    %s53 = sphi 0, %s37
    %s61 = sphi 0, %s63
    %s64 = sphi 0, %s61
    %s65 = sphi 0, %s64
    %s81 = sphi 0, %s65
    %s87 = sphi 0, %s89
    %s90 = sphi 0, %s87
    %s91 = sphi 0, %s90
    %s107 = sphi 0, %s91
    %s115 = sphi 0, %s117
    %s118 = sphi 0, %s115
    %s119 = sphi 0, %s118
    %s135 = sphi 0, %s119
  $region4: #{_lambda_.5} parent=0 // loop_header_branch
    %12 = sbr.rel (%p10) target = $region8
  $region5: #{_lambda_.5} parent=0 // loop_body
    %s14 = ssub.s32 %s9, 1
    %s15 = ssub.s32 %s9, 2
    %s22 = sadd.s32 1, %s17
    %p23 = scmp.ge.s32.totalorder %s22, 2
    %s24 = scalar_select %p23, 0, %s22
    %s25 = sadd.s32 1, %s16
    %s26 = scalar_select %p23, %s25, %s16
    %p27 = scmp.ge.s32.totalorder %s26, 2
    %s28 = scalar_select %p27, 0, %s26
    %s29 = ssub.s32 %s16, %s28
    %s30 = ssub.s32 %s17, %s24
    %s31 = sor.u32 %s29, %s30
    %p32 = scmp.eq.s32.totalorder %s31, 0
    %s34 = sadd.s32 %s33, 1
    %s35 = scalar_select %p32, %s33, %s34
    %p38 = pneg %p32
    %p39 = scmp.eq.s32.totalorder %s9, 3
    %p40 = por %p38, %p39
    %p41 = scmp.ne.s32.totalorder %s33, %s36
    %p42 = scmp.eq.s32.totalorder %s9, 0
    %p43 = por %p41, %p42
    %p44 = scmp.ne.s32.totalorder %s33, %s36
    %p45 = scmp.eq.s32.totalorder %s14, 3
    %p46 = por %p44, %p45
    %p47 = scmp.ne.s32.totalorder %s36, %s37
    %p48 = scmp.eq.s32.totalorder %s14, 0
    %p49 = por %p47, %p48
    %p50 = scmp.ne.s32.totalorder %s36, %s37
    %p51 = scmp.eq.s32.totalorder %s15, 3
    %p52 = por %p50, %p51
    %p54 = scmp.ne.s32.totalorder %s37, %s53
    %p55 = scmp.eq.s32.totalorder %s15, 0
    %p56 = por %p54, %p55
    %s57 = ssub.s32 %s16, %s28
    %s58 = ssub.s32 %s17, %s24
    %s59 = sor.u32 %s57, %s58
    %p60 = scmp.eq.s32.totalorder %s59, 0
    %s62 = sadd.s32 %s61, 1
    %s63 = scalar_select %p60, %s61, %s62
    %p66 = pneg %p60
    %p67 = scmp.eq.s32.totalorder %s9, 3
    %p68 = por %p66, %p67
    %p69 = scmp.ne.s32.totalorder %s61, %s64
    %p70 = scmp.eq.s32.totalorder %s9, 0
    %p71 = por %p69, %p70
    %p72 = scmp.ne.s32.totalorder %s61, %s64
    %p73 = scmp.eq.s32.totalorder %s14, 3
    %p74 = por %p72, %p73
    %p75 = scmp.ne.s32.totalorder %s64, %s65
    %p76 = scmp.eq.s32.totalorder %s14, 0
    %p77 = por %p75, %p76
    %p78 = scmp.ne.s32.totalorder %s64, %s65
    %p79 = scmp.eq.s32.totalorder %s15, 3
    %p80 = por %p78, %p79
    %p82 = scmp.ne.s32.totalorder %s65, %s81
    %p83 = scmp.eq.s32.totalorder %s15, 0
    %p84 = por %p82, %p83
    %s85 = ssub.s32 %s16, %s28
    %p86 = scmp.eq.s32.totalorder %s85, 0
    %s88 = sadd.s32 %s87, 1
    %s89 = scalar_select %p86, %s87, %s88
    %p92 = pneg %p86
    %p93 = scmp.eq.s32.totalorder %s9, 3
    %p94 = por %p92, %p93
    %p95 = scmp.ne.s32.totalorder %s87, %s90
    %p96 = scmp.eq.s32.totalorder %s9, 0
    %p97 = por %p95, %p96
    %p98 = scmp.ne.s32.totalorder %s87, %s90
    %p99 = scmp.eq.s32.totalorder %s14, 3
    %p100 = por %p98, %p99
    %p101 = scmp.ne.s32.totalorder %s90, %s91
    %p102 = scmp.eq.s32.totalorder %s14, 0
    %p103 = por %p101, %p102
    %p104 = scmp.ne.s32.totalorder %s90, %s91
    %p105 = scmp.eq.s32.totalorder %s15, 3
    %p106 = por %p104, %p105
    %p108 = scmp.ne.s32.totalorder %s91, %s107
    %p109 = scmp.eq.s32.totalorder %s15, 0
    %p110 = por %p108, %p109
    %s111 = ssub.s32 %s16, %s28
    %s112 = ssub.s32 %s17, %s24
    %s113 = sor.u32 %s111, %s112
    %p114 = scmp.eq.s32.totalorder %s113, 0
    %s116 = sadd.s32 %s115, 1
    %s117 = scalar_select %p114, %s115, %s116
    %p120 = pneg %p114
    %p121 = scmp.eq.s32.totalorder %s9, 3
    %p122 = por %p120, %p121
    %p123 = scmp.ne.s32.totalorder %s115, %s118
    %p124 = scmp.eq.s32.totalorder %s9, 0
    %p125 = por %p123, %p124
    %p126 = scmp.ne.s32.totalorder %s115, %s118
    %p127 = scmp.eq.s32.totalorder %s14, 3
    %p128 = por %p126, %p127
    %p129 = scmp.ne.s32.totalorder %s118, %s119
    %p130 = scmp.eq.s32.totalorder %s14, 0
    %p131 = por %p129, %p130
    %p132 = scmp.ne.s32.totalorder %s118, %s119
    %p133 = scmp.eq.s32.totalorder %s15, 3
    %p134 = por %p132, %p133
    %p136 = scmp.ne.s32.totalorder %s119, %s135
    %p137 = scmp.eq.s32.totalorder %s15, 0
    %p138 = por %p136, %p137
    %p139 = scmp.le.s32.totalorder 1, %s9
    %p140 = scmp.lt.s32.totalorder %s9, 5
    %p141 = pnand %p139, %p140
    %p142 = pneg %p141
    // Predicated region
    $region9: #{_lambda_.5} parent=5 // pred_check
      _
    $region10: #{_lambda_.5} parent=5 // pred_check_branch
      %144 = sbr.rel (%p141) target = $region12
    $region11: #{_lambda_.5} parent=5 // pred_region
      %s145 = ssub.s32 %s9, 1
    $region12: #{_lambda_.5} parent=5 // pred_fallthru
      _
    %p146 = scmp.lt.s32.totalorder %s9, 4
    // Predicated region
    $region13: #{_lambda_.5} parent=5 // pred_check
      %p147 = pneg %p146
    $region14: #{_lambda_.5} parent=5 // pred_check_branch
      %149 = sbr.rel (%p147) target = $region16
    $region15: #{_lambda_.5} parent=5 // pred_region
      // Predicated region
      $region17: #{_lambda_.5} parent=15 // pred_check
        %p150 = pneg %p43
      $region18: #{_lambda_.5} parent=15 // pred_check_branch
        %152 = sbr.rel (%p150) target = $region20
      $region19: #{_lambda_.5} parent=15 // pred_region
        %s153 = smul.u32 16, %s17
        %p154 = scmp.lt.s32.totalorder %s16, 1
        %s155 = scalar_select %p154, %s16, 1
        %p156 = scmp.lt.s32.totalorder %s153, 31
        %s157 = scalar_select %p156, %s153, 31
        %s158 = smul.addr %s155, 32
        %s159 = sadd.s32 %s157, %s158
        %s160 = smul.addr %s159, 4
        %s161 = scalar_lea.vmem %s0, %s160
        %s162 = smul.u32 16, %s17
      $region20: #{_lambda_.5} parent=15 // pred_fallthru
        _
      // Predicated region
      $region21: #{_lambda_.5} parent=15 // pred_check
        %p163 = pneg %p71
      $region22: #{_lambda_.5} parent=15 // pred_check_branch
        %165 = sbr.rel (%p163) target = $region24
      $region23: #{_lambda_.5} parent=15 // pred_region
        %s166 = smul.u32 16, %s17
        %p167 = scmp.lt.s32.totalorder %s16, 1
        %s168 = scalar_select %p167, %s16, 1
        %p169 = scmp.lt.s32.totalorder %s166, 31
        %s170 = scalar_select %p169, %s166, 31
        %s171 = smul.addr %s168, 32
        %s172 = sadd.s32 %s170, %s171
        %s173 = smul.addr %s172, 4
        %s174 = scalar_lea.vmem %s1, %s173
        %s175 = smul.u32 16, %s17
      $region24: #{_lambda_.5} parent=15 // pred_fallthru
        _
      // Predicated region
      $region25: #{_lambda_.5} parent=15 // pred_check
        %p176 = pneg %p97
      $region26: #{_lambda_.5} parent=15 // pred_check_branch
        %178 = sbr.rel (%p176) target = $region28
      $region27: #{_lambda_.5} parent=15 // pred_region
        %p179 = scmp.lt.s32.totalorder %s16, 1
        %s180 = scalar_select %p179, %s16, 1
        %s181 = scalar_lea.vmem %s2, %s180
      $region28: #{_lambda_.5} parent=15 // pred_fallthru
        _
    $region16: #{_lambda_.5} parent=5 // pred_fallthru
      _
    %p182 = scmp.le.s32.totalorder 1, %s9
    %p183 = scmp.lt.s32.totalorder %s9, 5
    %p184 = pnand %p182, %p183
    %p185 = pneg %p184
    // Predicated region
    $region29: #{_lambda_.5} parent=5 // pred_check
      _
    $region30: #{_lambda_.5} parent=5 // pred_check_branch
      %187 = sbr.rel (%p184) target = $region32
    $region31: #{_lambda_.5} parent=5 // pred_region
      %s188 = ssub.s32 %s9, 1
      %s189 = smul.u32 16, %s19
      %p190 = scmp.lt.s32.totalorder %s18, 1
      %s191 = scalar_select %p190, %s18, 1
      %p192 = scmp.lt.s32.totalorder %s189, 31
      %s193 = scalar_select %p192, %s189, 31
      %s194 = smul.addr %s191, 32
      %s195 = sadd.s32 %s193, %s194
      %s196 = smul.addr %s195, 4
      %s197 = scalar_lea.vmem %s0, %s196
      %p198 = pneg %p49
      %p199 = pneg %p46
      %s200 = smul.u32 16, %s19
      %p201 = scmp.lt.s32.totalorder %s18, 1
      %s202 = scalar_select %p201, %s18, 1
      %p203 = scmp.lt.s32.totalorder %s200, 31
      %s204 = scalar_select %p203, %s200, 31
      %s205 = smul.addr %s202, 32
      %s206 = sadd.s32 %s204, %s205
      %s207 = smul.addr %s206, 4
      %s208 = scalar_lea.vmem %s1, %s207
      %p209 = pneg %p77
      %p210 = pneg %p74
      %p211 = scmp.lt.s32.totalorder %s18, 1
      %s212 = scalar_select %p211, %s18, 1
      %s213 = scalar_lea.vmem %s2, %s212
      %p214 = pneg %p103
      %p215 = pneg %p100
      %p216 = pneg %p131
      %p217 = pneg %p128
      %s218 = smul.u32 16, %s19
      %p219 = scmp.lt.s32.totalorder %s18, 1
      %s220 = scalar_select %p219, %s18, 1
      %p221 = scmp.lt.s32.totalorder %s218, 31
      %s222 = scalar_select %p221, %s218, 31
      %s223 = smul.addr %s220, 32
      %s224 = sadd.s32 %s222, %s223
      %s225 = smul.addr %s224, 4
      %s226 = scalar_lea.vmem %s3, %s225
      %s227 = smul.u32 16, %s19
      %p228 = scmp.lt.s32.totalorder %s18, 1
      %s229 = scalar_select %p228, %s18, 1
      %p230 = scmp.lt.s32.totalorder %s227, 31
      %s231 = scalar_select %p230, %s227, 31
      %s232 = smul.addr %s229, 32
      %s233 = sadd.s32 %s231, %s232
      %s234 = smul.addr %s233, 4
      %s235 = scalar_lea.vmem %s0, %s234
      %s236 = smul.u32 16, %s19
      %s237 = smul.u32 16, %s19
      %p238 = scmp.lt.s32.totalorder %s18, 1
      %s239 = scalar_select %p238, %s18, 1
      %p240 = scmp.lt.s32.totalorder %s237, 31
      %s241 = scalar_select %p240, %s237, 31
      %s242 = smul.addr %s239, 32
      %s243 = sadd.s32 %s241, %s242
      %s244 = smul.addr %s243, 4
      %s245 = scalar_lea.vmem %s1, %s244
      %s246 = smul.u32 16, %s19
      %p247 = scmp.lt.s32.totalorder %s18, 1
      %s248 = scalar_select %p247, %s18, 1
      %s249 = scalar_lea.vmem %s2, %s248
      %s250 = smul.u32 16, %s19
      %p251 = scmp.lt.s32.totalorder %s18, 1
      %s252 = scalar_select %p251, %s18, 1
      %p253 = scmp.lt.s32.totalorder %s250, 31
      %s254 = scalar_select %p253, %s250, 31
      %s255 = smul.addr %s252, 32
      %s256 = sadd.s32 %s254, %s255
      %s257 = smul.addr %s256, 4
      %s258 = scalar_lea.vmem %s3, %s257
      %s259 = smul.u32 16, %s19
      %v260 = vld [vmem:[%s235] sm:$0xf]
      %v261 = vld [vmem:[%s235 + $0x4] sm:$0xf]
      %v262 = vld [vmem:[%s235 + $0x8] sm:$0xf]
      %v263 = vld [vmem:[%s235 + $0xc] sm:$0xf]
      %v264 = vld [vmem:[%s235 + $0x10] sm:$0xf]
      %v265 = vld [vmem:[%s235 + $0x14] sm:$0xf]
      %v266 = vld [vmem:[%s235 + $0x18] sm:$0xf]
      %v267 = vld [vmem:[%s235 + $0x1c] sm:$0xf]
      %v268 = vld [vmem:[%s235 + $0x20] sm:$0xf]
      %v269 = vld [vmem:[%s235 + $0x24] sm:$0xf]
      %v270 = vld [vmem:[%s235 + $0x28] sm:$0xf]
      %v271 = vld [vmem:[%s235 + $0x2c] sm:$0xf]
      %v272 = vld [vmem:[%s235 + $0x30] sm:$0xf]
      %v273 = vld [vmem:[%s235 + $0x34] sm:$0xf]
      %v274 = vld [vmem:[%s235 + $0x38] sm:$0xf]
      %v275 = vld [vmem:[%s235 + $0x3c] sm:$0xf]
      %v276 = vunpack.c.l.bf16 %v260
      %v277 = vunpack.c.l.bf16 %v261
      %v278 = vunpack.c.l.bf16 %v262
      %v279 = vunpack.c.l.bf16 %v263
      %v280 = vunpack.c.l.bf16 %v264
      %v281 = vunpack.c.l.bf16 %v265
      %v282 = vunpack.c.l.bf16 %v266
      %v283 = vunpack.c.l.bf16 %v267
      %v284 = vunpack.c.l.bf16 %v268
      %v285 = vunpack.c.l.bf16 %v269
      %v286 = vunpack.c.l.bf16 %v270
      %v287 = vunpack.c.l.bf16 %v271
      %v288 = vunpack.c.l.bf16 %v272
      %v289 = vunpack.c.l.bf16 %v273
      %v290 = vunpack.c.l.bf16 %v274
      %v291 = vunpack.c.l.bf16 %v275
      %v292 = vld [vmem:[%s249] sm:$0x1]
      %v294 = vlaneseq
      %v295 = vshrl.u32 %v294, 7
      %v296 = vsub.s32 0, %v295
      %v297 = vrot.slane %v292, %v296
      %v299 = vmul.f32 %v276, %v297
      %v300 = vmul.f32 %v277, %v297
      %v301 = vmul.f32 %v278, %v297
      %v302 = vmul.f32 %v279, %v297
      %v303 = vmul.f32 %v280, %v297
      %v304 = vmul.f32 %v281, %v297
      %v305 = vmul.f32 %v282, %v297
      %v306 = vmul.f32 %v283, %v297
      %v307 = vmul.f32 %v284, %v297
      %v308 = vmul.f32 %v285, %v297
      %v309 = vmul.f32 %v286, %v297
      %v310 = vmul.f32 %v287, %v297
      %v311 = vmul.f32 %v288, %v297
      %v312 = vmul.f32 %v289, %v297
      %v313 = vmul.f32 %v290, %v297
      %v314 = vmul.f32 %v291, %v297
      %v315 = vld [vmem:[%s245] sm:$0xf]
      %v316 = vld [vmem:[%s245 + $0x4] sm:$0xf]
      %v317 = vld [vmem:[%s245 + $0x8] sm:$0xf]
      %v318 = vld [vmem:[%s245 + $0xc] sm:$0xf]
      %v319 = vld [vmem:[%s245 + $0x10] sm:$0xf]
      %v320 = vld [vmem:[%s245 + $0x14] sm:$0xf]
      %v321 = vld [vmem:[%s245 + $0x18] sm:$0xf]
      %v322 = vld [vmem:[%s245 + $0x1c] sm:$0xf]
      %v323 = vld [vmem:[%s245 + $0x20] sm:$0xf]
      %v324 = vld [vmem:[%s245 + $0x24] sm:$0xf]
      %v325 = vld [vmem:[%s245 + $0x28] sm:$0xf]
      %v326 = vld [vmem:[%s245 + $0x2c] sm:$0xf]
      %v327 = vld [vmem:[%s245 + $0x30] sm:$0xf]
      %v328 = vld [vmem:[%s245 + $0x34] sm:$0xf]
      %v329 = vld [vmem:[%s245 + $0x38] sm:$0xf]
      %v330 = vld [vmem:[%s245 + $0x3c] sm:$0xf]
      %v331 = vunpack.c.l.bf16 %v315
      %v332 = vunpack.c.l.bf16 %v316
      %v333 = vunpack.c.l.bf16 %v317
      %v334 = vunpack.c.l.bf16 %v318
      %v335 = vunpack.c.l.bf16 %v319
      %v336 = vunpack.c.l.bf16 %v320
      %v337 = vunpack.c.l.bf16 %v321
      %v338 = vunpack.c.l.bf16 %v322
      %v339 = vunpack.c.l.bf16 %v323
      %v340 = vunpack.c.l.bf16 %v324
      %v341 = vunpack.c.l.bf16 %v325
      %v342 = vunpack.c.l.bf16 %v326
      %v343 = vunpack.c.l.bf16 %v327
      %v344 = vunpack.c.l.bf16 %v328
      %v345 = vunpack.c.l.bf16 %v329
      %v346 = vunpack.c.l.bf16 %v330
      %v347 = vadd.f32 %v299, %v331
      %v348 = vadd.f32 %v300, %v332
      %v349 = vadd.f32 %v301, %v333
      %v350 = vadd.f32 %v302, %v334
      %v351 = vadd.f32 %v303, %v335
      %v352 = vadd.f32 %v304, %v336
      %v353 = vadd.f32 %v305, %v337
      %v354 = vadd.f32 %v306, %v338
      %v355 = vadd.f32 %v307, %v339
      %v356 = vadd.f32 %v308, %v340
      %v357 = vadd.f32 %v309, %v341
      %v358 = vadd.f32 %v310, %v342
      %v359 = vadd.f32 %v311, %v343
      %v360 = vadd.f32 %v312, %v344
      %v361 = vadd.f32 %v313, %v345
      %v362 = vadd.f32 %v314, %v346
      %v363 = vmax.f32 %v347, 0.0
      %v364 = vmax.f32 %v348, 0.0
      %v365 = vmax.f32 %v349, 0.0
      %v366 = vmax.f32 %v350, 0.0
      %v367 = vmax.f32 %v351, 0.0
      %v368 = vmax.f32 %v352, 0.0
      %v369 = vmax.f32 %v353, 0.0
      %v370 = vmax.f32 %v354, 0.0
      %v371 = vmax.f32 %v355, 0.0
      %v372 = vmax.f32 %v356, 0.0
      %v373 = vmax.f32 %v357, 0.0
      %v374 = vmax.f32 %v358, 0.0
      %v375 = vmax.f32 %v359, 0.0
      %v376 = vmax.f32 %v360, 0.0
      %v377 = vmax.f32 %v361, 0.0
      %v378 = vmax.f32 %v362, 0.0
      %v379 = vpack.c.bf16 %v364, %v363
      %v380 = vpack.c.bf16 %v366, %v365
      %v381 = vpack.c.bf16 %v368, %v367
      %v382 = vpack.c.bf16 %v370, %v369
      %v383 = vpack.c.bf16 %v372, %v371
      %v384 = vpack.c.bf16 %v374, %v373
      %v385 = vpack.c.bf16 %v376, %v375
      %v386 = vpack.c.bf16 %v378, %v377
      %v395 = vunpack.c.l.b16 %v379
      %v396 = vunpack.c.h.b16 %v379
      %v397 = vunpack.c.l.b16 %v380
      %v398 = vunpack.c.h.b16 %v380
      %v399 = vunpack.c.l.b16 %v381
      %v400 = vunpack.c.h.b16 %v381
      %v401 = vunpack.c.l.b16 %v382
      %v402 = vunpack.c.h.b16 %v382
      %v403 = vunpack.c.l.b16 %v383
      %v404 = vunpack.c.h.b16 %v383
      %v405 = vunpack.c.l.b16 %v384
      %v406 = vunpack.c.h.b16 %v384
      %v407 = vunpack.c.l.b16 %v385
      %v408 = vunpack.c.h.b16 %v385
      %v409 = vunpack.c.l.b16 %v386
      %v410 = vunpack.c.h.b16 %v386
      %v411 = vpack.c.b16 %v395, %v395
      %v412 = vpack.c.b16 %v396, %v396
      %v413 = vpack.c.b16 %v397, %v397
      %v414 = vpack.c.b16 %v398, %v398
      %v415 = vpack.c.b16 %v399, %v399
      %v416 = vpack.c.b16 %v400, %v400
      %v417 = vpack.c.b16 %v401, %v401
      %v418 = vpack.c.b16 %v402, %v402
      %v419 = vpack.c.b16 %v403, %v403
      %v420 = vpack.c.b16 %v404, %v404
      %v421 = vpack.c.b16 %v405, %v405
      %v422 = vpack.c.b16 %v406, %v406
      %v423 = vpack.c.b16 %v407, %v407
      %v424 = vpack.c.b16 %v408, %v408
      %v425 = vpack.c.b16 %v409, %v409
      %v426 = vpack.c.b16 %v410, %v410
      %443 = vst [vmem:[%s258] sm:$0xf] %v411
      %444 = vst [vmem:[%s258 + $0x4] sm:$0xf] %v412
      %445 = vst [vmem:[%s258 + $0x8] sm:$0xf] %v413
      %446 = vst [vmem:[%s258 + $0xc] sm:$0xf] %v414
      %447 = vst [vmem:[%s258 + $0x10] sm:$0xf] %v415
      %448 = vst [vmem:[%s258 + $0x14] sm:$0xf] %v416
      %449 = vst [vmem:[%s258 + $0x18] sm:$0xf] %v417
      %450 = vst [vmem:[%s258 + $0x1c] sm:$0xf] %v418
      %451 = vst [vmem:[%s258 + $0x20] sm:$0xf] %v419
      %452 = vst [vmem:[%s258 + $0x24] sm:$0xf] %v420
      %453 = vst [vmem:[%s258 + $0x28] sm:$0xf] %v421
      %454 = vst [vmem:[%s258 + $0x2c] sm:$0xf] %v422
      %455 = vst [vmem:[%s258 + $0x30] sm:$0xf] %v423
      %456 = vst [vmem:[%s258 + $0x34] sm:$0xf] %v424
      %457 = vst [vmem:[%s258 + $0x38] sm:$0xf] %v425
      %458 = vst [vmem:[%s258 + $0x3c] sm:$0xf] %v426
      %s459 = smul.u32 16, %s19
      %p460 = scmp.lt.s32.totalorder %s18, 1
      %s461 = scalar_select %p460, %s18, 1
      %p462 = scmp.lt.s32.totalorder %s459, 31
      %s463 = scalar_select %p462, %s459, 31
      %s464 = smul.addr %s461, 32
      %s465 = sadd.s32 %s463, %s464
      %s466 = smul.addr %s465, 4
      %s467 = scalar_lea.vmem %s3, %s466
      // Predicated region
      $region33: #{_lambda_.5} parent=31 // pred_check
        %p468 = pneg %p128
      $region34: #{_lambda_.5} parent=31 // pred_check_branch
        %470 = sbr.rel (%p468) target = $region36
      $region35: #{_lambda_.5} parent=31 // pred_region
        %s471 = smul.u32 16, %s19
      $region36: #{_lambda_.5} parent=31 // pred_fallthru
        _
    $region32: #{_lambda_.5} parent=5 // pred_fallthru
      _
    %p472 = scmp.le.s32.totalorder 2, %s9
    // Predicated region
    $region37: #{_lambda_.5} parent=5 // pred_check
      %p473 = pneg %p472
    $region38: #{_lambda_.5} parent=5 // pred_check_branch
      %475 = sbr.rel (%p473) target = $region40
    $region39: #{_lambda_.5} parent=5 // pred_region
      %s476 = ssub.s32 %s9, 2
      // Predicated region
      $region41: #{_lambda_.5} parent=39 // pred_check
        %p477 = pneg %p134
      $region42: #{_lambda_.5} parent=39 // pred_check_branch
        %479 = sbr.rel (%p477) target = $region44
      $region43: #{_lambda_.5} parent=39 // pred_region
        %s480 = smul.u32 16, %s21
        %p481 = scmp.lt.s32.totalorder %s20, 1
        %s482 = scalar_select %p481, %s20, 1
        %p483 = scmp.lt.s32.totalorder %s480, 31
        %s484 = scalar_select %p483, %s480, 31
        %s485 = smul.addr %s482, 32
        %s486 = sadd.s32 %s484, %s485
        %s487 = smul.addr %s486, 4
        %s488 = scalar_lea.vmem %s3, %s487
      $region44: #{_lambda_.5} parent=39 // pred_fallthru
        _
    $region40: #{_lambda_.5} parent=5 // pred_fallthru
      _
  $region6: #{_lambda_.5} parent=0 // loop_footer
    %s13 = sadd.s32 1, %s9
  $region7: #{_lambda_.5} parent=0 // loop_footer_branch
    %8 = sbr.rel target = $region3
  $region8: #{_lambda_.5} parent=0 // loop_exit
    _

// kernel: _lambda_.3
$region0: #{_lambda_.3}
  #allocation0 [shape = 'u32[]', space=smem, size = 0x4, offset = 0x4, fixed_abs, tag = 'smem constant byte address 0x4 - core index']
  #allocation1 [shape = 'u32[144,128]{1,0:T(1,128)}', space=vmem, size = 0x12000, scoped, tag = 'internal scratch']
  #allocation2 [shape = 'bf16[6,16,128]{2,1,0:T(16,128)(2,1)}', space=vmem, size = 0x6000, scoped, tag = 'scratch operand']
  #allocation3 [shape = 'bf16[112,128]{1,0:T(16,128)(2,1)}', space=vmem, size = 0x7000, scoped, tag = 'scratch operand']
  #allocation4 [shape = 's32[3]{0}', space=sflag, size = 0xc, scoped, tag = 'scratch operand']
  #allocation5 [shape = 's32[]', space=sflag, size = 0x4, offset = 0, fixed_abs, tag = 'sflag constant byte address 0x0 - dummy sync flag']
  #allocation6 [shape = 's32[]', space=sflag, size = 0x4, offset = 0, fixed_abs, tag = 'sflag constant byte address 0x0 - dummy sync flag']
  #allocation7 [shape = 's32[]', space=sflag, size = 0x4, offset = 0, fixed_abs, tag = 'sflag constant byte address 0x0 - dummy sync flag']
  %s0 = inlined_call_operand.vmem [shape: bf16[2,16,16,128], index: 0, kind: input, shape index: {}]
  %s1 = inlined_call_operand.vmem [shape: bf16[128,128], index: 1, kind: input, shape index: {}]
  %s2 = inlined_call_operand.vmem [shape: f32[1,128], index: 2, kind: input, shape index: {}]
  %s3 = inlined_call_operand.vmem [shape: bf16[9,128,128], index: 3, kind: input, shape index: {}]
  %s4 = inlined_call_operand.vmem [shape: f32[1,128], index: 4, kind: input, shape index: {}]
  %s5 = inlined_call_operand.vmem [shape: bf16[2,16,16,128], index: 5, kind: output, shape index: {}]
  %s6 = sld [smem:[#allocation0]]
  $region159: #{_lambda_.3} parent=0
    _
  %s8 = ssub.s32 1, %s6
  %s9 = scalar_select 0, %s8, %s6
  loop: start=0, step=1, limit=10
  $region2: #{_lambda_.3} parent=0 // loop_pre_header
    _
  $region3: #{_lambda_.3} parent=0 // loop_header
    %s11 = sphi 0, %s15
    %p12 = scmp.ge.s32.totalorder %s11, 10
    %s18 = sphi 0, %s30
    %s19 = sphi 0, %s26
    %s20 = sphi 0, %s18
    %s21 = sphi 0, %s19
    %s22 = sphi 0, %s20
    %s23 = sphi 0, %s21
    %s31 = sphi 0, %s31
    %s33 = sphi 0, %s31
    %s34 = sphi 0, %s33
    %s48 = sphi 0, %s34
    %s52 = sphi 0, %s52
    %s54 = sphi 0, %s52
    %s55 = sphi 0, %s54
    %s69 = sphi 0, %s55
    %s73 = sphi 0, %s73
    %s75 = sphi 0, %s73
    %s76 = sphi 0, %s75
    %s90 = sphi 0, %s76
    %s94 = sphi 0, %s94
    %s96 = sphi 0, %s94
    %s97 = sphi 0, %s96
    %s111 = sphi 0, %s97
    %s119 = sphi 0, %s121
    %s122 = sphi 0, %s119
    %s123 = sphi 0, %s122
    %s139 = sphi 0, %s123
  $region4: #{_lambda_.3} parent=0 // loop_header_branch
    %14 = sbr.rel (%p12) target = $region8
  $region5: #{_lambda_.3} parent=0 // loop_body
    %s16 = ssub.s32 %s11, 1
    %s17 = ssub.s32 %s11, 2
    %s24 = sadd.s32 1, %s19
    %p25 = scmp.ge.s32.totalorder %s24, 4
    %s26 = scalar_select %p25, 0, %s24
    %s27 = sadd.s32 1, %s18
    %s28 = scalar_select %p25, %s27, %s18
    %p29 = scmp.ge.s32.totalorder %s28, 2
    %s30 = scalar_select %p29, 0, %s28
    %s32 = sadd.s32 %s31, 1
    %p35 = scmp.eq.s32.totalorder %s11, 7
    %p36 = scmp.ne.s32.totalorder %s31, %s33
    %p37 = scmp.eq.s32.totalorder %s11, 0
    %p38 = por %p36, %p37
    %p39 = scmp.ne.s32.totalorder %s31, %s33
    %p40 = scmp.eq.s32.totalorder %s16, 7
    %p41 = por %p39, %p40
    %p42 = scmp.ne.s32.totalorder %s33, %s34
    %p43 = scmp.eq.s32.totalorder %s16, 0
    %p44 = por %p42, %p43
    %p45 = scmp.ne.s32.totalorder %s33, %s34
    %p46 = scmp.eq.s32.totalorder %s17, 7
    %p47 = por %p45, %p46
    %p49 = scmp.ne.s32.totalorder %s34, %s48
    %p50 = scmp.eq.s32.totalorder %s17, 0
    %p51 = por %p49, %p50
    %s53 = sadd.s32 %s52, 1
    %p56 = scmp.eq.s32.totalorder %s11, 7
    %p57 = scmp.ne.s32.totalorder %s52, %s54
    %p58 = scmp.eq.s32.totalorder %s11, 0
    %p59 = por %p57, %p58
    %p60 = scmp.ne.s32.totalorder %s52, %s54
    %p61 = scmp.eq.s32.totalorder %s16, 7
    %p62 = por %p60, %p61
    %p63 = scmp.ne.s32.totalorder %s54, %s55
    %p64 = scmp.eq.s32.totalorder %s16, 0
    %p65 = por %p63, %p64
    %p66 = scmp.ne.s32.totalorder %s54, %s55
    %p67 = scmp.eq.s32.totalorder %s17, 7
    %p68 = por %p66, %p67
    %p70 = scmp.ne.s32.totalorder %s55, %s69
    %p71 = scmp.eq.s32.totalorder %s17, 0
    %p72 = por %p70, %p71
    %s74 = sadd.s32 %s73, 1
    %p77 = scmp.eq.s32.totalorder %s11, 7
    %p78 = scmp.ne.s32.totalorder %s73, %s75
    %p79 = scmp.eq.s32.totalorder %s11, 0
    %p80 = por %p78, %p79
    %p81 = scmp.ne.s32.totalorder %s73, %s75
    %p82 = scmp.eq.s32.totalorder %s16, 7
    %p83 = por %p81, %p82
    %p84 = scmp.ne.s32.totalorder %s75, %s76
    %p85 = scmp.eq.s32.totalorder %s16, 0
    %p86 = por %p84, %p85
    %p87 = scmp.ne.s32.totalorder %s75, %s76
    %p88 = scmp.eq.s32.totalorder %s17, 7
    %p89 = por %p87, %p88
    %p91 = scmp.ne.s32.totalorder %s76, %s90
    %p92 = scmp.eq.s32.totalorder %s17, 0
    %p93 = por %p91, %p92
    %s95 = sadd.s32 %s94, 1
    %p98 = scmp.eq.s32.totalorder %s11, 7
    %p99 = scmp.ne.s32.totalorder %s94, %s96
    %p100 = scmp.eq.s32.totalorder %s11, 0
    %p101 = por %p99, %p100
    %p102 = scmp.ne.s32.totalorder %s94, %s96
    %p103 = scmp.eq.s32.totalorder %s16, 7
    %p104 = por %p102, %p103
    %p105 = scmp.ne.s32.totalorder %s96, %s97
    %p106 = scmp.eq.s32.totalorder %s16, 0
    %p107 = por %p105, %p106
    %p108 = scmp.ne.s32.totalorder %s96, %s97
    %p109 = scmp.eq.s32.totalorder %s17, 7
    %p110 = por %p108, %p109
    %p112 = scmp.ne.s32.totalorder %s97, %s111
    %p113 = scmp.eq.s32.totalorder %s17, 0
    %p114 = por %p112, %p113
    %s115 = ssub.s32 %s18, %s30
    %s116 = ssub.s32 %s19, %s26
    %s117 = sor.u32 %s115, %s116
    %p118 = scmp.eq.s32.totalorder %s117, 0
    %s120 = sadd.s32 %s119, 1
    %s121 = scalar_select %p118, %s119, %s120
    %p124 = pneg %p118
    %p125 = scmp.eq.s32.totalorder %s11, 7
    %p126 = por %p124, %p125
    %p127 = scmp.ne.s32.totalorder %s119, %s122
    %p128 = scmp.eq.s32.totalorder %s11, 0
    %p129 = por %p127, %p128
    %p130 = scmp.ne.s32.totalorder %s119, %s122
    %p131 = scmp.eq.s32.totalorder %s16, 7
    %p132 = por %p130, %p131
    %p133 = scmp.ne.s32.totalorder %s122, %s123
    %p134 = scmp.eq.s32.totalorder %s16, 0
    %p135 = por %p133, %p134
    %p136 = scmp.ne.s32.totalorder %s122, %s123
    %p137 = scmp.eq.s32.totalorder %s17, 7
    %p138 = por %p136, %p137
    %p140 = scmp.ne.s32.totalorder %s123, %s139
    %p141 = scmp.eq.s32.totalorder %s17, 0
    %p142 = por %p140, %p141
    %p143 = scmp.le.s32.totalorder 1, %s11
    %p144 = scmp.lt.s32.totalorder %s11, 9
    %p145 = pnand %p143, %p144
    %p146 = pneg %p145
    // Predicated region
    $region9: #{_lambda_.3} parent=5 // pred_check
      _
    $region10: #{_lambda_.3} parent=5 // pred_check_branch
      %148 = sbr.rel (%p145) target = $region12
    $region11: #{_lambda_.3} parent=5 // pred_region
      %s149 = ssub.s32 %s11, 1
      // Predicated region
      $region13: #{_lambda_.3} parent=11 // pred_check
        %p150 = pneg %p44
      $region14: #{_lambda_.3} parent=11 // pred_check_branch
        %152 = sbr.rel (%p150) target = $region16
      $region15: #{_lambda_.3} parent=11 // pred_region
        _
      $region16: #{_lambda_.3} parent=11 // pred_fallthru
        _
      // Predicated region
      $region17: #{_lambda_.3} parent=11 // pred_check
        %p153 = pneg %p65
      $region18: #{_lambda_.3} parent=11 // pred_check_branch
        %155 = sbr.rel (%p153) target = $region20
      $region19: #{_lambda_.3} parent=11 // pred_region
        _
      $region20: #{_lambda_.3} parent=11 // pred_fallthru
        _
      // Predicated region
      $region21: #{_lambda_.3} parent=11 // pred_check
        %p156 = pneg %p86
      $region22: #{_lambda_.3} parent=11 // pred_check_branch
        %158 = sbr.rel (%p156) target = $region24
      $region23: #{_lambda_.3} parent=11 // pred_region
        _
      $region24: #{_lambda_.3} parent=11 // pred_fallthru
        _
      // Predicated region
      $region25: #{_lambda_.3} parent=11 // pred_check
        %p159 = pneg %p107
      $region26: #{_lambda_.3} parent=11 // pred_check_branch
        %161 = sbr.rel (%p159) target = $region28
      $region27: #{_lambda_.3} parent=11 // pred_region
        _
      $region28: #{_lambda_.3} parent=11 // pred_fallthru
        _
    $region12: #{_lambda_.3} parent=5 // pred_fallthru
      _
    %p162 = scmp.lt.s32.totalorder %s11, 8
    // Predicated region
    $region29: #{_lambda_.3} parent=5 // pred_check
      %p163 = pneg %p162
    $region30: #{_lambda_.3} parent=5 // pred_check_branch
      %165 = sbr.rel (%p163) target = $region32
    $region31: #{_lambda_.3} parent=5 // pred_region
      _
    $region32: #{_lambda_.3} parent=5 // pred_fallthru
      _
    %p166 = scmp.le.s32.totalorder 1, %s11
    %p167 = scmp.lt.s32.totalorder %s11, 9
    %p168 = pnand %p166, %p167
    %p169 = pneg %p168
    // Predicated region
    $region33: #{_lambda_.3} parent=5 // pred_check
      _
    $region34: #{_lambda_.3} parent=5 // pred_check_branch
      %171 = sbr.rel (%p168) target = $region36
    $region35: #{_lambda_.3} parent=5 // pred_region
      %s172 = ssub.s32 %s11, 1
      %p173 = pneg %p44
      %p174 = pneg %p41
      %p175 = pneg %p65
      %p176 = pneg %p62
      %p177 = pneg %p86
      %p178 = pneg %p83
      %p179 = pneg %p107
      %p180 = pneg %p104
      %p181 = pneg %p135
      %p182 = pneg %p132
      %s183 = smul.u32 4, %s21
      %p184 = scmp.lt.s32.totalorder %s20, 1
      %s185 = scalar_select %p184, %s20, 1
      %p186 = scmp.lt.s32.totalorder %s183, 15
      %s187 = scalar_select %p186, %s183, 15
      %s188 = smul.addr %s187, 2
      %s189 = smul.addr %s185, 32
      %s190 = sadd.s32 %s188, %s189
      %s191 = smul.addr %s190, 4
      %s192 = scalar_lea.vmem %s5, %s191
      %s193 = smul.u32 4, %s21
      %p194 = scmp.lt.s32.totalorder %s20, 1
      %s195 = scalar_select %p194, %s20, 1
      %p196 = scmp.lt.s32.totalorder %s193, 15
      %s197 = scalar_select %p196, %s193, 15
      %s198 = smul.addr %s197, 2
      %s199 = smul.addr %s195, 32
      %s200 = sadd.s32 %s198, %s199
      %s201 = smul.addr %s200, 4
      %s202 = scalar_lea.vmem %s5, %s201
      %s203 = smul.u32 4, %s21
      %s205 = smul.u32 %s21, 4
      %s206 = ssub.s32 %s205, 1
      %p207 = scmp.gt.s32.totalorder %s206, 0
      %s208 = scalar_select %p207, %s206, 0
      %s209 = sadd.s32 %s205, 4
      %p210 = scmp.lt.s32.totalorder %s209, 15
      %s211 = scalar_select %p210, %s209, 15
      %s212 = smul.u32 %s205, 2
      %s213 = smul.u32 %s20, 32
      %s214 = sadd.s32 %s212, %s213
      %s215 = smul.addr %s214, 4
      %s216 = scalar_lea.vmem %s0, %s215
      %s217 = scalar_lea.vmem [#allocation2], 8
      %p219 = scmp.lt.u32.totalorder 32, 8
      %p220 = pneg %p219
      // Predicated region
      $region37: #{_lambda_.3} parent=35 // pred_check
        _
      $region38: #{_lambda_.3} parent=35 // pred_check_branch
        %222 = sbr.rel (%p219) target = $region40
      $region39: #{_lambda_.3} parent=35 // pred_region
        %s237 = sand.u32 32, 7
        %p238 = scmp.eq.s32.totalorder %s237, 0
        // Predicated region
        $region52: #{_lambda_.3} parent=39 // pred_check
          %p239 = pneg %p238
        $region53: #{_lambda_.3} parent=39 // pred_check_branch
          %241 = sbr.rel (%p239) target = $region55
        $region54: #{_lambda_.3} parent=39 // pred_region
          loop: start=0, step=1, limit=1
          $region56: #{_lambda_.3} parent=54 // loop_pre_header
            _
          $region57: #{_lambda_.3} parent=54 // loop_header
            %s243 = sphi 0, %s247
            %p244 = scmp.ge.s32.totalorder %s243, 1
            %s248 = sphi %s216, %s216
            %s249 = sphi %s217, %s217
          $region58: #{_lambda_.3} parent=54 // loop_header_branch
            %246 = sbr.rel (%p244) target = $region62
          $region59: #{_lambda_.3} parent=54 // loop_body
            %v250 = vld [vmem:[%s248] sm:$0xff]
            %251 = vst [vmem:[%s249] sm:$0xff] %v250
            %v252 = vld [vmem:[%s248 + $0x8] sm:$0xff]
            %253 = vst [vmem:[%s249 + $0x8] sm:$0xff] %v252
            %v254 = vld [vmem:[%s248 + $0x10] sm:$0xff]
            %255 = vst [vmem:[%s249 + $0x10] sm:$0xff] %v254
            %v256 = vld [vmem:[%s248 + $0x18] sm:$0xff]
            %257 = vst [vmem:[%s249 + $0x18] sm:$0xff] %v256
          $region60: #{_lambda_.3} parent=54 // loop_footer
            %s247 = sadd.s32 1, %s243
          $region61: #{_lambda_.3} parent=54 // loop_footer_branch
            %242 = sbr.rel target = $region57
          $region62: #{_lambda_.3} parent=54 // loop_exit
            _
        $region55: #{_lambda_.3} parent=39 // pred_fallthru
          _
        %p258 = pneg %p238
        // Predicated region
        $region63: #{_lambda_.3} parent=39 // pred_check
          _
        $region64: #{_lambda_.3} parent=39 // pred_check_branch
          %260 = sbr.rel (%p238) target = $region66
        $region65: #{_lambda_.3} parent=39 // pred_region
          %s261 = sand.u32 32, 7
        $region66: #{_lambda_.3} parent=39 // pred_fallthru
          _
      $region40: #{_lambda_.3} parent=35 // pred_fallthru
        _
      // Predicated region
      $region41: #{_lambda_.3} parent=35 // pred_check
        %p223 = pneg %p219
      $region42: #{_lambda_.3} parent=35 // pred_check_branch
        %225 = sbr.rel (%p223) target = $region44
      $region43: #{_lambda_.3} parent=35 // pred_region
        %s226 = sshllo.u32 0, 32
        loop: start=0, step=1, limit=1
        $region45: #{_lambda_.3} parent=43 // loop_pre_header
          _
        $region46: #{_lambda_.3} parent=43 // loop_header
          %s228 = sphi 0, %s232
          %p229 = scmp.ge.s32.totalorder %s228, 1
          %s233 = sphi %s216, %s216
          %s234 = sphi %s217, %s217
        $region47: #{_lambda_.3} parent=43 // loop_header_branch
          %231 = sbr.rel (%p229) target = $region51
        $region48: #{_lambda_.3} parent=43 // loop_body
          %v235 = vld [vmem:[%s233] sm:%s226]
          %236 = vst [vmem:[%s234] sm:%s226] %v235
        $region49: #{_lambda_.3} parent=43 // loop_footer
          %s232 = sadd.s32 1, %s228
        $region50: #{_lambda_.3} parent=43 // loop_footer_branch
          %227 = sbr.rel target = $region46
        $region51: #{_lambda_.3} parent=43 // loop_exit
          _
      $region44: #{_lambda_.3} parent=35 // pred_fallthru
        _
      // Predicated region
      $region67: #{_lambda_.3} parent=35 // pred_check
        _
      $region68: #{_lambda_.3} parent=35 // pred_check_branch
        %264 = sbr.rel (0) target = $region70
      $region69: #{_lambda_.3} parent=35 // pred_region
        %265 = vsyncadd [#allocation4], 512
      $region70: #{_lambda_.3} parent=35 // pred_fallthru
        _
      %s266 = smul.u32 %s208, 2
      %s267 = sadd.s32 %s266, %s213
      %s268 = smul.addr %s267, 4
      %s269 = scalar_lea.vmem %s0, %s268
      %s270 = scalar_lea.sflag [#allocation4], 1
      %p272 = scmp.lt.u32.totalorder 8, 8
      %p273 = pneg %p272
      // Predicated region
      $region71: #{_lambda_.3} parent=35 // pred_check
        _
      $region72: #{_lambda_.3} parent=35 // pred_check_branch
        %275 = sbr.rel (%p272) target = $region74
      $region73: #{_lambda_.3} parent=35 // pred_region
        %s290 = sand.u32 8, 7
        %p291 = scmp.eq.s32.totalorder %s290, 0
        // Predicated region
        $region86: #{_lambda_.3} parent=73 // pred_check
          %p292 = pneg %p291
        $region87: #{_lambda_.3} parent=73 // pred_check_branch
          %294 = sbr.rel (%p292) target = $region89
        $region88: #{_lambda_.3} parent=73 // pred_region
          loop: start=0, step=1, limit=1
          $region90: #{_lambda_.3} parent=88 // loop_pre_header
            _
          $region91: #{_lambda_.3} parent=88 // loop_header
            %s296 = sphi 0, %s300
            %p297 = scmp.ge.s32.totalorder %s296, 1
            %s301 = sphi %s269, %s269
            %s302 = sphi [#allocation2], [#allocation2]
          $region92: #{_lambda_.3} parent=88 // loop_header_branch
            %299 = sbr.rel (%p297) target = $region96
          $region93: #{_lambda_.3} parent=88 // loop_body
            %v303 = vld [vmem:[%s301] sm:$0xff]
            %304 = vst [vmem:[%s302] sm:$0xff] %v303
          $region94: #{_lambda_.3} parent=88 // loop_footer
            %s300 = sadd.s32 1, %s296
          $region95: #{_lambda_.3} parent=88 // loop_footer_branch
            %295 = sbr.rel target = $region91
          $region96: #{_lambda_.3} parent=88 // loop_exit
            _
        $region89: #{_lambda_.3} parent=73 // pred_fallthru
          _
        %p305 = pneg %p291
        // Predicated region
        $region97: #{_lambda_.3} parent=73 // pred_check
          _
        $region98: #{_lambda_.3} parent=73 // pred_check_branch
          %307 = sbr.rel (%p291) target = $region100
        $region99: #{_lambda_.3} parent=73 // pred_region
          %s308 = sand.u32 8, 7
        $region100: #{_lambda_.3} parent=73 // pred_fallthru
          _
      $region74: #{_lambda_.3} parent=35 // pred_fallthru
        _
      // Predicated region
      $region75: #{_lambda_.3} parent=35 // pred_check
        %p276 = pneg %p272
      $region76: #{_lambda_.3} parent=35 // pred_check_branch
        %278 = sbr.rel (%p276) target = $region78
      $region77: #{_lambda_.3} parent=35 // pred_region
        %s279 = sshllo.u32 0, 8
        loop: start=0, step=1, limit=1
        $region79: #{_lambda_.3} parent=77 // loop_pre_header
          _
        $region80: #{_lambda_.3} parent=77 // loop_header
          %s281 = sphi 0, %s285
          %p282 = scmp.ge.s32.totalorder %s281, 1
          %s286 = sphi %s269, %s269
          %s287 = sphi [#allocation2], [#allocation2]
        $region81: #{_lambda_.3} parent=77 // loop_header_branch
          %284 = sbr.rel (%p282) target = $region85
        $region82: #{_lambda_.3} parent=77 // loop_body
          %v288 = vld [vmem:[%s286] sm:%s279]
          %289 = vst [vmem:[%s287] sm:%s279] %v288
        $region83: #{_lambda_.3} parent=77 // loop_footer
          %s285 = sadd.s32 1, %s281
        $region84: #{_lambda_.3} parent=77 // loop_footer_branch
          %280 = sbr.rel target = $region80
        $region85: #{_lambda_.3} parent=77 // loop_exit
          _
      $region78: #{_lambda_.3} parent=35 // pred_fallthru
        _
      // Predicated region
      $region101: #{_lambda_.3} parent=35 // pred_check
        _
      $region102: #{_lambda_.3} parent=35 // pred_check_branch
        %311 = sbr.rel (0) target = $region104
      $region103: #{_lambda_.3} parent=35 // pred_region
        %312 = vsyncadd %s270, 128
      $region104: #{_lambda_.3} parent=35 // pred_fallthru
        _
      %s313 = smul.u32 %s211, 2
      %s314 = sadd.s32 %s313, %s213
      %s315 = smul.addr %s314, 4
      %s316 = scalar_lea.vmem %s0, %s315
      %s317 = scalar_lea.vmem [#allocation2], 40
      %s318 = scalar_lea.sflag [#allocation4], 2
      %p320 = scmp.lt.u32.totalorder 8, 8
      %p321 = pneg %p320
      // Predicated region
      $region105: #{_lambda_.3} parent=35 // pred_check
        _
      $region106: #{_lambda_.3} parent=35 // pred_check_branch
        %323 = sbr.rel (%p320) target = $region108
      $region107: #{_lambda_.3} parent=35 // pred_region
        %s338 = sand.u32 8, 7
        %p339 = scmp.eq.s32.totalorder %s338, 0
        // Predicated region
        $region120: #{_lambda_.3} parent=107 // pred_check
          %p340 = pneg %p339
        $region121: #{_lambda_.3} parent=107 // pred_check_branch
          %342 = sbr.rel (%p340) target = $region123
        $region122: #{_lambda_.3} parent=107 // pred_region
          loop: start=0, step=1, limit=1
          $region124: #{_lambda_.3} parent=122 // loop_pre_header
            _
          $region125: #{_lambda_.3} parent=122 // loop_header
            %s344 = sphi 0, %s348
            %p345 = scmp.ge.s32.totalorder %s344, 1
            %s349 = sphi %s316, %s316
            %s350 = sphi %s317, %s317
          $region126: #{_lambda_.3} parent=122 // loop_header_branch
            %347 = sbr.rel (%p345) target = $region130
          $region127: #{_lambda_.3} parent=122 // loop_body
            %v351 = vld [vmem:[%s349] sm:$0xff]
            %352 = vst [vmem:[%s350] sm:$0xff] %v351
          $region128: #{_lambda_.3} parent=122 // loop_footer
            %s348 = sadd.s32 1, %s344
          $region129: #{_lambda_.3} parent=122 // loop_footer_branch
            %343 = sbr.rel target = $region125
          $region130: #{_lambda_.3} parent=122 // loop_exit
            _
        $region123: #{_lambda_.3} parent=107 // pred_fallthru
          _
        %p353 = pneg %p339
        // Predicated region
        $region131: #{_lambda_.3} parent=107 // pred_check
          _
        $region132: #{_lambda_.3} parent=107 // pred_check_branch
          %355 = sbr.rel (%p339) target = $region134
        $region133: #{_lambda_.3} parent=107 // pred_region
          %s356 = sand.u32 8, 7
        $region134: #{_lambda_.3} parent=107 // pred_fallthru
          _
      $region108: #{_lambda_.3} parent=35 // pred_fallthru
        _
      // Predicated region
      $region109: #{_lambda_.3} parent=35 // pred_check
        %p324 = pneg %p320
      $region110: #{_lambda_.3} parent=35 // pred_check_branch
        %326 = sbr.rel (%p324) target = $region112
      $region111: #{_lambda_.3} parent=35 // pred_region
        %s327 = sshllo.u32 0, 8
        loop: start=0, step=1, limit=1
        $region113: #{_lambda_.3} parent=111 // loop_pre_header
          _
        $region114: #{_lambda_.3} parent=111 // loop_header
          %s329 = sphi 0, %s333
          %p330 = scmp.ge.s32.totalorder %s329, 1
          %s334 = sphi %s316, %s316
          %s335 = sphi %s317, %s317
        $region115: #{_lambda_.3} parent=111 // loop_header_branch
          %332 = sbr.rel (%p330) target = $region119
        $region116: #{_lambda_.3} parent=111 // loop_body
          %v336 = vld [vmem:[%s334] sm:%s327]
          %337 = vst [vmem:[%s335] sm:%s327] %v336
        $region117: #{_lambda_.3} parent=111 // loop_footer
          %s333 = sadd.s32 1, %s329
        $region118: #{_lambda_.3} parent=111 // loop_footer_branch
          %328 = sbr.rel target = $region114
        $region119: #{_lambda_.3} parent=111 // loop_exit
          _
      $region112: #{_lambda_.3} parent=35 // pred_fallthru
        _
      // Predicated region
      $region135: #{_lambda_.3} parent=35 // pred_check
        _
      $region136: #{_lambda_.3} parent=35 // pred_check_branch
        %359 = sbr.rel (0) target = $region138
      $region137: #{_lambda_.3} parent=35 // pred_region
        %360 = vsyncadd %s318, 128
      $region138: #{_lambda_.3} parent=35 // pred_fallthru
        _
      %s361 = smul.u32 4, 4
      %s362 = smul.u32 %s361, 2
      %s363 = smul.u32 %s362, 1
      %s364 = sshll.u32 %s363, 4
      %365 = dma.done [#allocation4], %s364
      %s366 = smul.u32 4, 1
      %s367 = smul.u32 %s366, 2
      %s368 = smul.u32 %s367, 1
      %s369 = sshll.u32 %s368, 4
      %370 = dma.done %s270, %s369
      %s371 = sshll.u32 %s368, 4
      %372 = dma.done %s318, %s371
      %v373 = vld [vmem:[#allocation2] sm:$0xff]
      %v374 = vld [vmem:[#allocation2 + $0x8] sm:$0xff]
      %v375 = vld [vmem:[#allocation2 + $0x10] sm:$0xff]
      %v376 = vld [vmem:[#allocation2 + $0x18] sm:$0xff]
      %v377 = vld [vmem:[#allocation2 + $0x20] sm:$0xff]
      %v378 = vld [vmem:[#allocation2 + $0x28] sm:$0xff]
      %v379 = vld [vmem:[%s1] sm:$0xf]
      %v380 = vld [vmem:[%s1 + $0x4] sm:$0xf]
      %v381 = vld [vmem:[%s1 + $0x8] sm:$0xf]
      %v382 = vld [vmem:[%s1 + $0xc] sm:$0xf]
      %v383 = vld [vmem:[%s1 + $0x10] sm:$0xf]
      %v384 = vld [vmem:[%s1 + $0x14] sm:$0xf]
      %v385 = vld [vmem:[%s1 + $0x18] sm:$0xf]
      %v386 = vld [vmem:[%s1 + $0x1c] sm:$0xf]
      %v387 = vld [vmem:[%s1 + $0x20] sm:$0xf]
      %v388 = vld [vmem:[%s1 + $0x24] sm:$0xf]
      %v389 = vld [vmem:[%s1 + $0x28] sm:$0xf]
      %v390 = vld [vmem:[%s1 + $0x2c] sm:$0xf]
      %v391 = vld [vmem:[%s1 + $0x30] sm:$0xf]
      %v392 = vld [vmem:[%s1 + $0x34] sm:$0xf]
      %v393 = vld [vmem:[%s1 + $0x38] sm:$0xf]
      %v394 = vld [vmem:[%s1 + $0x3c] sm:$0xf]
      %v395 = vld [vmem:[%s2] sm:$0x1]
      %v397 = vlaneseq
      %v398 = vshrl.u32 %v397, 7
      %v399 = vsub.s32 0, %v398
      %v400 = vrot.slane %v395, %v399
      %v418 = vunpack.c.l.b16 %v379
      %v419 = vunpack.c.l.b16 %v380
      %v420 = vunpack.c.l.b16 %v381
      %v421 = vunpack.c.l.b16 %v382
      %v422 = vunpack.c.l.b16 %v383
      %v423 = vunpack.c.l.b16 %v384
      %v424 = vunpack.c.l.b16 %v385
      %v425 = vunpack.c.l.b16 %v386
      %v426 = vunpack.c.l.b16 %v387
      %v427 = vunpack.c.l.b16 %v388
      %v428 = vunpack.c.l.b16 %v389
      %v429 = vunpack.c.l.b16 %v390
      %v430 = vunpack.c.l.b16 %v391
      %v431 = vunpack.c.l.b16 %v392
      %v432 = vunpack.c.l.b16 %v393
      %v433 = vunpack.c.l.b16 %v394
      %v434 = vpack.c.b16 %v419, %v418
      %v435 = vpack.c.b16 %v421, %v420
      %v436 = vpack.c.b16 %v423, %v422
      %v437 = vpack.c.b16 %v425, %v424
      %v438 = vpack.c.b16 %v427, %v426
      %v439 = vpack.c.b16 %v429, %v428
      %v440 = vpack.c.b16 %v431, %v430
      %v441 = vpack.c.b16 %v433, %v432
      %450 = vmatprep.subr.bf16.mxu0 0
      %451 = vmatpush1.bf16.msra.mxu0 %v434
      %452 = vmatprep.subr.bf16.mxu0 0
      %453 = vmatpush1.bf16.msra.mxu0 %v435
      %454 = vmatprep.subr.bf16.mxu0 0
      %455 = vmatpush1.bf16.msra.mxu0 %v436
      %456 = vmatprep.subr.bf16.mxu0 0
      %457 = vmatpush1.bf16.msra.mxu0 %v437
      %458 = vmatprep.subr.bf16.mxu0 0
      %459 = vmatpush1.bf16.msra.mxu0 %v438
      %460 = vmatprep.subr.bf16.mxu0 0
      %461 = vmatpush1.bf16.msra.mxu0 %v439
      %462 = vmatprep.subr.bf16.mxu0 0
      %463 = vmatpush1.bf16.msra.mxu0 %v440
      %464 = vmatprep.subr.bf16.mxu0 0
      %465 = vmatpush1.bf16.msra.mxu0 %v441
      %466 = vmatprep.subr.bf16.mxu0 0
      %467 = vmatpush1.bf16.msra.mxu0 0
      %468 = vmatprep.subr.bf16.mxu0 0
      %469 = vmatpush1.bf16.msra.mxu0 0
      %470 = vmatprep.subr.bf16.mxu0 0
      %471 = vmatpush1.bf16.msra.mxu0 0
      %472 = vmatprep.subr.bf16.mxu0 0
      %473 = vmatpush1.bf16.msra.mxu0 0
      %474 = vmatprep.subr.bf16.mxu0 0
      %475 = vmatpush1.bf16.msra.mxu0 0
      %476 = vmatprep.subr.bf16.mxu0 0
      %477 = vmatpush1.bf16.msra.mxu0 0
      %478 = vmatprep.subr.bf16.mxu0 0
      %479 = vmatpush1.bf16.msra.mxu0 0
      %480 = vmatprep.subr.bf16.mxu0 0
      %481 = vmatpush1.bf16.msra.mxu0 0
      %482 = vmatprep.mubr.bf16.mxu0 0
      %483 = vmatmul.mubr.bf16.gmra.mrb[0].mxu0 %v373
      %v484 = vpop.f32.mrb[0].mxu0
      %v485 = vadd.f32 %v400, %v484
      %v486 = vpop.f32.mrb[0].mxu0
      %v487 = vpop.f32.mrb[0].mxu0
      %v488 = vadd.f32 %v400, %v487
      %v489 = vpop.f32.mrb[0].mxu0
      %490 = vmatprep.mubr.bf16.mxu0 0
      %491 = vmatmul.mubr.bf16.gmra.mrb[0].mxu0 %v374
      %v492 = vpop.f32.mrb[0].mxu0
      %v493 = vadd.f32 %v400, %v492
      %v494 = vpop.f32.mrb[0].mxu0
      %v495 = vpop.f32.mrb[0].mxu0
      %v496 = vadd.f32 %v400, %v495
      %v497 = vpop.f32.mrb[0].mxu0
      %498 = vmatprep.mubr.bf16.mxu0 0
      %499 = vmatmul.mubr.bf16.gmra.mrb[0].mxu0 %v375
      %v500 = vpop.f32.mrb[0].mxu0
      %v501 = vadd.f32 %v400, %v500
      %v502 = vpop.f32.mrb[0].mxu0
      %v503 = vpop.f32.mrb[0].mxu0
      %v504 = vadd.f32 %v400, %v503
      %v505 = vpop.f32.mrb[0].mxu0
      %506 = vmatprep.mubr.bf16.mxu0 0
      %507 = vmatmul.mubr.bf16.gmra.mrb[0].mxu0 %v376
      %v508 = vpop.f32.mrb[0].mxu0
      %v509 = vadd.f32 %v400, %v508
      %v510 = vpop.f32.mrb[0].mxu0
      %v511 = vpop.f32.mrb[0].mxu0
      %v512 = vadd.f32 %v400, %v511
      %v513 = vpop.f32.mrb[0].mxu0
      %514 = vmatprep.mubr.bf16.mxu0 0
      %515 = vmatmul.mubr.bf16.gmra.mrb[0].mxu0 %v377
      %v516 = vpop.f32.mrb[0].mxu0
      %v517 = vadd.f32 %v400, %v516
      %v518 = vpop.f32.mrb[0].mxu0
      %v519 = vpop.f32.mrb[0].mxu0
      %v520 = vadd.f32 %v400, %v519
      %v521 = vpop.f32.mrb[0].mxu0
      %522 = vmatprep.mubr.bf16.mxu0 0
      %523 = vmatmul.mubr.bf16.gmra.mrb[0].mxu0 %v378
      %v524 = vpop.f32.mrb[0].mxu0
      %v525 = vadd.f32 %v400, %v524
      %v526 = vpop.f32.mrb[0].mxu0
      %v527 = vpop.f32.mrb[0].mxu0
      %v528 = vadd.f32 %v400, %v527
      %v529 = vpop.f32.mrb[0].mxu0
      %530 = vdwg.mxu0
      %v531 = vmax.f32 %v485, 0.0
      %v532 = vmax.f32 %v488, 0.0
      %v533 = vmax.f32 %v493, 0.0
      %v534 = vmax.f32 %v496, 0.0
      %v535 = vmax.f32 %v501, 0.0
      %v536 = vmax.f32 %v504, 0.0
      %v537 = vmax.f32 %v509, 0.0
      %v538 = vmax.f32 %v512, 0.0
      %v539 = vmax.f32 %v517, 0.0
      %v540 = vmax.f32 %v520, 0.0
      %v541 = vmax.f32 %v525, 0.0
      %v542 = vmax.f32 %v528, 0.0
      %v543 = vpack.c.bf16 %v532, %v531
      %v544 = vpack.c.bf16 %v534, %v533
      %v545 = vpack.c.bf16 %v536, %v535
      %v546 = vpack.c.bf16 %v538, %v537
      %v547 = vpack.c.bf16 %v540, %v539
      %v548 = vpack.c.bf16 %v542, %v541
      %vm555 = vcmask 1043456
      %v556 = vrot.slane %v543, 4
      %v557 = vrot.slane %v544, 4
      %v558 = vsel %vm555, %v556, %v557
      %v559 = vrot.slane %v545, 4
      %v560 = vsel %vm555, %v557, %v559
      %v561 = vrot.slane %v546, 4
      %v562 = vsel %vm555, %v559, %v561
      %v563 = vrot.slane %v547, 4
      %v564 = vsel %vm555, %v561, %v563
      %v565 = vrot.slane %v548, 4
      %v566 = vsel %vm555, %v563, %v565
      %574 = vst [vmem:[#allocation3] sm:$0xf0] %v556
      %575 = vst [vmem:[#allocation3 + $0x8] sm:$0xff] %v558
      %576 = vst [vmem:[#allocation3 + $0x10] sm:$0xff] %v560
      %577 = vst [vmem:[#allocation3 + $0x18] sm:$0xff] %v562
      %578 = vst [vmem:[#allocation3 + $0x20] sm:$0xff] %v564
      %579 = vst [vmem:[#allocation3 + $0x28] sm:$0xff] %v566
      %580 = vst [vmem:[#allocation3 + $0x30] sm:$0xf] %v565
      %p581 = scmp.eq.s32.totalorder %s21, 0
      // Predicated region
      $region139: #{_lambda_.3} parent=35 // pred_check
        %p582 = pneg %p581
      $region140: #{_lambda_.3} parent=35 // pred_check_branch
        %584 = sbr.rel (%p582) target = $region142
      $region141: #{_lambda_.3} parent=35 // pred_region
        %585 = vst [vmem:[#allocation3] sm:$0xf0] 0
        %586 = vst [vmem:[#allocation3 + $0x8] sm:$0xf] 0
      $region142: #{_lambda_.3} parent=35 // pred_fallthru
        _
      %p587 = scmp.eq.s32.totalorder %s21, 3
      // Predicated region
      $region143: #{_lambda_.3} parent=35 // pred_check
        %p588 = pneg %p587
      $region144: #{_lambda_.3} parent=35 // pred_check_branch
        %590 = sbr.rel (%p588) target = $region146
      $region145: #{_lambda_.3} parent=35 // pred_region
        %591 = vst [vmem:[#allocation3 + $0x28] sm:$0xf0] 0
        %592 = vst [vmem:[#allocation3 + $0x30] sm:$0xf] 0
      $region146: #{_lambda_.3} parent=35 // pred_fallthru
        _
      %v593 = vlaneseq
      %v594 = vshrl.u32 %v593, 7
      %v595 = vadd.s32 %v594, 8
      %v596 = vadd.s32 %v594, 16
      %v597 = vadd.s32 %v594, 24
      %v598 = vadd.s32 %v594, 32
      %v599 = vadd.s32 %v594, 40
      %v600 = vadd.s32 %v594, 48
      %v601 = vadd.s32 %v594, 56
      %vm602 = vcmp.lt.s32.totalorder %v594, 0
      %v603 = vsub.s32 0, %v594
      %v604 = vsel %vm602, %v603, %v594
      %v605 = vshrl.u32 %v604, 4
      %v606 = vand.u32 %v604, 15
      %v607 = vsub.s32 0, %v606
      %v608 = vsel %vm602, %v607, %v606
      %vm609 = vcmp.lt.s32.totalorder %v595, 0
      %v610 = vsub.s32 0, %v595
      %v611 = vsel %vm609, %v610, %v595
      %v612 = vshrl.u32 %v611, 4
      %v613 = vand.u32 %v611, 15
      %v614 = vsub.s32 0, %v613
      %v615 = vsel %vm609, %v614, %v613
      %vm616 = vcmp.lt.s32.totalorder %v596, 0
      %v617 = vsub.s32 0, %v596
      %v618 = vsel %vm616, %v617, %v596
      %v619 = vshrl.u32 %v618, 4
      %v620 = vand.u32 %v618, 15
      %v621 = vsub.s32 0, %v620
      %v622 = vsel %vm616, %v621, %v620
      %vm623 = vcmp.lt.s32.totalorder %v597, 0
      %v624 = vsub.s32 0, %v597
      %v625 = vsel %vm623, %v624, %v597
      %v626 = vshrl.u32 %v625, 4
      %v627 = vand.u32 %v625, 15
      %v628 = vsub.s32 0, %v627
      %v629 = vsel %vm623, %v628, %v627
      %vm630 = vcmp.lt.s32.totalorder %v598, 0
      %v631 = vsub.s32 0, %v598
      %v632 = vsel %vm630, %v631, %v598
      %v633 = vshrl.u32 %v632, 4
      %v634 = vand.u32 %v632, 15
      %v635 = vsub.s32 0, %v634
      %v636 = vsel %vm630, %v635, %v634
      %vm637 = vcmp.lt.s32.totalorder %v599, 0
      %v638 = vsub.s32 0, %v599
      %v639 = vsel %vm637, %v638, %v599
      %v640 = vshrl.u32 %v639, 4
      %v641 = vand.u32 %v639, 15
      %v642 = vsub.s32 0, %v641
      %v643 = vsel %vm637, %v642, %v641
      %vm644 = vcmp.lt.s32.totalorder %v600, 0
      %v645 = vsub.s32 0, %v600
      %v646 = vsel %vm644, %v645, %v600
      %v647 = vshrl.u32 %v646, 4
      %v648 = vand.u32 %v646, 15
      %v649 = vsub.s32 0, %v648
      %v650 = vsel %vm644, %v649, %v648
      %vm651 = vcmp.lt.s32.totalorder %v601, 0
      %v652 = vsub.s32 0, %v601
      %v653 = vsel %vm651, %v652, %v601
      %v654 = vshrl.u32 %v653, 4
      %v655 = vand.u32 %v653, 15
      %v656 = vsub.s32 0, %v655
      %v657 = vsel %vm651, %v656, %v655
      %vm658 = vcmp.ne.s32.totalorder %v608, 0
      %vm659 = vcmp.ne.s32.totalorder %v615, 0
      %vm660 = vcmp.ne.s32.totalorder %v622, 0
      %vm661 = vcmp.ne.s32.totalorder %v629, 0
      %vm662 = vcmp.ne.s32.totalorder %v636, 0
      %vm663 = vcmp.ne.s32.totalorder %v643, 0
      %vm664 = vcmp.ne.s32.totalorder %v650, 0
      %vm665 = vcmp.ne.s32.totalorder %v657, 0
      %vm666 = vcmp.lt.s32.totalorder %v608, 0
      %vm667 = vcmp.lt.s32.totalorder %v615, 0
      %vm668 = vcmp.lt.s32.totalorder %v622, 0
      %vm669 = vcmp.lt.s32.totalorder %v629, 0
      %vm670 = vcmp.lt.s32.totalorder %v636, 0
      %vm671 = vcmp.lt.s32.totalorder %v643, 0
      %vm672 = vcmp.lt.s32.totalorder %v650, 0
      %vm673 = vcmp.lt.s32.totalorder %v657, 0
      %vm674 = vmand %vm666, %vm658
      %vm675 = vmand %vm667, %vm659
      %vm676 = vmand %vm668, %vm660
      %vm677 = vmand %vm669, %vm661
      %vm678 = vmand %vm670, %vm662
      %vm679 = vmand %vm671, %vm663
      %vm680 = vmand %vm672, %vm664
      %vm681 = vmand %vm673, %vm665
      %v682 = vadd.s32 %v608, 16
      %v683 = vadd.s32 %v615, 16
      %v684 = vadd.s32 %v622, 16
      %v685 = vadd.s32 %v629, 16
      %v686 = vadd.s32 %v636, 16
      %v687 = vadd.s32 %v643, 16
      %v688 = vadd.s32 %v650, 16
      %v689 = vadd.s32 %v657, 16
      %v690 = vsel %vm674, %v682, %v608
      %v691 = vsel %vm675, %v683, %v615
      %v692 = vsel %vm676, %v684, %v622
      %v693 = vsel %vm677, %v685, %v629
      %v694 = vsel %vm678, %v686, %v636
      %v695 = vsel %vm679, %v687, %v643
      %v696 = vsel %vm680, %v688, %v650
      %v697 = vsel %vm681, %v689, %v657
      %vm698 = vcmp.ne.s32.totalorder %v690, 0
      %vm699 = vcmp.ne.s32.totalorder %v691, 0
      %vm700 = vcmp.ne.s32.totalorder %v692, 0
      %vm701 = vcmp.ne.s32.totalorder %v693, 0
      %vm702 = vcmp.ne.s32.totalorder %v694, 0
      %vm703 = vcmp.ne.s32.totalorder %v695, 0
      %vm704 = vcmp.ne.s32.totalorder %v696, 0
      %vm705 = vcmp.ne.s32.totalorder %v697, 0
      %vm706 = vcmp.ne.s32.totalorder %v690, 15
      %vm707 = vcmp.ne.s32.totalorder %v691, 15
      %vm708 = vcmp.ne.s32.totalorder %v692, 15
      %vm709 = vcmp.ne.s32.totalorder %v693, 15
      %vm710 = vcmp.ne.s32.totalorder %v694, 15
      %vm711 = vcmp.ne.s32.totalorder %v695, 15
      %vm712 = vcmp.ne.s32.totalorder %v696, 15
      %vm713 = vcmp.ne.s32.totalorder %v697, 15
      %v714 = vld [vmem:[#allocation3] sm:$0xf8]
      %v715 = vld [vmem:[#allocation3 + $0x8] sm:$0xff]
      %v716 = vld [vmem:[#allocation3 + $0x10] sm:$0xff]
      %v717 = vld [vmem:[#allocation3 + $0x18] sm:$0xff]
      %v718 = vld [vmem:[#allocation3 + $0x20] sm:$0xf]
      %v719 = vld [vmem:[%s3] sm:$0xf]
      %v720 = vld [vmem:[%s3 + $0x4] sm:$0xf]
      %v721 = vld [vmem:[%s3 + $0x8] sm:$0xf]
      %v722 = vld [vmem:[%s3 + $0xc] sm:$0xf]
      %v723 = vld [vmem:[%s3 + $0x10] sm:$0xf]
      %v724 = vld [vmem:[%s3 + $0x14] sm:$0xf]
      %v725 = vld [vmem:[%s3 + $0x18] sm:$0xf]
      %v726 = vld [vmem:[%s3 + $0x1c] sm:$0xf]
      %v727 = vld [vmem:[%s3 + $0x20] sm:$0xf]
      %v728 = vld [vmem:[%s3 + $0x24] sm:$0xf]
      %v729 = vld [vmem:[%s3 + $0x28] sm:$0xf]
      %v730 = vld [vmem:[%s3 + $0x2c] sm:$0xf]
      %v731 = vld [vmem:[%s3 + $0x30] sm:$0xf]
      %v732 = vld [vmem:[%s3 + $0x34] sm:$0xf]
      %v733 = vld [vmem:[%s3 + $0x38] sm:$0xf]
      %v734 = vld [vmem:[%s3 + $0x3c] sm:$0xf]
      %vm735 = vsmask.f32 4352
      %v737 = vshrl.u32 %v714, 16
      %v739 = vrot.slane %v737, 3
      %v740 = vshll.u32 %v714, 16
      %v742 = vrot.slane %v740, 4
      %v743 = vor.u32 %v739, %v742
      %v745 = vshrl.u32 %v715, 16
      %v747 = vrot.slane %v745, 3
      %v748 = vshll.u32 %v715, 16
      %v750 = vrot.slane %v748, 4
      %v751 = vor.u32 %v747, %v750
      %v752 = vsel %vm735, %v743, %v751
      %v754 = vshrl.u32 %v716, 16
      %v756 = vrot.slane %v754, 3
      %v757 = vshll.u32 %v716, 16
      %v759 = vrot.slane %v757, 4
      %v760 = vor.u32 %v756, %v759
      %v761 = vsel %vm735, %v751, %v760
      %v763 = vshrl.u32 %v717, 16
      %v765 = vrot.slane %v763, 3
      %v766 = vshll.u32 %v717, 16
      %v768 = vrot.slane %v766, 4
      %v769 = vor.u32 %v765, %v768
      %v770 = vsel %vm735, %v760, %v769
      %v772 = vshrl.u32 %v718, 16
      %v774 = vrot.slane %v772, 3
      %v775 = vshll.u32 %v718, 16
      %v777 = vrot.slane %v775, 4
      %v778 = vor.u32 %v774, %v777
      %v779 = vsel %vm735, %v769, %v778
      %v800 = vunpack.c.l.b16 %v719
      %v801 = vunpack.c.l.b16 %v720
      %v802 = vunpack.c.l.b16 %v721
      %v803 = vunpack.c.l.b16 %v722
      %v804 = vunpack.c.l.b16 %v723
      %v805 = vunpack.c.l.b16 %v724
      %v806 = vunpack.c.l.b16 %v725
      %v807 = vunpack.c.l.b16 %v726
      %v808 = vunpack.c.l.b16 %v727
      %v809 = vunpack.c.l.b16 %v728
      %v810 = vunpack.c.l.b16 %v729
      %v811 = vunpack.c.l.b16 %v730
      %v812 = vunpack.c.l.b16 %v731
      %v813 = vunpack.c.l.b16 %v732
      %v814 = vunpack.c.l.b16 %v733
      %v815 = vunpack.c.l.b16 %v734
      %v816 = vpack.c.b16 %v801, %v800
      %v817 = vpack.c.b16 %v803, %v802
      %v818 = vpack.c.b16 %v805, %v804
      %v819 = vpack.c.b16 %v807, %v806
      %v820 = vpack.c.b16 %v809, %v808
      %v821 = vpack.c.b16 %v811, %v810
      %v822 = vpack.c.b16 %v813, %v812
      %v823 = vpack.c.b16 %v815, %v814
      %832 = vmatprep.subr.bf16.mxu0 0
      %833 = vmatpush1.bf16.msra.mxu0 %v816
      %834 = vmatprep.subr.bf16.mxu0 0
      %835 = vmatpush1.bf16.msra.mxu0 %v817
      %836 = vmatprep.subr.bf16.mxu0 0
      %837 = vmatpush1.bf16.msra.mxu0 %v818
      %838 = vmatprep.subr.bf16.mxu0 0
      %839 = vmatpush1.bf16.msra.mxu0 %v819
      %840 = vmatprep.subr.bf16.mxu0 0
      %841 = vmatpush1.bf16.msra.mxu0 %v820
      %842 = vmatprep.subr.bf16.mxu0 0
      %843 = vmatpush1.bf16.msra.mxu0 %v821
      %844 = vmatprep.subr.bf16.mxu0 0
      %845 = vmatpush1.bf16.msra.mxu0 %v822
      %846 = vmatprep.subr.bf16.mxu0 0
      %847 = vmatpush1.bf16.msra.mxu0 %v823
      %848 = vmatprep.subr.bf16.mxu0 0
      %849 = vmatpush1.bf16.msra.mxu0 0
      %850 = vmatprep.subr.bf16.mxu0 0
      %851 = vmatpush1.bf16.msra.mxu0 0
      %852 = vmatprep.subr.bf16.mxu0 0
      %853 = vmatpush1.bf16.msra.mxu0 0
      %854 = vmatprep.subr.bf16.mxu0 0
      %855 = vmatpush1.bf16.msra.mxu0 0
      %856 = vmatprep.subr.bf16.mxu0 0
      %857 = vmatpush1.bf16.msra.mxu0 0
      %858 = vmatprep.subr.bf16.mxu0 0
      %859 = vmatpush1.bf16.msra.mxu0 0
      %860 = vmatprep.subr.bf16.mxu0 0
      %861 = vmatpush1.bf16.msra.mxu0 0
      %862 = vmatprep.subr.bf16.mxu0 0
      %863 = vmatpush1.bf16.msra.mxu0 0
      %864 = vmatprep.mubr.bf16.mxu0 0
      %865 = vmatmul.mubr.bf16.gmra.mrb[0].mxu0 %v752
      %v866 = vpop.f32.mrb[0].mxu0
      %v867 = vadd.f32 0.0, %v866
      %v868 = vpop.f32.mrb[0].mxu0
      %v869 = vpop.f32.mrb[0].mxu0
      %v870 = vadd.f32 0.0, %v869
      %v871 = vpop.f32.mrb[0].mxu0
      %872 = vmatprep.mubr.bf16.mxu0 0
      %873 = vmatmul.mubr.bf16.gmra.mrb[0].mxu0 %v761
      %v874 = vpop.f32.mrb[0].mxu0
      %v875 = vadd.f32 0.0, %v874
      %v876 = vpop.f32.mrb[0].mxu0
      %v877 = vpop.f32.mrb[0].mxu0
      %v878 = vadd.f32 0.0, %v877
      %v879 = vpop.f32.mrb[0].mxu0
      %880 = vmatprep.mubr.bf16.mxu0 0
      %881 = vmatmul.mubr.bf16.gmra.mrb[0].mxu0 %v770
      %v882 = vpop.f32.mrb[0].mxu0
      %v883 = vadd.f32 0.0, %v882
      %v884 = vpop.f32.mrb[0].mxu0
      %v885 = vpop.f32.mrb[0].mxu0
      %v886 = vadd.f32 0.0, %v885
      %v887 = vpop.f32.mrb[0].mxu0
      %888 = vmatprep.mubr.bf16.mxu0 0
      %889 = vmatmul.mubr.bf16.gmra.mrb[0].mxu0 %v779
      %v890 = vpop.f32.mrb[0].mxu0
      %v891 = vadd.f32 0.0, %v890
      %v892 = vpop.f32.mrb[0].mxu0
      %v893 = vpop.f32.mrb[0].mxu0
      %v894 = vadd.f32 0.0, %v893
      %v895 = vpop.f32.mrb[0].mxu0
      %896 = vdwg.mxu0
      %v897 = vsel %vm698, 1, 0
      %v898 = vsel %vm699, 1, 0
      %v899 = vsel %vm700, 1, 0
      %v900 = vsel %vm701, 1, 0
      %v901 = vsel %vm702, 1, 0
      %v902 = vsel %vm703, 1, 0
      %v903 = vsel %vm704, 1, 0
      %v904 = vsel %vm705, 1, 0
      %vm905 = vcmp.eq.s32.totalorder %v897, 1
      %vm906 = vcmp.eq.s32.totalorder %v898, 1
      %vm907 = vcmp.eq.s32.totalorder %v899, 1
      %vm908 = vcmp.eq.s32.totalorder %v900, 1
      %vm909 = vcmp.eq.s32.totalorder %v901, 1
      %vm910 = vcmp.eq.s32.totalorder %v902, 1
      %vm911 = vcmp.eq.s32.totalorder %v903, 1
      %vm912 = vcmp.eq.s32.totalorder %v904, 1
      %v913 = vsel %vm905, %v867, 0.0
      %v914 = vsel %vm906, %v870, 0.0
      %v915 = vsel %vm907, %v875, 0.0
      %v916 = vsel %vm908, %v878, 0.0
      %v917 = vsel %vm909, %v883, 0.0
      %v918 = vsel %vm910, %v886, 0.0
      %v919 = vsel %vm911, %v891, 0.0
      %v920 = vsel %vm912, %v894, 0.0
      %v921 = vadd.f32 %v913, 0.0
      %v922 = vadd.f32 %v914, 0.0
      %v923 = vadd.f32 %v915, 0.0
      %v924 = vadd.f32 %v916, 0.0
      %v925 = vadd.f32 %v917, 0.0
      %v926 = vadd.f32 %v918, 0.0
      %v927 = vadd.f32 %v919, 0.0
      %v928 = vadd.f32 %v920, 0.0
      %v929 = vld [vmem:[#allocation3] sm:$0xf0]
      %s930 = scalar_lea.vmem %s3, 64
      %v931 = vld [vmem:[%s930] sm:$0xf]
      %v932 = vld [vmem:[%s930 + $0x4] sm:$0xf]
      %v933 = vld [vmem:[%s930 + $0x8] sm:$0xf]
      %v934 = vld [vmem:[%s930 + $0xc] sm:$0xf]
      %v935 = vld [vmem:[%s930 + $0x10] sm:$0xf]
      %v936 = vld [vmem:[%s930 + $0x14] sm:$0xf]
      %v937 = vld [vmem:[%s930 + $0x18] sm:$0xf]
      %v938 = vld [vmem:[%s930 + $0x1c] sm:$0xf]
      %v939 = vld [vmem:[%s930 + $0x20] sm:$0xf]
      %v940 = vld [vmem:[%s930 + $0x24] sm:$0xf]
      %v941 = vld [vmem:[%s930 + $0x28] sm:$0xf]
      %v942 = vld [vmem:[%s930 + $0x2c] sm:$0xf]
      %v943 = vld [vmem:[%s930 + $0x30] sm:$0xf]
      %v944 = vld [vmem:[%s930 + $0x34] sm:$0xf]
      %v945 = vld [vmem:[%s930 + $0x38] sm:$0xf]
      %v946 = vld [vmem:[%s930 + $0x3c] sm:$0xf]
      %v952 = vrot.slane %v929, 4
      %v953 = vrot.slane %v715, 4
      %v954 = vsel %vm555, %v952, %v953
      %v955 = vrot.slane %v716, 4
      %v956 = vsel %vm555, %v953, %v955
      %v957 = vrot.slane %v717, 4
      %v958 = vsel %vm555, %v955, %v957
      %v959 = vrot.slane %v718, 4
      %v960 = vsel %vm555, %v957, %v959
      %v981 = vunpack.c.l.b16 %v931
      %v982 = vunpack.c.l.b16 %v932
      %v983 = vunpack.c.l.b16 %v933
      %v984 = vunpack.c.l.b16 %v934
      %v985 = vunpack.c.l.b16 %v935
      %v986 = vunpack.c.l.b16 %v936
      %v987 = vunpack.c.l.b16 %v937
      %v988 = vunpack.c.l.b16 %v938
      %v989 = vunpack.c.l.b16 %v939
      %v990 = vunpack.c.l.b16 %v940
      %v991 = vunpack.c.l.b16 %v941
      %v992 = vunpack.c.l.b16 %v942
      %v993 = vunpack.c.l.b16 %v943
      %v994 = vunpack.c.l.b16 %v944
      %v995 = vunpack.c.l.b16 %v945
      %v996 = vunpack.c.l.b16 %v946
      %v997 = vpack.c.b16 %v982, %v981
      %v998 = vpack.c.b16 %v984, %v983
      %v999 = vpack.c.b16 %v986, %v985
      %v1000 = vpack.c.b16 %v988, %v987
      %v1001 = vpack.c.b16 %v990, %v989
      %v1002 = vpack.c.b16 %v992, %v991
      %v1003 = vpack.c.b16 %v994, %v993
      %v1004 = vpack.c.b16 %v996, %v995
      %1013 = vmatprep.subr.bf16.mxu0 0
      %1014 = vmatpush1.bf16.msra.mxu0 %v997
      %1015 = vmatprep.subr.bf16.mxu0 0
      %1016 = vmatpush1.bf16.msra.mxu0 %v998
      %1017 = vmatprep.subr.bf16.mxu0 0
      %1018 = vmatpush1.bf16.msra.mxu0 %v999
      %1019 = vmatprep.subr.bf16.mxu0 0
      %1020 = vmatpush1.bf16.msra.mxu0 %v1000
      %1021 = vmatprep.subr.bf16.mxu0 0
      %1022 = vmatpush1.bf16.msra.mxu0 %v1001
      %1023 = vmatprep.subr.bf16.mxu0 0
      %1024 = vmatpush1.bf16.msra.mxu0 %v1002
      %1025 = vmatprep.subr.bf16.mxu0 0
      %1026 = vmatpush1.bf16.msra.mxu0 %v1003
      %1027 = vmatprep.subr.bf16.mxu0 0
      %1028 = vmatpush1.bf16.msra.mxu0 %v1004
      %1029 = vmatprep.subr.bf16.mxu0 0
      %1030 = vmatpush1.bf16.msra.mxu0 0
      %1031 = vmatprep.subr.bf16.mxu0 0
      %1032 = vmatpush1.bf16.msra.mxu0 0
      %1033 = vmatprep.subr.bf16.mxu0 0
      %1034 = vmatpush1.bf16.msra.mxu0 0
      %1035 = vmatprep.subr.bf16.mxu0 0
      %1036 = vmatpush1.bf16.msra.mxu0 0
      %1037 = vmatprep.subr.bf16.mxu0 0
      %1038 = vmatpush1.bf16.msra.mxu0 0
      %1039 = vmatprep.subr.bf16.mxu0 0
      %1040 = vmatpush1.bf16.msra.mxu0 0
      %1041 = vmatprep.subr.bf16.mxu0 0
      %1042 = vmatpush1.bf16.msra.mxu0 0
      %1043 = vmatprep.subr.bf16.mxu0 0
      %1044 = vmatpush1.bf16.msra.mxu0 0
      %1045 = vmatprep.mubr.bf16.mxu0 0
      %1046 = vmatmul.mubr.bf16.gmra.mrb[0].mxu0 %v954
      %v1047 = vpop.f32.mrb[0].mxu0
      %v1048 = vadd.f32 0.0, %v1047
      %v1049 = vpop.f32.mrb[0].mxu0
      %v1050 = vpop.f32.mrb[0].mxu0
      %v1051 = vadd.f32 0.0, %v1050
      %v1052 = vpop.f32.mrb[0].mxu0
      %1053 = vmatprep.mubr.bf16.mxu0 0
      %1054 = vmatmul.mubr.bf16.gmra.mrb[0].mxu0 %v956
      %v1055 = vpop.f32.mrb[0].mxu0
      %v1056 = vadd.f32 0.0, %v1055
      %v1057 = vpop.f32.mrb[0].mxu0
      %v1058 = vpop.f32.mrb[0].mxu0
      %v1059 = vadd.f32 0.0, %v1058
      %v1060 = vpop.f32.mrb[0].mxu0
      %1061 = vmatprep.mubr.bf16.mxu0 0
      %1062 = vmatmul.mubr.bf16.gmra.mrb[0].mxu0 %v958
      %v1063 = vpop.f32.mrb[0].mxu0
      %v1064 = vadd.f32 0.0, %v1063
      %v1065 = vpop.f32.mrb[0].mxu0
      %v1066 = vpop.f32.mrb[0].mxu0
      %v1067 = vadd.f32 0.0, %v1066
      %v1068 = vpop.f32.mrb[0].mxu0
      %1069 = vmatprep.mubr.bf16.mxu0 0
      %1070 = vmatmul.mubr.bf16.gmra.mrb[0].mxu0 %v960
      %v1071 = vpop.f32.mrb[0].mxu0
      %v1072 = vadd.f32 0.0, %v1071
      %v1073 = vpop.f32.mrb[0].mxu0
      %v1074 = vpop.f32.mrb[0].mxu0
      %v1075 = vadd.f32 0.0, %v1074
      %v1076 = vpop.f32.mrb[0].mxu0
      %1077 = vdwg.mxu0
      %v1078 = vadd.f32 %v921, %v1048
      %v1079 = vadd.f32 %v922, %v1051
      %v1080 = vadd.f32 %v923, %v1056
      %v1081 = vadd.f32 %v924, %v1059
      %v1082 = vadd.f32 %v925, %v1064
      %v1083 = vadd.f32 %v926, %v1067
      %v1084 = vadd.f32 %v927, %v1072
      %v1085 = vadd.f32 %v928, %v1075
      %v1086 = vld [vmem:[#allocation3 + $0x20] sm:$0x1f]
      %s1087 = scalar_lea.vmem %s3, 128
      %v1088 = vld [vmem:[%s1087] sm:$0xf]
      %v1089 = vld [vmem:[%s1087 + $0x4] sm:$0xf]
      %v1090 = vld [vmem:[%s1087 + $0x8] sm:$0xf]
      %v1091 = vld [vmem:[%s1087 + $0xc] sm:$0xf]
      %v1092 = vld [vmem:[%s1087 + $0x10] sm:$0xf]
      %v1093 = vld [vmem:[%s1087 + $0x14] sm:$0xf]
      %v1094 = vld [vmem:[%s1087 + $0x18] sm:$0xf]
      %v1095 = vld [vmem:[%s1087 + $0x1c] sm:$0xf]
      %v1096 = vld [vmem:[%s1087 + $0x20] sm:$0xf]
      %v1097 = vld [vmem:[%s1087 + $0x24] sm:$0xf]
      %v1098 = vld [vmem:[%s1087 + $0x28] sm:$0xf]
      %v1099 = vld [vmem:[%s1087 + $0x2c] sm:$0xf]
      %v1100 = vld [vmem:[%s1087 + $0x30] sm:$0xf]
      %v1101 = vld [vmem:[%s1087 + $0x34] sm:$0xf]
      %v1102 = vld [vmem:[%s1087 + $0x38] sm:$0xf]
      %v1103 = vld [vmem:[%s1087 + $0x3c] sm:$0xf]
      %vm1104 = vsmask.f32 3328
      %v1106 = vshrl.u32 %v929, 16
      %v1108 = vrot.slane %v1106, 4
      %v1109 = vshll.u32 %v929, 16
      %v1111 = vrot.slane %v1109, 5
      %v1112 = vor.u32 %v1108, %v1111
      %v1113 = vrot.slane %v745, 4
      %v1114 = vrot.slane %v748, 5
      %v1115 = vor.u32 %v1113, %v1114
      %v1116 = vsel %vm1104, %v1112, %v1115
      %v1117 = vrot.slane %v754, 4
      %v1118 = vrot.slane %v757, 5
      %v1119 = vor.u32 %v1117, %v1118
      %v1120 = vsel %vm1104, %v1115, %v1119
      %v1121 = vrot.slane %v763, 4
      %v1122 = vrot.slane %v766, 5
      %v1123 = vor.u32 %v1121, %v1122
      %v1124 = vsel %vm1104, %v1119, %v1123
      %v1126 = vshrl.u32 %v1086, 16
      %v1128 = vrot.slane %v1126, 4
      %v1129 = vshll.u32 %v1086, 16
      %v1131 = vrot.slane %v1129, 5
      %v1132 = vor.u32 %v1128, %v1131
      %v1133 = vsel %vm1104, %v1123, %v1132
      %v1154 = vunpack.c.l.b16 %v1088
      %v1155 = vunpack.c.l.b16 %v1089
      %v1156 = vunpack.c.l.b16 %v1090
      %v1157 = vunpack.c.l.b16 %v1091
      %v1158 = vunpack.c.l.b16 %v1092
      %v1159 = vunpack.c.l.b16 %v1093
      %v1160 = vunpack.c.l.b16 %v1094
      %v1161 = vunpack.c.l.b16 %v1095
      %v1162 = vunpack.c.l.b16 %v1096
      %v1163 = vunpack.c.l.b16 %v1097
      %v1164 = vunpack.c.l.b16 %v1098
      %v1165 = vunpack.c.l.b16 %v1099
      %v1166 = vunpack.c.l.b16 %v1100
      %v1167 = vunpack.c.l.b16 %v1101
      %v1168 = vunpack.c.l.b16 %v1102
      %v1169 = vunpack.c.l.b16 %v1103
      %v1170 = vpack.c.b16 %v1155, %v1154
      %v1171 = vpack.c.b16 %v1157, %v1156
      %v1172 = vpack.c.b16 %v1159, %v1158
      %v1173 = vpack.c.b16 %v1161, %v1160
      %v1174 = vpack.c.b16 %v1163, %v1162
      %v1175 = vpack.c.b16 %v1165, %v1164
      %v1176 = vpack.c.b16 %v1167, %v1166
      %v1177 = vpack.c.b16 %v1169, %v1168
      %1186 = vmatprep.subr.bf16.mxu0 0
      %1187 = vmatpush1.bf16.msra.mxu0 %v1170
      %1188 = vmatprep.subr.bf16.mxu0 0
      %1189 = vmatpush1.bf16.msra.mxu0 %v1171
      %1190 = vmatprep.subr.bf16.mxu0 0
      %1191 = vmatpush1.bf16.msra.mxu0 %v1172
      %1192 = vmatprep.subr.bf16.mxu0 0
      %1193 = vmatpush1.bf16.msra.mxu0 %v1173
      %1194 = vmatprep.subr.bf16.mxu0 0
      %1195 = vmatpush1.bf16.msra.mxu0 %v1174
      %1196 = vmatprep.subr.bf16.mxu0 0
      %1197 = vmatpush1.bf16.msra.mxu0 %v1175
      %1198 = vmatprep.subr.bf16.mxu0 0
      %1199 = vmatpush1.bf16.msra.mxu0 %v1176
      %1200 = vmatprep.subr.bf16.mxu0 0
      %1201 = vmatpush1.bf16.msra.mxu0 %v1177
      %1202 = vmatprep.subr.bf16.mxu0 0
      %1203 = vmatpush1.bf16.msra.mxu0 0
      %1204 = vmatprep.subr.bf16.mxu0 0
      %1205 = vmatpush1.bf16.msra.mxu0 0
      %1206 = vmatprep.subr.bf16.mxu0 0
      %1207 = vmatpush1.bf16.msra.mxu0 0
      %1208 = vmatprep.subr.bf16.mxu0 0
      %1209 = vmatpush1.bf16.msra.mxu0 0
      %1210 = vmatprep.subr.bf16.mxu0 0
      %1211 = vmatpush1.bf16.msra.mxu0 0
      %1212 = vmatprep.subr.bf16.mxu0 0
      %1213 = vmatpush1.bf16.msra.mxu0 0
      %1214 = vmatprep.subr.bf16.mxu0 0
      %1215 = vmatpush1.bf16.msra.mxu0 0
      %1216 = vmatprep.subr.bf16.mxu0 0
      %1217 = vmatpush1.bf16.msra.mxu0 0
      %1218 = vmatprep.mubr.bf16.mxu0 0
      %1219 = vmatmul.mubr.bf16.gmra.mrb[0].mxu0 %v1116
      %v1220 = vpop.f32.mrb[0].mxu0
      %v1221 = vadd.f32 0.0, %v1220
      %v1222 = vpop.f32.mrb[0].mxu0
      %v1223 = vpop.f32.mrb[0].mxu0
      %v1224 = vadd.f32 0.0, %v1223
      %v1225 = vpop.f32.mrb[0].mxu0
      %1226 = vmatprep.mubr.bf16.mxu0 0
      %1227 = vmatmul.mubr.bf16.gmra.mrb[0].mxu0 %v1120
      %v1228 = vpop.f32.mrb[0].mxu0
      %v1229 = vadd.f32 0.0, %v1228
      %v1230 = vpop.f32.mrb[0].mxu0
      %v1231 = vpop.f32.mrb[0].mxu0
      %v1232 = vadd.f32 0.0, %v1231
      %v1233 = vpop.f32.mrb[0].mxu0
      %1234 = vmatprep.mubr.bf16.mxu0 0
      %1235 = vmatmul.mubr.bf16.gmra.mrb[0].mxu0 %v1124
      %v1236 = vpop.f32.mrb[0].mxu0
      %v1237 = vadd.f32 0.0, %v1236
      %v1238 = vpop.f32.mrb[0].mxu0
      %v1239 = vpop.f32.mrb[0].mxu0
      %v1240 = vadd.f32 0.0, %v1239
      %v1241 = vpop.f32.mrb[0].mxu0
      %1242 = vmatprep.mubr.bf16.mxu0 0
      %1243 = vmatmul.mubr.bf16.gmra.mrb[0].mxu0 %v1133
      %v1244 = vpop.f32.mrb[0].mxu0
      %v1245 = vadd.f32 0.0, %v1244
      %v1246 = vpop.f32.mrb[0].mxu0
      %v1247 = vpop.f32.mrb[0].mxu0
      %v1248 = vadd.f32 0.0, %v1247
      %v1249 = vpop.f32.mrb[0].mxu0
      %1250 = vdwg.mxu0
      %v1251 = vsel %vm706, 1, 0
      %v1252 = vsel %vm707, 1, 0
      %v1253 = vsel %vm708, 1, 0
      %v1254 = vsel %vm709, 1, 0
      %v1255 = vsel %vm710, 1, 0
      %v1256 = vsel %vm711, 1, 0
      %v1257 = vsel %vm712, 1, 0
      %v1258 = vsel %vm713, 1, 0
      %vm1259 = vcmp.eq.s32.totalorder %v1251, 1
      %vm1260 = vcmp.eq.s32.totalorder %v1252, 1
      %vm1261 = vcmp.eq.s32.totalorder %v1253, 1
      %vm1262 = vcmp.eq.s32.totalorder %v1254, 1
      %vm1263 = vcmp.eq.s32.totalorder %v1255, 1
      %vm1264 = vcmp.eq.s32.totalorder %v1256, 1
      %vm1265 = vcmp.eq.s32.totalorder %v1257, 1
      %vm1266 = vcmp.eq.s32.totalorder %v1258, 1
      %v1267 = vsel %vm1259, %v1221, 0.0
      %v1268 = vsel %vm1260, %v1224, 0.0
      %v1269 = vsel %vm1261, %v1229, 0.0
      %v1270 = vsel %vm1262, %v1232, 0.0
      %v1271 = vsel %vm1263, %v1237, 0.0
      %v1272 = vsel %vm1264, %v1240, 0.0
      %v1273 = vsel %vm1265, %v1245, 0.0
      %v1274 = vsel %vm1266, %v1248, 0.0
      %v1275 = vadd.f32 %v1078, %v1267
      %v1276 = vadd.f32 %v1079, %v1268
      %v1277 = vadd.f32 %v1080, %v1269
      %v1278 = vadd.f32 %v1081, %v1270
      %v1279 = vadd.f32 %v1082, %v1271
      %v1280 = vadd.f32 %v1083, %v1272
      %v1281 = vadd.f32 %v1084, %v1273
      %v1282 = vadd.f32 %v1085, %v1274
      %v1283 = vld [vmem:[#allocation3 + $0x8] sm:$0xf8]
      %v1284 = vld [vmem:[#allocation3 + $0x10] sm:$0xff]
      %v1285 = vld [vmem:[#allocation3 + $0x18] sm:$0xff]
      %v1286 = vld [vmem:[#allocation3 + $0x20] sm:$0xff]
      %v1287 = vld [vmem:[#allocation3 + $0x28] sm:$0xf]
      %s1288 = scalar_lea.vmem %s3, 192
      %v1289 = vld [vmem:[%s1288] sm:$0xf]
      %v1290 = vld [vmem:[%s1288 + $0x4] sm:$0xf]
      %v1291 = vld [vmem:[%s1288 + $0x8] sm:$0xf]
      %v1292 = vld [vmem:[%s1288 + $0xc] sm:$0xf]
      %v1293 = vld [vmem:[%s1288 + $0x10] sm:$0xf]
      %v1294 = vld [vmem:[%s1288 + $0x14] sm:$0xf]
      %v1295 = vld [vmem:[%s1288 + $0x18] sm:$0xf]
      %v1296 = vld [vmem:[%s1288 + $0x1c] sm:$0xf]
      %v1297 = vld [vmem:[%s1288 + $0x20] sm:$0xf]
      %v1298 = vld [vmem:[%s1288 + $0x24] sm:$0xf]
      %v1299 = vld [vmem:[%s1288 + $0x28] sm:$0xf]
      %v1300 = vld [vmem:[%s1288 + $0x2c] sm:$0xf]
      %v1301 = vld [vmem:[%s1288 + $0x30] sm:$0xf]
      %v1302 = vld [vmem:[%s1288 + $0x34] sm:$0xf]
      %v1303 = vld [vmem:[%s1288 + $0x38] sm:$0xf]
      %v1304 = vld [vmem:[%s1288 + $0x3c] sm:$0xf]
      %v1306 = vshrl.u32 %v1283, 16
      %v1308 = vrot.slane %v1306, 3
      %v1309 = vshll.u32 %v1283, 16
      %v1311 = vrot.slane %v1309, 4
      %v1312 = vor.u32 %v1308, %v1311
      %v1314 = vshrl.u32 %v1284, 16
      %v1316 = vrot.slane %v1314, 3
      %v1317 = vshll.u32 %v1284, 16
      %v1319 = vrot.slane %v1317, 4
      %v1320 = vor.u32 %v1316, %v1319
      %v1321 = vsel %vm735, %v1312, %v1320
      %v1323 = vshrl.u32 %v1285, 16
      %v1325 = vrot.slane %v1323, 3
      %v1326 = vshll.u32 %v1285, 16
      %v1328 = vrot.slane %v1326, 4
      %v1329 = vor.u32 %v1325, %v1328
      %v1330 = vsel %vm735, %v1320, %v1329
      %v1332 = vshrl.u32 %v1286, 16
      %v1334 = vrot.slane %v1332, 3
      %v1335 = vshll.u32 %v1286, 16
      %v1337 = vrot.slane %v1335, 4
      %v1338 = vor.u32 %v1334, %v1337
      %v1339 = vsel %vm735, %v1329, %v1338
      %v1341 = vshrl.u32 %v1287, 16
      %v1343 = vrot.slane %v1341, 3
      %v1344 = vshll.u32 %v1287, 16
      %v1346 = vrot.slane %v1344, 4
      %v1347 = vor.u32 %v1343, %v1346
      %v1348 = vsel %vm735, %v1338, %v1347
      %v1369 = vunpack.c.l.b16 %v1289
      %v1370 = vunpack.c.l.b16 %v1290
      %v1371 = vunpack.c.l.b16 %v1291
      %v1372 = vunpack.c.l.b16 %v1292
      %v1373 = vunpack.c.l.b16 %v1293
      %v1374 = vunpack.c.l.b16 %v1294
      %v1375 = vunpack.c.l.b16 %v1295
      %v1376 = vunpack.c.l.b16 %v1296
      %v1377 = vunpack.c.l.b16 %v1297
      %v1378 = vunpack.c.l.b16 %v1298
      %v1379 = vunpack.c.l.b16 %v1299
      %v1380 = vunpack.c.l.b16 %v1300
      %v1381 = vunpack.c.l.b16 %v1301
      %v1382 = vunpack.c.l.b16 %v1302
      %v1383 = vunpack.c.l.b16 %v1303
      %v1384 = vunpack.c.l.b16 %v1304
      %v1385 = vpack.c.b16 %v1370, %v1369
      %v1386 = vpack.c.b16 %v1372, %v1371
      %v1387 = vpack.c.b16 %v1374, %v1373
      %v1388 = vpack.c.b16 %v1376, %v1375
      %v1389 = vpack.c.b16 %v1378, %v1377
      %v1390 = vpack.c.b16 %v1380, %v1379
      %v1391 = vpack.c.b16 %v1382, %v1381
      %v1392 = vpack.c.b16 %v1384, %v1383
      %1401 = vmatprep.subr.bf16.mxu0 0
      %1402 = vmatpush1.bf16.msra.mxu0 %v1385
      %1403 = vmatprep.subr.bf16.mxu0 0
      %1404 = vmatpush1.bf16.msra.mxu0 %v1386
      %1405 = vmatprep.subr.bf16.mxu0 0
      %1406 = vmatpush1.bf16.msra.mxu0 %v1387
      %1407 = vmatprep.subr.bf16.mxu0 0
      %1408 = vmatpush1.bf16.msra.mxu0 %v1388
      %1409 = vmatprep.subr.bf16.mxu0 0
      %1410 = vmatpush1.bf16.msra.mxu0 %v1389
      %1411 = vmatprep.subr.bf16.mxu0 0
      %1412 = vmatpush1.bf16.msra.mxu0 %v1390
      %1413 = vmatprep.subr.bf16.mxu0 0
      %1414 = vmatpush1.bf16.msra.mxu0 %v1391
      %1415 = vmatprep.subr.bf16.mxu0 0
      %1416 = vmatpush1.bf16.msra.mxu0 %v1392
      %1417 = vmatprep.subr.bf16.mxu0 0
      %1418 = vmatpush1.bf16.msra.mxu0 0
      %1419 = vmatprep.subr.bf16.mxu0 0
      %1420 = vmatpush1.bf16.msra.mxu0 0
      %1421 = vmatprep.subr.bf16.mxu0 0
      %1422 = vmatpush1.bf16.msra.mxu0 0
      %1423 = vmatprep.subr.bf16.mxu0 0
      %1424 = vmatpush1.bf16.msra.mxu0 0
      %1425 = vmatprep.subr.bf16.mxu0 0
      %1426 = vmatpush1.bf16.msra.mxu0 0
      %1427 = vmatprep.subr.bf16.mxu0 0
      %1428 = vmatpush1.bf16.msra.mxu0 0
      %1429 = vmatprep.subr.bf16.mxu0 0
      %1430 = vmatpush1.bf16.msra.mxu0 0
      %1431 = vmatprep.subr.bf16.mxu0 0
      %1432 = vmatpush1.bf16.msra.mxu0 0
      %1433 = vmatprep.mubr.bf16.mxu0 0
      %1434 = vmatmul.mubr.bf16.gmra.mrb[0].mxu0 %v1321
      %v1435 = vpop.f32.mrb[0].mxu0
      %v1436 = vadd.f32 0.0, %v1435
      %v1437 = vpop.f32.mrb[0].mxu0
      %v1438 = vpop.f32.mrb[0].mxu0
      %v1439 = vadd.f32 0.0, %v1438
      %v1440 = vpop.f32.mrb[0].mxu0
      %1441 = vmatprep.mubr.bf16.mxu0 0
      %1442 = vmatmul.mubr.bf16.gmra.mrb[0].mxu0 %v1330
      %v1443 = vpop.f32.mrb[0].mxu0
      %v1444 = vadd.f32 0.0, %v1443
      %v1445 = vpop.f32.mrb[0].mxu0
      %v1446 = vpop.f32.mrb[0].mxu0
      %v1447 = vadd.f32 0.0, %v1446
      %v1448 = vpop.f32.mrb[0].mxu0
      %1449 = vmatprep.mubr.bf16.mxu0 0
      %1450 = vmatmul.mubr.bf16.gmra.mrb[0].mxu0 %v1339
      %v1451 = vpop.f32.mrb[0].mxu0
      %v1452 = vadd.f32 0.0, %v1451
      %v1453 = vpop.f32.mrb[0].mxu0
      %v1454 = vpop.f32.mrb[0].mxu0
      %v1455 = vadd.f32 0.0, %v1454
      %v1456 = vpop.f32.mrb[0].mxu0
      %1457 = vmatprep.mubr.bf16.mxu0 0
      %1458 = vmatmul.mubr.bf16.gmra.mrb[0].mxu0 %v1348
      %v1459 = vpop.f32.mrb[0].mxu0
      %v1460 = vadd.f32 0.0, %v1459
      %v1461 = vpop.f32.mrb[0].mxu0
      %v1462 = vpop.f32.mrb[0].mxu0
      %v1463 = vadd.f32 0.0, %v1462
      %v1464 = vpop.f32.mrb[0].mxu0
      %1465 = vdwg.mxu0
      %v1466 = vsel %vm905, %v1436, 0.0
      %v1467 = vsel %vm906, %v1439, 0.0
      %v1468 = vsel %vm907, %v1444, 0.0
      %v1469 = vsel %vm908, %v1447, 0.0
      %v1470 = vsel %vm909, %v1452, 0.0
      %v1471 = vsel %vm910, %v1455, 0.0
      %v1472 = vsel %vm911, %v1460, 0.0
      %v1473 = vsel %vm912, %v1463, 0.0
      %v1474 = vadd.f32 %v1275, %v1466
      %v1475 = vadd.f32 %v1276, %v1467
      %v1476 = vadd.f32 %v1277, %v1468
      %v1477 = vadd.f32 %v1278, %v1469
      %v1478 = vadd.f32 %v1279, %v1470
      %v1479 = vadd.f32 %v1280, %v1471
      %v1480 = vadd.f32 %v1281, %v1472
      %v1481 = vadd.f32 %v1282, %v1473
      %v1482 = vld [vmem:[#allocation3 + $0x8] sm:$0xf0]
      %s1483 = scalar_lea.vmem %s3, 256
      %v1484 = vld [vmem:[%s1483] sm:$0xf]
      %v1485 = vld [vmem:[%s1483 + $0x4] sm:$0xf]
      %v1486 = vld [vmem:[%s1483 + $0x8] sm:$0xf]
      %v1487 = vld [vmem:[%s1483 + $0xc] sm:$0xf]
      %v1488 = vld [vmem:[%s1483 + $0x10] sm:$0xf]
      %v1489 = vld [vmem:[%s1483 + $0x14] sm:$0xf]
      %v1490 = vld [vmem:[%s1483 + $0x18] sm:$0xf]
      %v1491 = vld [vmem:[%s1483 + $0x1c] sm:$0xf]
      %v1492 = vld [vmem:[%s1483 + $0x20] sm:$0xf]
      %v1493 = vld [vmem:[%s1483 + $0x24] sm:$0xf]
      %v1494 = vld [vmem:[%s1483 + $0x28] sm:$0xf]
      %v1495 = vld [vmem:[%s1483 + $0x2c] sm:$0xf]
      %v1496 = vld [vmem:[%s1483 + $0x30] sm:$0xf]
      %v1497 = vld [vmem:[%s1483 + $0x34] sm:$0xf]
      %v1498 = vld [vmem:[%s1483 + $0x38] sm:$0xf]
      %v1499 = vld [vmem:[%s1483 + $0x3c] sm:$0xf]
      %v1505 = vrot.slane %v1482, 4
      %v1506 = vrot.slane %v1284, 4
      %v1507 = vsel %vm555, %v1505, %v1506
      %v1508 = vrot.slane %v1285, 4
      %v1509 = vsel %vm555, %v1506, %v1508
      %v1510 = vrot.slane %v1286, 4
      %v1511 = vsel %vm555, %v1508, %v1510
      %v1512 = vrot.slane %v1287, 4
      %v1513 = vsel %vm555, %v1510, %v1512
      %v1534 = vunpack.c.l.b16 %v1484
      %v1535 = vunpack.c.l.b16 %v1485
      %v1536 = vunpack.c.l.b16 %v1486
      %v1537 = vunpack.c.l.b16 %v1487
      %v1538 = vunpack.c.l.b16 %v1488
      %v1539 = vunpack.c.l.b16 %v1489
      %v1540 = vunpack.c.l.b16 %v1490
      %v1541 = vunpack.c.l.b16 %v1491
      %v1542 = vunpack.c.l.b16 %v1492
      %v1543 = vunpack.c.l.b16 %v1493
      %v1544 = vunpack.c.l.b16 %v1494
      %v1545 = vunpack.c.l.b16 %v1495
      %v1546 = vunpack.c.l.b16 %v1496
      %v1547 = vunpack.c.l.b16 %v1497
      %v1548 = vunpack.c.l.b16 %v1498
      %v1549 = vunpack.c.l.b16 %v1499
      %v1550 = vpack.c.b16 %v1535, %v1534
      %v1551 = vpack.c.b16 %v1537, %v1536
      %v1552 = vpack.c.b16 %v1539, %v1538
      %v1553 = vpack.c.b16 %v1541, %v1540
      %v1554 = vpack.c.b16 %v1543, %v1542
      %v1555 = vpack.c.b16 %v1545, %v1544
      %v1556 = vpack.c.b16 %v1547, %v1546
      %v1557 = vpack.c.b16 %v1549, %v1548
      %1566 = vmatprep.subr.bf16.mxu0 0
      %1567 = vmatpush1.bf16.msra.mxu0 %v1550
      %1568 = vmatprep.subr.bf16.mxu0 0
      %1569 = vmatpush1.bf16.msra.mxu0 %v1551
      %1570 = vmatprep.subr.bf16.mxu0 0
      %1571 = vmatpush1.bf16.msra.mxu0 %v1552
      %1572 = vmatprep.subr.bf16.mxu0 0
      %1573 = vmatpush1.bf16.msra.mxu0 %v1553
      %1574 = vmatprep.subr.bf16.mxu0 0
      %1575 = vmatpush1.bf16.msra.mxu0 %v1554
      %1576 = vmatprep.subr.bf16.mxu0 0
      %1577 = vmatpush1.bf16.msra.mxu0 %v1555
      %1578 = vmatprep.subr.bf16.mxu0 0
      %1579 = vmatpush1.bf16.msra.mxu0 %v1556
      %1580 = vmatprep.subr.bf16.mxu0 0
      %1581 = vmatpush1.bf16.msra.mxu0 %v1557
      %1582 = vmatprep.subr.bf16.mxu0 0
      %1583 = vmatpush1.bf16.msra.mxu0 0
      %1584 = vmatprep.subr.bf16.mxu0 0
      %1585 = vmatpush1.bf16.msra.mxu0 0
      %1586 = vmatprep.subr.bf16.mxu0 0
      %1587 = vmatpush1.bf16.msra.mxu0 0
      %1588 = vmatprep.subr.bf16.mxu0 0
      %1589 = vmatpush1.bf16.msra.mxu0 0
      %1590 = vmatprep.subr.bf16.mxu0 0
      %1591 = vmatpush1.bf16.msra.mxu0 0
      %1592 = vmatprep.subr.bf16.mxu0 0
      %1593 = vmatpush1.bf16.msra.mxu0 0
      %1594 = vmatprep.subr.bf16.mxu0 0
      %1595 = vmatpush1.bf16.msra.mxu0 0
      %1596 = vmatprep.subr.bf16.mxu0 0
      %1597 = vmatpush1.bf16.msra.mxu0 0
      %1598 = vmatprep.mubr.bf16.mxu0 0
      %1599 = vmatmul.mubr.bf16.gmra.mrb[0].mxu0 %v1507
      %v1600 = vpop.f32.mrb[0].mxu0
      %v1601 = vadd.f32 0.0, %v1600
      %v1602 = vpop.f32.mrb[0].mxu0
      %v1603 = vpop.f32.mrb[0].mxu0
      %v1604 = vadd.f32 0.0, %v1603
      %v1605 = vpop.f32.mrb[0].mxu0
      %1606 = vmatprep.mubr.bf16.mxu0 0
      %1607 = vmatmul.mubr.bf16.gmra.mrb[0].mxu0 %v1509
      %v1608 = vpop.f32.mrb[0].mxu0
      %v1609 = vadd.f32 0.0, %v1608
      %v1610 = vpop.f32.mrb[0].mxu0
      %v1611 = vpop.f32.mrb[0].mxu0
      %v1612 = vadd.f32 0.0, %v1611
      %v1613 = vpop.f32.mrb[0].mxu0
      %1614 = vmatprep.mubr.bf16.mxu0 0
      %1615 = vmatmul.mubr.bf16.gmra.mrb[0].mxu0 %v1511
      %v1616 = vpop.f32.mrb[0].mxu0
      %v1617 = vadd.f32 0.0, %v1616
      %v1618 = vpop.f32.mrb[0].mxu0
      %v1619 = vpop.f32.mrb[0].mxu0
      %v1620 = vadd.f32 0.0, %v1619
      %v1621 = vpop.f32.mrb[0].mxu0
      %1622 = vmatprep.mubr.bf16.mxu0 0
      %1623 = vmatmul.mubr.bf16.gmra.mrb[0].mxu0 %v1513
      %v1624 = vpop.f32.mrb[0].mxu0
      %v1625 = vadd.f32 0.0, %v1624
      %v1626 = vpop.f32.mrb[0].mxu0
      %v1627 = vpop.f32.mrb[0].mxu0
      %v1628 = vadd.f32 0.0, %v1627
      %v1629 = vpop.f32.mrb[0].mxu0
      %1630 = vdwg.mxu0
      %v1631 = vadd.f32 %v1474, %v1601
      %v1632 = vadd.f32 %v1475, %v1604
      %v1633 = vadd.f32 %v1476, %v1609
      %v1634 = vadd.f32 %v1477, %v1612
      %v1635 = vadd.f32 %v1478, %v1617
      %v1636 = vadd.f32 %v1479, %v1620
      %v1637 = vadd.f32 %v1480, %v1625
      %v1638 = vadd.f32 %v1481, %v1628
      %v1639 = vld [vmem:[#allocation3 + $0x28] sm:$0x1f]
      %s1640 = scalar_lea.vmem %s3, 320
      %v1641 = vld [vmem:[%s1640] sm:$0xf]
      %v1642 = vld [vmem:[%s1640 + $0x4] sm:$0xf]
      %v1643 = vld [vmem:[%s1640 + $0x8] sm:$0xf]
      %v1644 = vld [vmem:[%s1640 + $0xc] sm:$0xf]
      %v1645 = vld [vmem:[%s1640 + $0x10] sm:$0xf]
      %v1646 = vld [vmem:[%s1640 + $0x14] sm:$0xf]
      %v1647 = vld [vmem:[%s1640 + $0x18] sm:$0xf]
      %v1648 = vld [vmem:[%s1640 + $0x1c] sm:$0xf]
      %v1649 = vld [vmem:[%s1640 + $0x20] sm:$0xf]
      %v1650 = vld [vmem:[%s1640 + $0x24] sm:$0xf]
      %v1651 = vld [vmem:[%s1640 + $0x28] sm:$0xf]
      %v1652 = vld [vmem:[%s1640 + $0x2c] sm:$0xf]
      %v1653 = vld [vmem:[%s1640 + $0x30] sm:$0xf]
      %v1654 = vld [vmem:[%s1640 + $0x34] sm:$0xf]
      %v1655 = vld [vmem:[%s1640 + $0x38] sm:$0xf]
      %v1656 = vld [vmem:[%s1640 + $0x3c] sm:$0xf]
      %v1658 = vshrl.u32 %v1482, 16
      %v1660 = vrot.slane %v1658, 4
      %v1661 = vshll.u32 %v1482, 16
      %v1663 = vrot.slane %v1661, 5
      %v1664 = vor.u32 %v1660, %v1663
      %v1665 = vrot.slane %v1314, 4
      %v1666 = vrot.slane %v1317, 5
      %v1667 = vor.u32 %v1665, %v1666
      %v1668 = vsel %vm1104, %v1664, %v1667
      %v1669 = vrot.slane %v1323, 4
      %v1670 = vrot.slane %v1326, 5
      %v1671 = vor.u32 %v1669, %v1670
      %v1672 = vsel %vm1104, %v1667, %v1671
      %v1673 = vrot.slane %v1332, 4
      %v1674 = vrot.slane %v1335, 5
      %v1675 = vor.u32 %v1673, %v1674
      %v1676 = vsel %vm1104, %v1671, %v1675
      %v1678 = vshrl.u32 %v1639, 16
      %v1680 = vrot.slane %v1678, 4
      %v1681 = vshll.u32 %v1639, 16
      %v1683 = vrot.slane %v1681, 5
      %v1684 = vor.u32 %v1680, %v1683
      %v1685 = vsel %vm1104, %v1675, %v1684
      %v1706 = vunpack.c.l.b16 %v1641
      %v1707 = vunpack.c.l.b16 %v1642
      %v1708 = vunpack.c.l.b16 %v1643
      %v1709 = vunpack.c.l.b16 %v1644
      %v1710 = vunpack.c.l.b16 %v1645
      %v1711 = vunpack.c.l.b16 %v1646
      %v1712 = vunpack.c.l.b16 %v1647
      %v1713 = vunpack.c.l.b16 %v1648
      %v1714 = vunpack.c.l.b16 %v1649
      %v1715 = vunpack.c.l.b16 %v1650
      %v1716 = vunpack.c.l.b16 %v1651
      %v1717 = vunpack.c.l.b16 %v1652
      %v1718 = vunpack.c.l.b16 %v1653
      %v1719 = vunpack.c.l.b16 %v1654
      %v1720 = vunpack.c.l.b16 %v1655
      %v1721 = vunpack.c.l.b16 %v1656
      %v1722 = vpack.c.b16 %v1707, %v1706
      %v1723 = vpack.c.b16 %v1709, %v1708
      %v1724 = vpack.c.b16 %v1711, %v1710
      %v1725 = vpack.c.b16 %v1713, %v1712
      %v1726 = vpack.c.b16 %v1715, %v1714
      %v1727 = vpack.c.b16 %v1717, %v1716
      %v1728 = vpack.c.b16 %v1719, %v1718
      %v1729 = vpack.c.b16 %v1721, %v1720
      %1738 = vmatprep.subr.bf16.mxu0 0
      %1739 = vmatpush1.bf16.msra.mxu0 %v1722
      %1740 = vmatprep.subr.bf16.mxu0 0
      %1741 = vmatpush1.bf16.msra.mxu0 %v1723
      %1742 = vmatprep.subr.bf16.mxu0 0
      %1743 = vmatpush1.bf16.msra.mxu0 %v1724
      %1744 = vmatprep.subr.bf16.mxu0 0
      %1745 = vmatpush1.bf16.msra.mxu0 %v1725
      %1746 = vmatprep.subr.bf16.mxu0 0
      %1747 = vmatpush1.bf16.msra.mxu0 %v1726
      %1748 = vmatprep.subr.bf16.mxu0 0
      %1749 = vmatpush1.bf16.msra.mxu0 %v1727
      %1750 = vmatprep.subr.bf16.mxu0 0
      %1751 = vmatpush1.bf16.msra.mxu0 %v1728
      %1752 = vmatprep.subr.bf16.mxu0 0
      %1753 = vmatpush1.bf16.msra.mxu0 %v1729
      %1754 = vmatprep.subr.bf16.mxu0 0
      %1755 = vmatpush1.bf16.msra.mxu0 0
      %1756 = vmatprep.subr.bf16.mxu0 0
      %1757 = vmatpush1.bf16.msra.mxu0 0
      %1758 = vmatprep.subr.bf16.mxu0 0
      %1759 = vmatpush1.bf16.msra.mxu0 0
      %1760 = vmatprep.subr.bf16.mxu0 0
      %1761 = vmatpush1.bf16.msra.mxu0 0
      %1762 = vmatprep.subr.bf16.mxu0 0
      %1763 = vmatpush1.bf16.msra.mxu0 0
      %1764 = vmatprep.subr.bf16.mxu0 0
      %1765 = vmatpush1.bf16.msra.mxu0 0
      %1766 = vmatprep.subr.bf16.mxu0 0
      %1767 = vmatpush1.bf16.msra.mxu0 0
      %1768 = vmatprep.subr.bf16.mxu0 0
      %1769 = vmatpush1.bf16.msra.mxu0 0
      %1770 = vmatprep.mubr.bf16.mxu0 0
      %1771 = vmatmul.mubr.bf16.gmra.mrb[0].mxu0 %v1668
      %v1772 = vpop.f32.mrb[0].mxu0
      %v1773 = vadd.f32 0.0, %v1772
      %v1774 = vpop.f32.mrb[0].mxu0
      %v1775 = vpop.f32.mrb[0].mxu0
      %v1776 = vadd.f32 0.0, %v1775
      %v1777 = vpop.f32.mrb[0].mxu0
      %1778 = vmatprep.mubr.bf16.mxu0 0
      %1779 = vmatmul.mubr.bf16.gmra.mrb[0].mxu0 %v1672
      %v1780 = vpop.f32.mrb[0].mxu0
      %v1781 = vadd.f32 0.0, %v1780
      %v1782 = vpop.f32.mrb[0].mxu0
      %v1783 = vpop.f32.mrb[0].mxu0
      %v1784 = vadd.f32 0.0, %v1783
      %v1785 = vpop.f32.mrb[0].mxu0
      %1786 = vmatprep.mubr.bf16.mxu0 0
      %1787 = vmatmul.mubr.bf16.gmra.mrb[0].mxu0 %v1676
      %v1788 = vpop.f32.mrb[0].mxu0
      %v1789 = vadd.f32 0.0, %v1788
      %v1790 = vpop.f32.mrb[0].mxu0
      %v1791 = vpop.f32.mrb[0].mxu0
      %v1792 = vadd.f32 0.0, %v1791
      %v1793 = vpop.f32.mrb[0].mxu0
      %1794 = vmatprep.mubr.bf16.mxu0 0
      %1795 = vmatmul.mubr.bf16.gmra.mrb[0].mxu0 %v1685
      %v1796 = vpop.f32.mrb[0].mxu0
      %v1797 = vadd.f32 0.0, %v1796
      %v1798 = vpop.f32.mrb[0].mxu0
      %v1799 = vpop.f32.mrb[0].mxu0
      %v1800 = vadd.f32 0.0, %v1799
      %v1801 = vpop.f32.mrb[0].mxu0
      %1802 = vdwg.mxu0
      %v1803 = vsel %vm1259, %v1773, 0.0
      %v1804 = vsel %vm1260, %v1776, 0.0
      %v1805 = vsel %vm1261, %v1781, 0.0
      %v1806 = vsel %vm1262, %v1784, 0.0
      %v1807 = vsel %vm1263, %v1789, 0.0
      %v1808 = vsel %vm1264, %v1792, 0.0
      %v1809 = vsel %vm1265, %v1797, 0.0
      %v1810 = vsel %vm1266, %v1800, 0.0
      %v1811 = vadd.f32 %v1631, %v1803
      %v1812 = vadd.f32 %v1632, %v1804
      %v1813 = vadd.f32 %v1633, %v1805
      %v1814 = vadd.f32 %v1634, %v1806
      %v1815 = vadd.f32 %v1635, %v1807
      %v1816 = vadd.f32 %v1636, %v1808
      %v1817 = vadd.f32 %v1637, %v1809
      %v1818 = vadd.f32 %v1638, %v1810
      %v1819 = vld [vmem:[#allocation3 + $0x10] sm:$0xf8]
      %v1820 = vld [vmem:[#allocation3 + $0x18] sm:$0xff]
      %v1821 = vld [vmem:[#allocation3 + $0x20] sm:$0xff]
      %v1822 = vld [vmem:[#allocation3 + $0x28] sm:$0xff]
      %v1823 = vld [vmem:[#allocation3 + $0x30] sm:$0xf]
      %s1824 = scalar_lea.vmem %s3, 384
      %v1825 = vld [vmem:[%s1824] sm:$0xf]
      %v1826 = vld [vmem:[%s1824 + $0x4] sm:$0xf]
      %v1827 = vld [vmem:[%s1824 + $0x8] sm:$0xf]
      %v1828 = vld [vmem:[%s1824 + $0xc] sm:$0xf]
      %v1829 = vld [vmem:[%s1824 + $0x10] sm:$0xf]
      %v1830 = vld [vmem:[%s1824 + $0x14] sm:$0xf]
      %v1831 = vld [vmem:[%s1824 + $0x18] sm:$0xf]
      %v1832 = vld [vmem:[%s1824 + $0x1c] sm:$0xf]
      %v1833 = vld [vmem:[%s1824 + $0x20] sm:$0xf]
      %v1834 = vld [vmem:[%s1824 + $0x24] sm:$0xf]
      %v1835 = vld [vmem:[%s1824 + $0x28] sm:$0xf]
      %v1836 = vld [vmem:[%s1824 + $0x2c] sm:$0xf]
      %v1837 = vld [vmem:[%s1824 + $0x30] sm:$0xf]
      %v1838 = vld [vmem:[%s1824 + $0x34] sm:$0xf]
      %v1839 = vld [vmem:[%s1824 + $0x38] sm:$0xf]
      %v1840 = vld [vmem:[%s1824 + $0x3c] sm:$0xf]
      %v1842 = vshrl.u32 %v1819, 16
      %v1844 = vrot.slane %v1842, 3
      %v1845 = vshll.u32 %v1819, 16
      %v1847 = vrot.slane %v1845, 4
      %v1848 = vor.u32 %v1844, %v1847
      %v1850 = vshrl.u32 %v1820, 16
      %v1852 = vrot.slane %v1850, 3
      %v1853 = vshll.u32 %v1820, 16
      %v1855 = vrot.slane %v1853, 4
      %v1856 = vor.u32 %v1852, %v1855
      %v1857 = vsel %vm735, %v1848, %v1856
      %v1859 = vshrl.u32 %v1821, 16
      %v1861 = vrot.slane %v1859, 3
      %v1862 = vshll.u32 %v1821, 16
      %v1864 = vrot.slane %v1862, 4
      %v1865 = vor.u32 %v1861, %v1864
      %v1866 = vsel %vm735, %v1856, %v1865
      %v1868 = vshrl.u32 %v1822, 16
      %v1870 = vrot.slane %v1868, 3
      %v1871 = vshll.u32 %v1822, 16
      %v1873 = vrot.slane %v1871, 4
      %v1874 = vor.u32 %v1870, %v1873
      %v1875 = vsel %vm735, %v1865, %v1874
      %v1877 = vshrl.u32 %v1823, 16
      %v1879 = vrot.slane %v1877, 3
      %v1880 = vshll.u32 %v1823, 16
      %v1882 = vrot.slane %v1880, 4
      %v1883 = vor.u32 %v1879, %v1882
      %v1884 = vsel %vm735, %v1874, %v1883
      %v1905 = vunpack.c.l.b16 %v1825
      %v1906 = vunpack.c.l.b16 %v1826
      %v1907 = vunpack.c.l.b16 %v1827
      %v1908 = vunpack.c.l.b16 %v1828
      %v1909 = vunpack.c.l.b16 %v1829
      %v1910 = vunpack.c.l.b16 %v1830
      %v1911 = vunpack.c.l.b16 %v1831
      %v1912 = vunpack.c.l.b16 %v1832
      %v1913 = vunpack.c.l.b16 %v1833
      %v1914 = vunpack.c.l.b16 %v1834
      %v1915 = vunpack.c.l.b16 %v1835
      %v1916 = vunpack.c.l.b16 %v1836
      %v1917 = vunpack.c.l.b16 %v1837
      %v1918 = vunpack.c.l.b16 %v1838
      %v1919 = vunpack.c.l.b16 %v1839
      %v1920 = vunpack.c.l.b16 %v1840
      %v1921 = vpack.c.b16 %v1906, %v1905
      %v1922 = vpack.c.b16 %v1908, %v1907
      %v1923 = vpack.c.b16 %v1910, %v1909
      %v1924 = vpack.c.b16 %v1912, %v1911
      %v1925 = vpack.c.b16 %v1914, %v1913
      %v1926 = vpack.c.b16 %v1916, %v1915
      %v1927 = vpack.c.b16 %v1918, %v1917
      %v1928 = vpack.c.b16 %v1920, %v1919
      %1937 = vmatprep.subr.bf16.mxu0 0
      %1938 = vmatpush1.bf16.msra.mxu0 %v1921
      %1939 = vmatprep.subr.bf16.mxu0 0
      %1940 = vmatpush1.bf16.msra.mxu0 %v1922
      %1941 = vmatprep.subr.bf16.mxu0 0
      %1942 = vmatpush1.bf16.msra.mxu0 %v1923
      %1943 = vmatprep.subr.bf16.mxu0 0
      %1944 = vmatpush1.bf16.msra.mxu0 %v1924
      %1945 = vmatprep.subr.bf16.mxu0 0
      %1946 = vmatpush1.bf16.msra.mxu0 %v1925
      %1947 = vmatprep.subr.bf16.mxu0 0
      %1948 = vmatpush1.bf16.msra.mxu0 %v1926
      %1949 = vmatprep.subr.bf16.mxu0 0
      %1950 = vmatpush1.bf16.msra.mxu0 %v1927
      %1951 = vmatprep.subr.bf16.mxu0 0
      %1952 = vmatpush1.bf16.msra.mxu0 %v1928
      %1953 = vmatprep.subr.bf16.mxu0 0
      %1954 = vmatpush1.bf16.msra.mxu0 0
      %1955 = vmatprep.subr.bf16.mxu0 0
      %1956 = vmatpush1.bf16.msra.mxu0 0
      %1957 = vmatprep.subr.bf16.mxu0 0
      %1958 = vmatpush1.bf16.msra.mxu0 0
      %1959 = vmatprep.subr.bf16.mxu0 0
      %1960 = vmatpush1.bf16.msra.mxu0 0
      %1961 = vmatprep.subr.bf16.mxu0 0
      %1962 = vmatpush1.bf16.msra.mxu0 0
      %1963 = vmatprep.subr.bf16.mxu0 0
      %1964 = vmatpush1.bf16.msra.mxu0 0
      %1965 = vmatprep.subr.bf16.mxu0 0
      %1966 = vmatpush1.bf16.msra.mxu0 0
      %1967 = vmatprep.subr.bf16.mxu0 0
      %1968 = vmatpush1.bf16.msra.mxu0 0
      %1969 = vmatprep.mubr.bf16.mxu0 0
      %1970 = vmatmul.mubr.bf16.gmra.mrb[0].mxu0 %v1857
      %v1971 = vpop.f32.mrb[0].mxu0
      %v1972 = vadd.f32 0.0, %v1971
      %v1973 = vpop.f32.mrb[0].mxu0
      %v1974 = vpop.f32.mrb[0].mxu0
      %v1975 = vadd.f32 0.0, %v1974
      %v1976 = vpop.f32.mrb[0].mxu0
      %1977 = vmatprep.mubr.bf16.mxu0 0
      %1978 = vmatmul.mubr.bf16.gmra.mrb[0].mxu0 %v1866
      %v1979 = vpop.f32.mrb[0].mxu0
      %v1980 = vadd.f32 0.0, %v1979
      %v1981 = vpop.f32.mrb[0].mxu0
      %v1982 = vpop.f32.mrb[0].mxu0
      %v1983 = vadd.f32 0.0, %v1982
      %v1984 = vpop.f32.mrb[0].mxu0
      %1985 = vmatprep.mubr.bf16.mxu0 0
      %1986 = vmatmul.mubr.bf16.gmra.mrb[0].mxu0 %v1875
      %v1987 = vpop.f32.mrb[0].mxu0
      %v1988 = vadd.f32 0.0, %v1987
      %v1989 = vpop.f32.mrb[0].mxu0
      %v1990 = vpop.f32.mrb[0].mxu0
      %v1991 = vadd.f32 0.0, %v1990
      %v1992 = vpop.f32.mrb[0].mxu0
      %1993 = vmatprep.mubr.bf16.mxu0 0
      %1994 = vmatmul.mubr.bf16.gmra.mrb[0].mxu0 %v1884
      %v1995 = vpop.f32.mrb[0].mxu0
      %v1996 = vadd.f32 0.0, %v1995
      %v1997 = vpop.f32.mrb[0].mxu0
      %v1998 = vpop.f32.mrb[0].mxu0
      %v1999 = vadd.f32 0.0, %v1998
      %v2000 = vpop.f32.mrb[0].mxu0
      %2001 = vdwg.mxu0
      %v2002 = vsel %vm905, %v1972, 0.0
      %v2003 = vsel %vm906, %v1975, 0.0
      %v2004 = vsel %vm907, %v1980, 0.0
      %v2005 = vsel %vm908, %v1983, 0.0
      %v2006 = vsel %vm909, %v1988, 0.0
      %v2007 = vsel %vm910, %v1991, 0.0
      %v2008 = vsel %vm911, %v1996, 0.0
      %v2009 = vsel %vm912, %v1999, 0.0
      %v2010 = vadd.f32 %v1811, %v2002
      %v2011 = vadd.f32 %v1812, %v2003
      %v2012 = vadd.f32 %v1813, %v2004
      %v2013 = vadd.f32 %v1814, %v2005
      %v2014 = vadd.f32 %v1815, %v2006
      %v2015 = vadd.f32 %v1816, %v2007
      %v2016 = vadd.f32 %v1817, %v2008
      %v2017 = vadd.f32 %v1818, %v2009
      %v2018 = vld [vmem:[#allocation3 + $0x10] sm:$0xf0]
      %s2019 = scalar_lea.vmem %s3, 448
      %v2020 = vld [vmem:[%s2019] sm:$0xf]
      %v2021 = vld [vmem:[%s2019 + $0x4] sm:$0xf]
      %v2022 = vld [vmem:[%s2019 + $0x8] sm:$0xf]
      %v2023 = vld [vmem:[%s2019 + $0xc] sm:$0xf]
      %v2024 = vld [vmem:[%s2019 + $0x10] sm:$0xf]
      %v2025 = vld [vmem:[%s2019 + $0x14] sm:$0xf]
      %v2026 = vld [vmem:[%s2019 + $0x18] sm:$0xf]
      %v2027 = vld [vmem:[%s2019 + $0x1c] sm:$0xf]
      %v2028 = vld [vmem:[%s2019 + $0x20] sm:$0xf]
      %v2029 = vld [vmem:[%s2019 + $0x24] sm:$0xf]
      %v2030 = vld [vmem:[%s2019 + $0x28] sm:$0xf]
      %v2031 = vld [vmem:[%s2019 + $0x2c] sm:$0xf]
      %v2032 = vld [vmem:[%s2019 + $0x30] sm:$0xf]
      %v2033 = vld [vmem:[%s2019 + $0x34] sm:$0xf]
      %v2034 = vld [vmem:[%s2019 + $0x38] sm:$0xf]
      %v2035 = vld [vmem:[%s2019 + $0x3c] sm:$0xf]
      %v2041 = vrot.slane %v2018, 4
      %v2042 = vrot.slane %v1820, 4
      %v2043 = vsel %vm555, %v2041, %v2042
      %v2044 = vrot.slane %v1821, 4
      %v2045 = vsel %vm555, %v2042, %v2044
      %v2046 = vrot.slane %v1822, 4
      %v2047 = vsel %vm555, %v2044, %v2046
      %v2048 = vrot.slane %v1823, 4
      %v2049 = vsel %vm555, %v2046, %v2048
      %v2070 = vunpack.c.l.b16 %v2020
      %v2071 = vunpack.c.l.b16 %v2021
      %v2072 = vunpack.c.l.b16 %v2022
      %v2073 = vunpack.c.l.b16 %v2023
      %v2074 = vunpack.c.l.b16 %v2024
      %v2075 = vunpack.c.l.b16 %v2025
      %v2076 = vunpack.c.l.b16 %v2026
      %v2077 = vunpack.c.l.b16 %v2027
      %v2078 = vunpack.c.l.b16 %v2028
      %v2079 = vunpack.c.l.b16 %v2029
      %v2080 = vunpack.c.l.b16 %v2030
      %v2081 = vunpack.c.l.b16 %v2031
      %v2082 = vunpack.c.l.b16 %v2032
      %v2083 = vunpack.c.l.b16 %v2033
      %v2084 = vunpack.c.l.b16 %v2034
      %v2085 = vunpack.c.l.b16 %v2035
      %v2086 = vpack.c.b16 %v2071, %v2070
      %v2087 = vpack.c.b16 %v2073, %v2072
      %v2088 = vpack.c.b16 %v2075, %v2074
      %v2089 = vpack.c.b16 %v2077, %v2076
      %v2090 = vpack.c.b16 %v2079, %v2078
      %v2091 = vpack.c.b16 %v2081, %v2080
      %v2092 = vpack.c.b16 %v2083, %v2082
      %v2093 = vpack.c.b16 %v2085, %v2084
      %2102 = vmatprep.subr.bf16.mxu0 0
      %2103 = vmatpush1.bf16.msra.mxu0 %v2086
      %2104 = vmatprep.subr.bf16.mxu0 0
      %2105 = vmatpush1.bf16.msra.mxu0 %v2087
      %2106 = vmatprep.subr.bf16.mxu0 0
      %2107 = vmatpush1.bf16.msra.mxu0 %v2088
      %2108 = vmatprep.subr.bf16.mxu0 0
      %2109 = vmatpush1.bf16.msra.mxu0 %v2089
      %2110 = vmatprep.subr.bf16.mxu0 0
      %2111 = vmatpush1.bf16.msra.mxu0 %v2090
      %2112 = vmatprep.subr.bf16.mxu0 0
      %2113 = vmatpush1.bf16.msra.mxu0 %v2091
      %2114 = vmatprep.subr.bf16.mxu0 0
      %2115 = vmatpush1.bf16.msra.mxu0 %v2092
      %2116 = vmatprep.subr.bf16.mxu0 0
      %2117 = vmatpush1.bf16.msra.mxu0 %v2093
      %2118 = vmatprep.subr.bf16.mxu0 0
      %2119 = vmatpush1.bf16.msra.mxu0 0
      %2120 = vmatprep.subr.bf16.mxu0 0
      %2121 = vmatpush1.bf16.msra.mxu0 0
      %2122 = vmatprep.subr.bf16.mxu0 0
      %2123 = vmatpush1.bf16.msra.mxu0 0
      %2124 = vmatprep.subr.bf16.mxu0 0
      %2125 = vmatpush1.bf16.msra.mxu0 0
      %2126 = vmatprep.subr.bf16.mxu0 0
      %2127 = vmatpush1.bf16.msra.mxu0 0
      %2128 = vmatprep.subr.bf16.mxu0 0
      %2129 = vmatpush1.bf16.msra.mxu0 0
      %2130 = vmatprep.subr.bf16.mxu0 0
      %2131 = vmatpush1.bf16.msra.mxu0 0
      %2132 = vmatprep.subr.bf16.mxu0 0
      %2133 = vmatpush1.bf16.msra.mxu0 0
      %2134 = vmatprep.mubr.bf16.mxu0 0
      %2135 = vmatmul.mubr.bf16.gmra.mrb[0].mxu0 %v2043
      %v2136 = vpop.f32.mrb[0].mxu0
      %v2137 = vadd.f32 0.0, %v2136
      %v2138 = vpop.f32.mrb[0].mxu0
      %v2139 = vpop.f32.mrb[0].mxu0
      %v2140 = vadd.f32 0.0, %v2139
      %v2141 = vpop.f32.mrb[0].mxu0
      %2142 = vmatprep.mubr.bf16.mxu0 0
      %2143 = vmatmul.mubr.bf16.gmra.mrb[0].mxu0 %v2045
      %v2144 = vpop.f32.mrb[0].mxu0
      %v2145 = vadd.f32 0.0, %v2144
      %v2146 = vpop.f32.mrb[0].mxu0
      %v2147 = vpop.f32.mrb[0].mxu0
      %v2148 = vadd.f32 0.0, %v2147
      %v2149 = vpop.f32.mrb[0].mxu0
      %2150 = vmatprep.mubr.bf16.mxu0 0
      %2151 = vmatmul.mubr.bf16.gmra.mrb[0].mxu0 %v2047
      %v2152 = vpop.f32.mrb[0].mxu0
      %v2153 = vadd.f32 0.0, %v2152
      %v2154 = vpop.f32.mrb[0].mxu0
      %v2155 = vpop.f32.mrb[0].mxu0
      %v2156 = vadd.f32 0.0, %v2155
      %v2157 = vpop.f32.mrb[0].mxu0
      %2158 = vmatprep.mubr.bf16.mxu0 0
      %2159 = vmatmul.mubr.bf16.gmra.mrb[0].mxu0 %v2049
      %v2160 = vpop.f32.mrb[0].mxu0
      %v2161 = vadd.f32 0.0, %v2160
      %v2162 = vpop.f32.mrb[0].mxu0
      %v2163 = vpop.f32.mrb[0].mxu0
      %v2164 = vadd.f32 0.0, %v2163
      %v2165 = vpop.f32.mrb[0].mxu0
      %2166 = vdwg.mxu0
      %v2167 = vadd.f32 %v2010, %v2137
      %v2168 = vadd.f32 %v2011, %v2140
      %v2169 = vadd.f32 %v2012, %v2145
      %v2170 = vadd.f32 %v2013, %v2148
      %v2171 = vadd.f32 %v2014, %v2153
      %v2172 = vadd.f32 %v2015, %v2156
      %v2173 = vadd.f32 %v2016, %v2161
      %v2174 = vadd.f32 %v2017, %v2164
      %v2175 = vld [vmem:[#allocation3 + $0x30] sm:$0x1f]
      %s2176 = scalar_lea.vmem %s3, 512
      %v2177 = vld [vmem:[%s2176] sm:$0xf]
      %v2178 = vld [vmem:[%s2176 + $0x4] sm:$0xf]
      %v2179 = vld [vmem:[%s2176 + $0x8] sm:$0xf]
      %v2180 = vld [vmem:[%s2176 + $0xc] sm:$0xf]
      %v2181 = vld [vmem:[%s2176 + $0x10] sm:$0xf]
      %v2182 = vld [vmem:[%s2176 + $0x14] sm:$0xf]
      %v2183 = vld [vmem:[%s2176 + $0x18] sm:$0xf]
      %v2184 = vld [vmem:[%s2176 + $0x1c] sm:$0xf]
      %v2185 = vld [vmem:[%s2176 + $0x20] sm:$0xf]
      %v2186 = vld [vmem:[%s2176 + $0x24] sm:$0xf]
      %v2187 = vld [vmem:[%s2176 + $0x28] sm:$0xf]
      %v2188 = vld [vmem:[%s2176 + $0x2c] sm:$0xf]
      %v2189 = vld [vmem:[%s2176 + $0x30] sm:$0xf]
      %v2190 = vld [vmem:[%s2176 + $0x34] sm:$0xf]
      %v2191 = vld [vmem:[%s2176 + $0x38] sm:$0xf]
      %v2192 = vld [vmem:[%s2176 + $0x3c] sm:$0xf]
      %v2194 = vshrl.u32 %v2018, 16
      %v2196 = vrot.slane %v2194, 4
      %v2197 = vshll.u32 %v2018, 16
      %v2199 = vrot.slane %v2197, 5
      %v2200 = vor.u32 %v2196, %v2199
      %v2201 = vrot.slane %v1850, 4
      %v2202 = vrot.slane %v1853, 5
      %v2203 = vor.u32 %v2201, %v2202
      %v2204 = vsel %vm1104, %v2200, %v2203
      %v2205 = vrot.slane %v1859, 4
      %v2206 = vrot.slane %v1862, 5
      %v2207 = vor.u32 %v2205, %v2206
      %v2208 = vsel %vm1104, %v2203, %v2207
      %v2209 = vrot.slane %v1868, 4
      %v2210 = vrot.slane %v1871, 5
      %v2211 = vor.u32 %v2209, %v2210
      %v2212 = vsel %vm1104, %v2207, %v2211
      %v2214 = vshrl.u32 %v2175, 16
      %v2216 = vrot.slane %v2214, 4
      %v2217 = vshll.u32 %v2175, 16
      %v2219 = vrot.slane %v2217, 5
      %v2220 = vor.u32 %v2216, %v2219
      %v2221 = vsel %vm1104, %v2211, %v2220
      %v2242 = vunpack.c.l.b16 %v2177
      %v2243 = vunpack.c.l.b16 %v2178
      %v2244 = vunpack.c.l.b16 %v2179
      %v2245 = vunpack.c.l.b16 %v2180
      %v2246 = vunpack.c.l.b16 %v2181
      %v2247 = vunpack.c.l.b16 %v2182
      %v2248 = vunpack.c.l.b16 %v2183
      %v2249 = vunpack.c.l.b16 %v2184
      %v2250 = vunpack.c.l.b16 %v2185
      %v2251 = vunpack.c.l.b16 %v2186
      %v2252 = vunpack.c.l.b16 %v2187
      %v2253 = vunpack.c.l.b16 %v2188
      %v2254 = vunpack.c.l.b16 %v2189
      %v2255 = vunpack.c.l.b16 %v2190
      %v2256 = vunpack.c.l.b16 %v2191
      %v2257 = vunpack.c.l.b16 %v2192
      %v2258 = vpack.c.b16 %v2243, %v2242
      %v2259 = vpack.c.b16 %v2245, %v2244
      %v2260 = vpack.c.b16 %v2247, %v2246
      %v2261 = vpack.c.b16 %v2249, %v2248
      %v2262 = vpack.c.b16 %v2251, %v2250
      %v2263 = vpack.c.b16 %v2253, %v2252
      %v2264 = vpack.c.b16 %v2255, %v2254
      %v2265 = vpack.c.b16 %v2257, %v2256
      %2274 = vmatprep.subr.bf16.mxu0 0
      %2275 = vmatpush1.bf16.msra.mxu0 %v2258
      %2276 = vmatprep.subr.bf16.mxu0 0
      %2277 = vmatpush1.bf16.msra.mxu0 %v2259
      %2278 = vmatprep.subr.bf16.mxu0 0
      %2279 = vmatpush1.bf16.msra.mxu0 %v2260
      %2280 = vmatprep.subr.bf16.mxu0 0
      %2281 = vmatpush1.bf16.msra.mxu0 %v2261
      %2282 = vmatprep.subr.bf16.mxu0 0
      %2283 = vmatpush1.bf16.msra.mxu0 %v2262
      %2284 = vmatprep.subr.bf16.mxu0 0
      %2285 = vmatpush1.bf16.msra.mxu0 %v2263
      %2286 = vmatprep.subr.bf16.mxu0 0
      %2287 = vmatpush1.bf16.msra.mxu0 %v2264
      %2288 = vmatprep.subr.bf16.mxu0 0
      %2289 = vmatpush1.bf16.msra.mxu0 %v2265
      %2290 = vmatprep.subr.bf16.mxu0 0
      %2291 = vmatpush1.bf16.msra.mxu0 0
      %2292 = vmatprep.subr.bf16.mxu0 0
      %2293 = vmatpush1.bf16.msra.mxu0 0
      %2294 = vmatprep.subr.bf16.mxu0 0
      %2295 = vmatpush1.bf16.msra.mxu0 0
      %2296 = vmatprep.subr.bf16.mxu0 0
      %2297 = vmatpush1.bf16.msra.mxu0 0
      %2298 = vmatprep.subr.bf16.mxu0 0
      %2299 = vmatpush1.bf16.msra.mxu0 0
      %2300 = vmatprep.subr.bf16.mxu0 0
      %2301 = vmatpush1.bf16.msra.mxu0 0
      %2302 = vmatprep.subr.bf16.mxu0 0
      %2303 = vmatpush1.bf16.msra.mxu0 0
      %2304 = vmatprep.subr.bf16.mxu0 0
      %2305 = vmatpush1.bf16.msra.mxu0 0
      %2306 = vmatprep.mubr.bf16.mxu0 0
      %2307 = vmatmul.mubr.bf16.gmra.mrb[0].mxu0 %v2204
      %v2308 = vpop.f32.mrb[0].mxu0
      %v2309 = vadd.f32 0.0, %v2308
      %v2310 = vpop.f32.mrb[0].mxu0
      %v2311 = vpop.f32.mrb[0].mxu0
      %v2312 = vadd.f32 0.0, %v2311
      %v2313 = vpop.f32.mrb[0].mxu0
      %2314 = vmatprep.mubr.bf16.mxu0 0
      %2315 = vmatmul.mubr.bf16.gmra.mrb[0].mxu0 %v2208
      %v2316 = vpop.f32.mrb[0].mxu0
      %v2317 = vadd.f32 0.0, %v2316
      %v2318 = vpop.f32.mrb[0].mxu0
      %v2319 = vpop.f32.mrb[0].mxu0
      %v2320 = vadd.f32 0.0, %v2319
      %v2321 = vpop.f32.mrb[0].mxu0
      %2322 = vmatprep.mubr.bf16.mxu0 0
      %2323 = vmatmul.mubr.bf16.gmra.mrb[0].mxu0 %v2212
      %v2324 = vpop.f32.mrb[0].mxu0
      %v2325 = vadd.f32 0.0, %v2324
      %v2326 = vpop.f32.mrb[0].mxu0
      %v2327 = vpop.f32.mrb[0].mxu0
      %v2328 = vadd.f32 0.0, %v2327
      %v2329 = vpop.f32.mrb[0].mxu0
      %2330 = vmatprep.mubr.bf16.mxu0 0
      %2331 = vmatmul.mubr.bf16.gmra.mrb[0].mxu0 %v2221
      %v2332 = vpop.f32.mrb[0].mxu0
      %v2333 = vadd.f32 0.0, %v2332
      %v2334 = vpop.f32.mrb[0].mxu0
      %v2335 = vpop.f32.mrb[0].mxu0
      %v2336 = vadd.f32 0.0, %v2335
      %v2337 = vpop.f32.mrb[0].mxu0
      %2338 = vdwg.mxu0
      %v2339 = vsel %vm1259, %v2309, 0.0
      %v2340 = vsel %vm1260, %v2312, 0.0
      %v2341 = vsel %vm1261, %v2317, 0.0
      %v2342 = vsel %vm1262, %v2320, 0.0
      %v2343 = vsel %vm1263, %v2325, 0.0
      %v2344 = vsel %vm1264, %v2328, 0.0
      %v2345 = vsel %vm1265, %v2333, 0.0
      %v2346 = vsel %vm1266, %v2336, 0.0
      %v2347 = vadd.f32 %v2167, %v2339
      %v2348 = vadd.f32 %v2168, %v2340
      %v2349 = vadd.f32 %v2169, %v2341
      %v2350 = vadd.f32 %v2170, %v2342
      %v2351 = vadd.f32 %v2171, %v2343
      %v2352 = vadd.f32 %v2172, %v2344
      %v2353 = vadd.f32 %v2173, %v2345
      %v2354 = vadd.f32 %v2174, %v2346
      %v2355 = vld [vmem:[%s4] sm:$0x1]
      %v2357 = vlaneseq
      %v2358 = vshrl.u32 %v2357, 7
      %v2359 = vsub.s32 0, %v2358
      %v2360 = vrot.slane %v2355, %v2359
      %v2362 = vadd.f32 %v2347, %v2360
      %v2363 = vadd.f32 %v2348, %v2360
      %v2364 = vadd.f32 %v2349, %v2360
      %v2365 = vadd.f32 %v2350, %v2360
      %v2366 = vadd.f32 %v2351, %v2360
      %v2367 = vadd.f32 %v2352, %v2360
      %v2368 = vadd.f32 %v2353, %v2360
      %v2369 = vadd.f32 %v2354, %v2360
      %v2370 = vmax.f32 %v2362, 0.0
      %v2371 = vmax.f32 %v2363, 0.0
      %v2372 = vmax.f32 %v2364, 0.0
      %v2373 = vmax.f32 %v2365, 0.0
      %v2374 = vmax.f32 %v2366, 0.0
      %v2375 = vmax.f32 %v2367, 0.0
      %v2376 = vmax.f32 %v2368, 0.0
      %v2377 = vmax.f32 %v2369, 0.0
      %v2378 = vpack.c.bf16 %v2371, %v2370
      %v2379 = vpack.c.bf16 %v2373, %v2372
      %v2380 = vpack.c.bf16 %v2375, %v2374
      %v2381 = vpack.c.bf16 %v2377, %v2376
      %v2386 = vunpack.c.l.b16 %v2378
      %v2387 = vunpack.c.h.b16 %v2378
      %v2388 = vunpack.c.l.b16 %v2379
      %v2389 = vunpack.c.h.b16 %v2379
      %v2390 = vunpack.c.l.b16 %v2380
      %v2391 = vunpack.c.h.b16 %v2380
      %v2392 = vunpack.c.l.b16 %v2381
      %v2393 = vunpack.c.h.b16 %v2381
      %v2394 = vpack.c.b16 %v2386, %v2386
      %v2395 = vpack.c.b16 %v2387, %v2387
      %v2396 = vpack.c.b16 %v2388, %v2388
      %v2397 = vpack.c.b16 %v2389, %v2389
      %v2398 = vpack.c.b16 %v2390, %v2390
      %v2399 = vpack.c.b16 %v2391, %v2391
      %v2400 = vpack.c.b16 %v2392, %v2392
      %v2401 = vpack.c.b16 %v2393, %v2393
      %2410 = vst [vmem:[%s202] sm:$0xf] %v2394
      %2411 = vst [vmem:[%s202 + $0x4] sm:$0xf] %v2395
      %2412 = vst [vmem:[%s202 + $0x8] sm:$0xf] %v2396
      %2413 = vst [vmem:[%s202 + $0xc] sm:$0xf] %v2397
      %2414 = vst [vmem:[%s202 + $0x10] sm:$0xf] %v2398
      %2415 = vst [vmem:[%s202 + $0x14] sm:$0xf] %v2399
      %2416 = vst [vmem:[%s202 + $0x18] sm:$0xf] %v2400
      %2417 = vst [vmem:[%s202 + $0x1c] sm:$0xf] %v2401
      %s2418 = smul.u32 4, %s21
      %p2419 = scmp.lt.s32.totalorder %s20, 1
      %s2420 = scalar_select %p2419, %s20, 1
      %p2421 = scmp.lt.s32.totalorder %s2418, 15
      %s2422 = scalar_select %p2421, %s2418, 15
      %s2423 = smul.addr %s2422, 2
      %s2424 = smul.addr %s2420, 32
      %s2425 = sadd.s32 %s2423, %s2424
      %s2426 = smul.addr %s2425, 4
      %s2427 = scalar_lea.vmem %s5, %s2426
      // Predicated region
      $region147: #{_lambda_.3} parent=35 // pred_check
        %p2428 = pneg %p132
      $region148: #{_lambda_.3} parent=35 // pred_check_branch
        %2430 = sbr.rel (%p2428) target = $region150
      $region149: #{_lambda_.3} parent=35 // pred_region
        %s2431 = smul.u32 4, %s21
      $region150: #{_lambda_.3} parent=35 // pred_fallthru
        _
    $region36: #{_lambda_.3} parent=5 // pred_fallthru
      _
    %p2432 = scmp.le.s32.totalorder 2, %s11
    // Predicated region
    $region151: #{_lambda_.3} parent=5 // pred_check
      %p2433 = pneg %p2432
    $region152: #{_lambda_.3} parent=5 // pred_check_branch
      %2435 = sbr.rel (%p2433) target = $region154
    $region153: #{_lambda_.3} parent=5 // pred_region
      %s2436 = ssub.s32 %s11, 2
      // Predicated region
      $region155: #{_lambda_.3} parent=153 // pred_check
        %p2437 = pneg %p138
      $region156: #{_lambda_.3} parent=153 // pred_check_branch
        %2439 = sbr.rel (%p2437) target = $region158
      $region157: #{_lambda_.3} parent=153 // pred_region
        %s2440 = smul.u32 4, %s23
        %p2441 = scmp.lt.s32.totalorder %s22, 1
        %s2442 = scalar_select %p2441, %s22, 1
        %p2443 = scmp.lt.s32.totalorder %s2440, 15
        %s2444 = scalar_select %p2443, %s2440, 15
        %s2445 = smul.addr %s2444, 2
        %s2446 = smul.addr %s2442, 32
        %s2447 = sadd.s32 %s2445, %s2446
        %s2448 = smul.addr %s2447, 4
        %s2449 = scalar_lea.vmem %s5, %s2448
      $region158: #{_lambda_.3} parent=153 // pred_fallthru
        _
    $region154: #{_lambda_.3} parent=5 // pred_fallthru
      _
  $region6: #{_lambda_.3} parent=0 // loop_footer
    %s15 = sadd.s32 1, %s11
  $region7: #{_lambda_.3} parent=0 // loop_footer_branch
    %10 = sbr.rel target = $region3
  $region8: #{_lambda_.3} parent=0 // loop_exit
    _
  %2450 = vsyncmov [#allocation4]
  %s2451 = vpop.sfrf %2450
  %p2452 = scmp.eq.s32.totalorder %s2451, 0
  %p2453 = pneg %p2452
  %2455 = shalt.err (%p2453)
  %s2456 = scalar_lea.sflag [#allocation4], 1
  %2457 = vsyncmov %s2456
  %s2458 = vpop.sfrf %2457
  %p2459 = scmp.eq.s32.totalorder %s2458, 0
  %p2460 = pneg %p2459
  %2462 = shalt.err (%p2460)
  %s2463 = scalar_lea.sflag [#allocation4], 2
  %2464 = vsyncmov %s2463
  %s2465 = vpop.sfrf %2464
  %p2466 = scmp.eq.s32.totalorder %s2465, 0
  %p2467 = pneg %p2466
  %2469 = shalt.err (%p2467)

</llo_original>
